<compile_context>
chip_gen: v7x
topology: tpu7x:2x2x1
jax: 0.10.0
libtpu: 0.0.40
codegen_flags: <defaults>
</compile_context>

<pallas_src>
import math
import jax
import jax.numpy as jnp
from jax.experimental import pallas as pl
from jax.experimental.pallas import tpu as pltpu

# ---------------- model config (small, consistent with the module) ----------
VOCAB = 64
N_EMBD = 32
N_HEAD = 4
N_LAYER = 2
BLOCK_SIZE = 8
HEAD_DIM = N_EMBD // N_HEAD
EPS = 1e-5                                    # PyTorch nn.LayerNorm default
VOCAB_PAD = ((VOCAB + 127) // 128) * 128      # lane-dense logits (128)


# ---------------- in-kernel helpers ----------------
def _layer_norm(x, w, b):
    mu = jnp.mean(x, axis=-1, keepdims=True)
    var = jnp.mean((x - mu) ** 2, axis=-1, keepdims=True)
    return (x - mu) * jax.lax.rsqrt(var + EPS) * w + b


def _gelu(x):
    # exact (erf-based) GELU, matching torch.nn.GELU() default
    return 0.5 * x * (1.0 + jax.lax.erf(x / math.sqrt(2.0)))


# ---------------- fused whole-model kernel (one batch element per program) --
def minigpt_kernel(idx_ref, tok_ref, pos_ref, ln_ref,
                   wqkv_ref, bqkv_ref, wproj_ref, bproj_ref,
                   wfc1_ref, bfc1_ref, wfc2_ref, bfc2_ref,
                   lnf_ref, whead_ref, bhead_ref, o_ref):
    T, C = pos_ref.shape
    V = tok_ref.shape[0]
    L = ln_ref.shape[0]
    H = N_HEAD
    D = C // H

    # --- token embedding gather (one-hot matmul on the MXU) + positional add
    ids = idx_ref[0]                                        # (T, 1) int32
    onehot = (ids == jax.lax.broadcasted_iota(jnp.int32, (T, V), 1)
              ).astype(jnp.float32)                         # (T, V)
    x = jnp.dot(onehot, tok_ref[...],
                preferred_element_type=jnp.float32) + pos_ref[...]   # (T, C)

    # --- causal mask (shared by all layers) ---
    row = jax.lax.broadcasted_iota(jnp.int32, (T, T), 0)
    col = jax.lax.broadcasted_iota(jnp.int32, (T, T), 1)
    causal = row >= col                                     # (T, T) bool

    for l in range(L):                                      # static, L=2
        ln = ln_ref[l]                                      # (4, C)

        # ---- ln1 + causal multi-head self attention ----
        h = _layer_norm(x, ln[0:1, :], ln[1:2, :])          # (T, C)
        qkv = jnp.dot(h, wqkv_ref[l],
                      preferred_element_type=jnp.float32) + bqkv_ref[l]  # (T,3C)
        q = qkv[:, 0 * C:1 * C]                             # already pre-scaled
        k = qkv[:, 1 * C:2 * C]
        v = qkv[:, 2 * C:3 * C]
        qh = jnp.stack([q[:, i * D:(i + 1) * D] for i in range(H)], axis=0)
        kh = jnp.stack([k[:, i * D:(i + 1) * D] for i in range(H)], axis=0)
        vh = jnp.stack([v[:, i * D:(i + 1) * D] for i in range(H)], axis=0)
        # (H, T, D) batched attention: 2 MXU sequences for all heads.
        att = jnp.einsum('hqd,hkd->hqk', qh, kh,
                         preferred_element_type=jnp.float32)            # (H,T,T)
        att = jnp.where(causal[None, :, :], att, -1e30)
        att = jnp.exp(att - jnp.max(att, axis=-1, keepdims=True))
        att = att * pl.reciprocal(jnp.sum(att, axis=-1, keepdims=True),
                                  approx=True)
        yh = jnp.einsum('hqk,hkd->hqd', att, vh,
                        preferred_element_type=jnp.float32)             # (H,T,D)
        y = jnp.concatenate([yh[i] for i in range(H)], axis=-1)         # (T, C)
        y = jnp.dot(y, wproj_ref[l],
                    preferred_element_type=jnp.float32) + bproj_ref[l]
        x = x + y                                           # residual 1

        # ---- ln2 + feed-forward (GELU) ----
        h = _layer_norm(x, ln[2:3, :], ln[3:4, :])
        m = _gelu(jnp.dot(h, wfc1_ref[l],
                          preferred_element_type=jnp.float32) + bfc1_ref[l])
        m = jnp.dot(m, wfc2_ref[l],
                    preferred_element_type=jnp.float32) + bfc2_ref[l]
        x = x + m                                           # residual 2

    # --- final LayerNorm + LM head (lane-dense padded to 128) ---
    h = _layer_norm(x, lnf_ref[0:1, :], lnf_ref[1:2, :])
    logits = jnp.dot(h, whead_ref[...],
                     preferred_element_type=jnp.float32) + bhead_ref[...]
    o_ref[0] = logits                                       # (T, VOCAB_PAD)


# ---------------- wrapper ----------------
def _full_spec(arr):
    nd = arr.ndim
    return pl.BlockSpec(arr.shape, lambda b, _nd=nd: (0,) * _nd)


def minigpt_forward(idx, params):
    """idx: (B, T) int32 token ids -> logits (B, T, VOCAB)."""
    B, T = idx.shape
    if T > BLOCK_SIZE:
        raise ValueError(f'Sequence length {T} > block_size {BLOCK_SIZE}')

    idx3 = idx.astype(jnp.int32)[..., None]                 # (B, T, 1)
    pos = params['pos_embed'][:T]                           # (T, C)

    args = (idx3, params['token_embed'], pos, params['ln_stack'],
            params['w_qkv'], params['b_qkv'], params['w_proj'], params['b_proj'],
            params['w_fc1'], params['b_fc1'], params['w_fc2'], params['b_fc2'],
            params['ln_f'], params['w_head'], params['b_head'])

    in_specs = [pl.BlockSpec((1, T, 1), lambda b: (b, 0, 0))] + \
               [_full_spec(a) for a in args[1:]]
    out_spec = pl.BlockSpec((1, T, VOCAB_PAD), lambda b: (b, 0, 0))

    logits_pad = pl.pallas_call(
        minigpt_kernel,
        out_shape=jax.ShapeDtypeStruct((B, T, VOCAB_PAD), jnp.float32),
        grid=(B,),                                          # 1 program / batch
        in_specs=in_specs,
        out_specs=out_spec,
        compiler_params=pltpu.CompilerParams(
            dimension_semantics=("parallel",)),             # both TCs on v7x
    )(*args)
    return logits_pad[:, :, :VOCAB]


# ---------------- deterministic parameter init (packed / fused layout) ------
def init_params(key):
    C = N_EMBD
    scale = 1.0 / math.sqrt(HEAD_DIM)
    keys = iter(jax.random.split(key, 32))

    def nrm(shape, std=0.02):
        return jax.random.normal(next(keys), shape, jnp.float32) * std

    token_embed = nrm((VOCAB, C))
    pos_embed = nrm((BLOCK_SIZE, C))

    ln_stack, wqkv, bqkv = [], [], []
    wproj, bproj, wfc1, bfc1, wfc2, bfc2 = [], [], [], [], [], []
    for _ in range(N_LAYER):
        wq, wk, wv = nrm((C, C)), nrm((C, C)), nrm((C, C))
        bq = jnp.zeros((C,), jnp.float32)
        ln_stack.append(jnp.stack([jnp.ones(C, jnp.float32),
                                   jnp.zeros(C, jnp.float32),
                                   jnp.ones(C, jnp.float32),
                                   jnp.zeros(C, jnp.float32)]))
        # fused QKV; attention scale folded into the Q columns / bias
        wqkv.append(jnp.concatenate([wq * scale, wk, wv], axis=1))      # (C,3C)
        bqkv.append(jnp.concatenate([bq * scale, jnp.zeros((C,)),
                                     jnp.zeros((C,))])[None, :].astype(jnp.float32))
        wproj.append(nrm((C, C)))
        bproj.append(jnp.zeros((1, C), jnp.float32))
        wfc1.append(nrm((C, 4 * C)))
        bfc1.append(jnp.zeros((1, 4 * C), jnp.float32))
        wfc2.append(nrm((4 * C, C)))
        bfc2.append(jnp.zeros((1, C), jnp.float32))

    w_head = nrm((C, VOCAB))
    b_head = jnp.zeros((1, VOCAB), jnp.float32)

    return {
        'token_embed': token_embed,
        'pos_embed': pos_embed,
        'ln_stack': jnp.stack(ln_stack),                    # (L, 4, C)
        'w_qkv': jnp.stack(wqkv), 'b_qkv': jnp.stack(bqkv),  # (L,C,3C),(L,1,3C)
        'w_proj': jnp.stack(wproj), 'b_proj': jnp.stack(bproj),
        'w_fc1': jnp.stack(wfc1), 'b_fc1': jnp.stack(bfc1),
        'w_fc2': jnp.stack(wfc2), 'b_fc2': jnp.stack(bfc2),
        'ln_f': jnp.stack([jnp.ones(C, jnp.float32),
                           jnp.zeros(C, jnp.float32)]),     # (2, C)
        'w_head': jnp.pad(w_head, ((0, 0), (0, VOCAB_PAD - VOCAB))),
        'b_head': jnp.pad(b_head, ((0, 0), (0, VOCAB_PAD - VOCAB))),
    }


if __name__ == "__main__":
    key = jax.random.PRNGKey(0)
    pkey, ikey = jax.random.split(key)
    params = init_params(pkey)

    B, T = 2, BLOCK_SIZE
    idx = jax.random.randint(ikey, (B, T), 0, VOCAB, dtype=jnp.int32)

    fwd = jax.jit(minigpt_forward)
    logits = fwd(idx, params)
    jax.block_until_ready(logits)

    assert logits.shape == (B, T, VOCAB)
    assert bool(jnp.all(jnp.isfinite(logits)))
    print("KERNEL_OK")
</pallas_src>

<mosaic_0001>
module attributes {stable_mosaic.version = 11 : i64} {
  func.func @minigpt_kernel(%arg0: i32, %arg1: memref<1x8x1xi32, #tpu.memory_space<vmem>>, %arg2: memref<64x32xf32, #tpu.memory_space<vmem>>, %arg3: memref<8x32xf32, #tpu.memory_space<vmem>>, %arg4: memref<2x4x32xf32, #tpu.memory_space<vmem>>, %arg5: memref<2x32x96xf32, #tpu.memory_space<vmem>>, %arg6: memref<2x1x96xf32, #tpu.memory_space<vmem>>, %arg7: memref<2x32x32xf32, #tpu.memory_space<vmem>>, %arg8: memref<2x1x32xf32, #tpu.memory_space<vmem>>, %arg9: memref<2x32x128xf32, #tpu.memory_space<vmem>>, %arg10: memref<2x1x128xf32, #tpu.memory_space<vmem>>, %arg11: memref<2x128x32xf32, #tpu.memory_space<vmem>>, %arg12: memref<2x1x32xf32, #tpu.memory_space<vmem>>, %arg13: memref<2x32xf32, #tpu.memory_space<vmem>>, %arg14: memref<32x128xf32, #tpu.memory_space<vmem>>, %arg15: memref<1x128xf32, #tpu.memory_space<vmem>>, %arg16: memref<1x8x128xf32, #tpu.memory_space<vmem>>) attributes {dimension_semantics = [#tpu.dimension_semantics<parallel>], iteration_bounds = array<i64: 2>, scalar_prefetch = 0 : i64, scratch_operands = 0 : i64, tpu.core_type = #tpu.core_type<tc>, window_params = [{transform_indices = @transform_0, window_bounds = array<i64: 1, 8, 1>}, {pipeline_mode = #tpu.pipeline_mode<synchronous>, transform_indices = @transform_1, window_bounds = array<i64: 64, 32>}, {pipeline_mode = #tpu.pipeline_mode<synchronous>, transform_indices = @transform_2, window_bounds = array<i64: 8, 32>}, {pipeline_mode = #tpu.pipeline_mode<synchronous>, transform_indices = @transform_3, window_bounds = array<i64: 2, 4, 32>}, {pipeline_mode = #tpu.pipeline_mode<synchronous>, transform_indices = @transform_4, window_bounds = array<i64: 2, 32, 96>}, {pipeline_mode = #tpu.pipeline_mode<synchronous>, transform_indices = @transform_5, window_bounds = array<i64: 2, 1, 96>}, {pipeline_mode = #tpu.pipeline_mode<synchronous>, transform_indices = @transform_6, window_bounds = array<i64: 2, 32, 32>}, {pipeline_mode = #tpu.pipeline_mode<synchronous>, transform_indices = @transform_7, window_bounds = array<i64: 2, 1, 32>}, {pipeline_mode = #tpu.pipeline_mode<synchronous>, transform_indices = @transform_8, window_bounds = array<i64: 2, 32, 128>}, {pipeline_mode = #tpu.pipeline_mode<synchronous>, transform_indices = @transform_9, window_bounds = array<i64: 2, 1, 128>}, {pipeline_mode = #tpu.pipeline_mode<synchronous>, transform_indices = @transform_10, window_bounds = array<i64: 2, 128, 32>}, {pipeline_mode = #tpu.pipeline_mode<synchronous>, transform_indices = @transform_11, window_bounds = array<i64: 2, 1, 32>}, {pipeline_mode = #tpu.pipeline_mode<synchronous>, transform_indices = @transform_12, window_bounds = array<i64: 2, 32>}, {pipeline_mode = #tpu.pipeline_mode<synchronous>, transform_indices = @transform_13, window_bounds = array<i64: 32, 128>}, {pipeline_mode = #tpu.pipeline_mode<synchronous>, transform_indices = @transform_14, window_bounds = array<i64: 1, 128>}, {transform_indices = @transform_15, window_bounds = array<i64: 1, 8, 128>}]} {
    %c0 = arith.constant 0 : index
    %c0_0 = arith.constant 0 : index
    %c0_1 = arith.constant 0 : index
    %0 = vector.load %arg1[%c0, %c0_0, %c0_1] : memref<1x8x1xi32, #tpu.memory_space<vmem>>, vector<1x8x1xi32>
    %1 = vector.shape_cast %0 : vector<1x8x1xi32> to vector<8x1xi32>
    %2 = tpu.iota {dimensions = array<i32: 1>} : vector<8x64xi32>
    %3 = vector.broadcast %1 : vector<8x1xi32> to vector<8x64xi32>
    %4 = arith.cmpi eq, %3, %2 : vector<8x64xi32>
    %5 = arith.extui %4 : vector<8x64xi1> to vector<8x64xi32>
    %6 = arith.sitofp %5 : vector<8x64xi32> to vector<8x64xf32>
    %c0_2 = arith.constant 0 : index
    %c0_3 = arith.constant 0 : index
    %7 = vector.load %arg2[%c0_2, %c0_3] : memref<64x32xf32, #tpu.memory_space<vmem>>, vector<64x32xf32>
    %cst = arith.constant dense<0.000000e+00> : vector<8x32xf32>
    %8 = tpu.matmul %6, %7, %cst {dimension_numbers = #tpu.dot_dimension_numbers<[1], [0], [0], [1], [0, 0, 1, 1], [], []>} : vector<8x64xf32>, vector<64x32xf32>, vector<8x32xf32> -> vector<8x32xf32>
    %c0_4 = arith.constant 0 : index
    %c0_5 = arith.constant 0 : index
    %9 = vector.load %arg3[%c0_4, %c0_5] : memref<8x32xf32, #tpu.memory_space<vmem>>, vector<8x32xf32>
    %10 = arith.addf %8, %9 : vector<8x32xf32>
    %11 = tpu.iota {dimensions = array<i32: 0>} : vector<8x8xi32>
    %12 = tpu.iota {dimensions = array<i32: 1>} : vector<8x8xi32>
    %13 = arith.cmpi sge, %11, %12 : vector<8x8xi32>
    %c0_6 = arith.constant 0 : index
    %c0_7 = arith.constant 0 : index
    %c0_8 = arith.constant 0 : index
    %14 = vector.load %arg4[%c0_6, %c0_7, %c0_8] : memref<2x4x32xf32, #tpu.memory_space<vmem>>, vector<1x4x32xf32>
    %15 = vector.shape_cast %14 : vector<1x4x32xf32> to vector<4x32xf32>
    %16 = vector.extract_strided_slice %15 {offsets = [0, 0], sizes = [1, 32], strides = [1, 1]} : vector<4x32xf32> to vector<1x32xf32>
    %17 = vector.extract_strided_slice %15 {offsets = [1, 0], sizes = [1, 32], strides = [1, 1]} : vector<4x32xf32> to vector<1x32xf32>
    %cst_9 = arith.constant dense<0.000000e+00> : vector<8xf32>
    %18 = vector.multi_reduction <add>, %10, %cst_9 [1] : vector<8x32xf32> to vector<8xf32>
    %19 = vector.shape_cast %18 : vector<8xf32> to vector<8x1xf32>
    %cst_10 = arith.constant 3.200000e+01 : f32
    %20 = vector.broadcast %cst_10 : f32 to vector<8x1xf32>
    %21 = arith.divf %19, %20 : vector<8x1xf32>
    %22 = vector.broadcast %21 : vector<8x1xf32> to vector<8x32xf32>
    %23 = arith.subf %10, %22 : vector<8x32xf32>
    %24 = arith.mulf %23, %23 : vector<8x32xf32>
    %cst_11 = arith.constant dense<0.000000e+00> : vector<8xf32>
    %25 = vector.multi_reduction <add>, %24, %cst_11 [1] : vector<8x32xf32> to vector<8xf32>
    %26 = vector.shape_cast %25 : vector<8xf32> to vector<8x1xf32>
    %cst_12 = arith.constant 3.200000e+01 : f32
    %27 = vector.broadcast %cst_12 : f32 to vector<8x1xf32>
    %28 = arith.divf %26, %27 : vector<8x1xf32>
    %29 = vector.broadcast %21 : vector<8x1xf32> to vector<8x32xf32>
    %30 = arith.subf %10, %29 : vector<8x32xf32>
    %cst_13 = arith.constant 9.99999974E-6 : f32
    %31 = vector.broadcast %cst_13 : f32 to vector<8x1xf32>
    %32 = arith.addf %28, %31 : vector<8x1xf32>
    %33 = math.rsqrt %32 : vector<8x1xf32>
    %34 = vector.broadcast %33 : vector<8x1xf32> to vector<8x32xf32>
    %35 = arith.mulf %30, %34 : vector<8x32xf32>
    %36 = vector.broadcast %16 : vector<1x32xf32> to vector<8x32xf32>
    %37 = arith.mulf %35, %36 : vector<8x32xf32>
    %38 = vector.broadcast %17 : vector<1x32xf32> to vector<8x32xf32>
    %39 = arith.addf %37, %38 : vector<8x32xf32>
    %c0_14 = arith.constant 0 : index
    %c0_15 = arith.constant 0 : index
    %c0_16 = arith.constant 0 : index
    %40 = vector.load %arg5[%c0_14, %c0_15, %c0_16] : memref<2x32x96xf32, #tpu.memory_space<vmem>>, vector<1x32x96xf32>
    %41 = vector.shape_cast %40 : vector<1x32x96xf32> to vector<32x96xf32>
    %cst_17 = arith.constant dense<0.000000e+00> : vector<8x96xf32>
    %42 = tpu.matmul %39, %41, %cst_17 {dimension_numbers = #tpu.dot_dimension_numbers<[1], [0], [0], [1], [0, 0, 1, 1], [], []>} : vector<8x32xf32>, vector<32x96xf32>, vector<8x96xf32> -> vector<8x96xf32>
    %c0_18 = arith.constant 0 : index
    %c0_19 = arith.constant 0 : index
    %c0_20 = arith.constant 0 : index
    %43 = vector.load %arg6[%c0_18, %c0_19, %c0_20] : memref<2x1x96xf32, #tpu.memory_space<vmem>>, vector<1x1x96xf32>
    %44 = vector.shape_cast %43 : vector<1x1x96xf32> to vector<1x96xf32>
    %45 = vector.broadcast %44 : vector<1x96xf32> to vector<8x96xf32>
    %46 = arith.addf %42, %45 : vector<8x96xf32>
    %47 = vector.extract_strided_slice %46 {offsets = [0, 0], sizes = [8, 32], strides = [1, 1]} : vector<8x96xf32> to vector<8x32xf32>
    %48 = vector.extract_strided_slice %46 {offsets = [0, 32], sizes = [8, 32], strides = [1, 1]} : vector<8x96xf32> to vector<8x32xf32>
    %49 = vector.extract_strided_slice %46 {offsets = [0, 64], sizes = [8, 32], strides = [1, 1]} : vector<8x96xf32> to vector<8x32xf32>
    %50 = vector.extract_strided_slice %47 {offsets = [0, 0], sizes = [8, 8], strides = [1, 1]} : vector<8x32xf32> to vector<8x8xf32>
    %51 = vector.extract_strided_slice %47 {offsets = [0, 8], sizes = [8, 8], strides = [1, 1]} : vector<8x32xf32> to vector<8x8xf32>
    %52 = vector.extract_strided_slice %47 {offsets = [0, 16], sizes = [8, 8], strides = [1, 1]} : vector<8x32xf32> to vector<8x8xf32>
    %53 = vector.extract_strided_slice %47 {offsets = [0, 24], sizes = [8, 8], strides = [1, 1]} : vector<8x32xf32> to vector<8x8xf32>
    %54 = vector.shape_cast %50 : vector<8x8xf32> to vector<1x8x8xf32>
    %55 = vector.shape_cast %51 : vector<8x8xf32> to vector<1x8x8xf32>
    %56 = vector.shape_cast %52 : vector<8x8xf32> to vector<1x8x8xf32>
    %57 = vector.shape_cast %53 : vector<8x8xf32> to vector<1x8x8xf32>
    %58 = tpu.concatenate %54, %55, %56, %57 in 0 : vector<1x8x8xf32>, vector<1x8x8xf32>, vector<1x8x8xf32>, vector<1x8x8xf32> -> vector<4x8x8xf32>
    %59 = vector.extract_strided_slice %48 {offsets = [0, 0], sizes = [8, 8], strides = [1, 1]} : vector<8x32xf32> to vector<8x8xf32>
    %60 = vector.extract_strided_slice %48 {offsets = [0, 8], sizes = [8, 8], strides = [1, 1]} : vector<8x32xf32> to vector<8x8xf32>
    %61 = vector.extract_strided_slice %48 {offsets = [0, 16], sizes = [8, 8], strides = [1, 1]} : vector<8x32xf32> to vector<8x8xf32>
    %62 = vector.extract_strided_slice %48 {offsets = [0, 24], sizes = [8, 8], strides = [1, 1]} : vector<8x32xf32> to vector<8x8xf32>
    %63 = vector.shape_cast %59 : vector<8x8xf32> to vector<1x8x8xf32>
    %64 = vector.shape_cast %60 : vector<8x8xf32> to vector<1x8x8xf32>
    %65 = vector.shape_cast %61 : vector<8x8xf32> to vector<1x8x8xf32>
    %66 = vector.shape_cast %62 : vector<8x8xf32> to vector<1x8x8xf32>
    %67 = tpu.concatenate %63, %64, %65, %66 in 0 : vector<1x8x8xf32>, vector<1x8x8xf32>, vector<1x8x8xf32>, vector<1x8x8xf32> -> vector<4x8x8xf32>
    %68 = vector.extract_strided_slice %49 {offsets = [0, 0], sizes = [8, 8], strides = [1, 1]} : vector<8x32xf32> to vector<8x8xf32>
    %69 = vector.extract_strided_slice %49 {offsets = [0, 8], sizes = [8, 8], strides = [1, 1]} : vector<8x32xf32> to vector<8x8xf32>
    %70 = vector.extract_strided_slice %49 {offsets = [0, 16], sizes = [8, 8], strides = [1, 1]} : vector<8x32xf32> to vector<8x8xf32>
    %71 = vector.extract_strided_slice %49 {offsets = [0, 24], sizes = [8, 8], strides = [1, 1]} : vector<8x32xf32> to vector<8x8xf32>
    %72 = vector.shape_cast %68 : vector<8x8xf32> to vector<1x8x8xf32>
    %73 = vector.shape_cast %69 : vector<8x8xf32> to vector<1x8x8xf32>
    %74 = vector.shape_cast %70 : vector<8x8xf32> to vector<1x8x8xf32>
    %75 = vector.shape_cast %71 : vector<8x8xf32> to vector<1x8x8xf32>
    %76 = tpu.concatenate %72, %73, %74, %75 in 0 : vector<1x8x8xf32>, vector<1x8x8xf32>, vector<1x8x8xf32>, vector<1x8x8xf32> -> vector<4x8x8xf32>
    "tpu.trace_start"() <{level = 10 : i32, message = "hqd,hkd->hqk"}> : () -> ()
    %cst_21 = arith.constant dense<0.000000e+00> : vector<4x8x8xf32>
    %77 = tpu.matmul %58, %67, %cst_21 {dimension_numbers = #tpu.dot_dimension_numbers<[2], [2], [1], [1], [0, 0, 0, 1, 1, 1], [0], [0]>} : vector<4x8x8xf32>, vector<4x8x8xf32>, vector<4x8x8xf32> -> vector<4x8x8xf32>
    "tpu.trace_stop"() : () -> ()
    %78 = vector.shape_cast %13 : vector<8x8xi1> to vector<1x8x8xi1>
    %cst_22 = arith.constant -1.000000e+30 : f32
    %79 = vector.shape_cast %78 : vector<1x8x8xi1> to vector<1x8x8xi1>
    %80 = vector.broadcast %79 : vector<1x8x8xi1> to vector<4x8x8xi1>
    %81 = vector.broadcast %cst_22 : f32 to vector<4x8x8xf32>
    %82 = arith.select %80, %77, %81 : vector<4x8x8xi1>, vector<4x8x8xf32>
    %cst_23 = arith.constant dense<0xFF800000> : vector<4x8xf32>
    %83 = vector.multi_reduction <maximumf>, %82, %cst_23 [2] : vector<4x8x8xf32> to vector<4x8xf32>
    %84 = vector.shape_cast %83 : vector<4x8xf32> to vector<4x8x1xf32>
    %85 = vector.broadcast %84 : vector<4x8x1xf32> to vector<4x8x8xf32>
    %86 = arith.subf %82, %85 : vector<4x8x8xf32>
    %87 = math.exp %86 : vector<4x8x8xf32>
    %cst_24 = arith.constant dense<0.000000e+00> : vector<4x8xf32>
    %88 = vector.multi_reduction <add>, %87, %cst_24 [2] : vector<4x8x8xf32> to vector<4x8xf32>
    %89 = vector.shape_cast %88 : vector<4x8xf32> to vector<4x8x1xf32>
    %90 = tpu.reciprocal %89 {approx = true} : vector<4x8x1xf32> -> vector<4x8x1xf32>
    %91 = vector.broadcast %90 : vector<4x8x1xf32> to vector<4x8x8xf32>
    %92 = arith.mulf %87, %91 : vector<4x8x8xf32>
    "tpu.trace_start"() <{level = 10 : i32, message = "hqk,hkd->hqd"}> : () -> ()
    %cst_25 = arith.constant dense<0.000000e+00> : vector<4x8x8xf32>
    %93 = tpu.matmul %92, %76, %cst_25 {dimension_numbers = #tpu.dot_dimension_numbers<[2], [1], [1], [2], [0, 0, 0, 1, 1, 2], [0], [0]>} : vector<4x8x8xf32>, vector<4x8x8xf32>, vector<4x8x8xf32> -> vector<4x8x8xf32>
    "tpu.trace_stop"() : () -> ()
    %94 = vector.extract_strided_slice %93 {offsets = [0, 0, 0], sizes = [1, 8, 8], strides = [1, 1, 1]} : vector<4x8x8xf32> to vector<1x8x8xf32>
    %95 = vector.shape_cast %94 : vector<1x8x8xf32> to vector<8x8xf32>
    %96 = vector.extract_strided_slice %93 {offsets = [1, 0, 0], sizes = [1, 8, 8], strides = [1, 1, 1]} : vector<4x8x8xf32> to vector<1x8x8xf32>
    %97 = vector.shape_cast %96 : vector<1x8x8xf32> to vector<8x8xf32>
    %98 = vector.extract_strided_slice %93 {offsets = [2, 0, 0], sizes = [1, 8, 8], strides = [1, 1, 1]} : vector<4x8x8xf32> to vector<1x8x8xf32>
    %99 = vector.shape_cast %98 : vector<1x8x8xf32> to vector<8x8xf32>
    %100 = vector.extract_strided_slice %93 {offsets = [3, 0, 0], sizes = [1, 8, 8], strides = [1, 1, 1]} : vector<4x8x8xf32> to vector<1x8x8xf32>
    %101 = vector.shape_cast %100 : vector<1x8x8xf32> to vector<8x8xf32>
    %102 = tpu.concatenate %95, %97, %99, %101 in 1 : vector<8x8xf32>, vector<8x8xf32>, vector<8x8xf32>, vector<8x8xf32> -> vector<8x32xf32>
    %c0_26 = arith.constant 0 : index
    %c0_27 = arith.constant 0 : index
    %c0_28 = arith.constant 0 : index
    %103 = vector.load %arg7[%c0_26, %c0_27, %c0_28] : memref<2x32x32xf32, #tpu.memory_space<vmem>>, vector<1x32x32xf32>
    %104 = vector.shape_cast %103 : vector<1x32x32xf32> to vector<32x32xf32>
    %cst_29 = arith.constant dense<0.000000e+00> : vector<8x32xf32>
    %105 = tpu.matmul %102, %104, %cst_29 {dimension_numbers = #tpu.dot_dimension_numbers<[1], [0], [0], [1], [0, 0, 1, 1], [], []>} : vector<8x32xf32>, vector<32x32xf32>, vector<8x32xf32> -> vector<8x32xf32>
    %c0_30 = arith.constant 0 : index
    %c0_31 = arith.constant 0 : index
    %c0_32 = arith.constant 0 : index
    %106 = vector.load %arg8[%c0_30, %c0_31, %c0_32] : memref<2x1x32xf32, #tpu.memory_space<vmem>>, vector<1x1x32xf32>
    %107 = vector.shape_cast %106 : vector<1x1x32xf32> to vector<1x32xf32>
    %108 = vector.broadcast %107 : vector<1x32xf32> to vector<8x32xf32>
    %109 = arith.addf %105, %108 : vector<8x32xf32>
    %110 = arith.addf %10, %109 : vector<8x32xf32>
    %111 = vector.extract_strided_slice %15 {offsets = [2, 0], sizes = [1, 32], strides = [1, 1]} : vector<4x32xf32> to vector<1x32xf32>
    %112 = vector.extract_strided_slice %15 {offsets = [3, 0], sizes = [1, 32], strides = [1, 1]} : vector<4x32xf32> to vector<1x32xf32>
    %cst_33 = arith.constant dense<0.000000e+00> : vector<8xf32>
    %113 = vector.multi_reduction <add>, %110, %cst_33 [1] : vector<8x32xf32> to vector<8xf32>
    %114 = vector.shape_cast %113 : vector<8xf32> to vector<8x1xf32>
    %cst_34 = arith.constant 3.200000e+01 : f32
    %115 = vector.broadcast %cst_34 : f32 to vector<8x1xf32>
    %116 = arith.divf %114, %115 : vector<8x1xf32>
    %117 = vector.broadcast %116 : vector<8x1xf32> to vector<8x32xf32>
    %118 = arith.subf %110, %117 : vector<8x32xf32>
    %119 = arith.mulf %118, %118 : vector<8x32xf32>
    %cst_35 = arith.constant dense<0.000000e+00> : vector<8xf32>
    %120 = vector.multi_reduction <add>, %119, %cst_35 [1] : vector<8x32xf32> to vector<8xf32>
    %121 = vector.shape_cast %120 : vector<8xf32> to vector<8x1xf32>
    %cst_36 = arith.constant 3.200000e+01 : f32
    %122 = vector.broadcast %cst_36 : f32 to vector<8x1xf32>
    %123 = arith.divf %121, %122 : vector<8x1xf32>
    %124 = vector.broadcast %116 : vector<8x1xf32> to vector<8x32xf32>
    %125 = arith.subf %110, %124 : vector<8x32xf32>
    %cst_37 = arith.constant 9.99999974E-6 : f32
    %126 = vector.broadcast %cst_37 : f32 to vector<8x1xf32>
    %127 = arith.addf %123, %126 : vector<8x1xf32>
    %128 = math.rsqrt %127 : vector<8x1xf32>
    %129 = vector.broadcast %128 : vector<8x1xf32> to vector<8x32xf32>
    %130 = arith.mulf %125, %129 : vector<8x32xf32>
    %131 = vector.broadcast %111 : vector<1x32xf32> to vector<8x32xf32>
    %132 = arith.mulf %130, %131 : vector<8x32xf32>
    %133 = vector.broadcast %112 : vector<1x32xf32> to vector<8x32xf32>
    %134 = arith.addf %132, %133 : vector<8x32xf32>
    %c0_38 = arith.constant 0 : index
    %c0_39 = arith.constant 0 : index
    %c0_40 = arith.constant 0 : index
    %135 = vector.load %arg9[%c0_38, %c0_39, %c0_40] : memref<2x32x128xf32, #tpu.memory_space<vmem>>, vector<1x32x128xf32>
    %136 = vector.shape_cast %135 : vector<1x32x128xf32> to vector<32x128xf32>
    %cst_41 = arith.constant dense<0.000000e+00> : vector<8x128xf32>
    %137 = tpu.matmul %134, %136, %cst_41 {dimension_numbers = #tpu.dot_dimension_numbers<[1], [0], [0], [1], [0, 0, 1, 1], [], []>} : vector<8x32xf32>, vector<32x128xf32>, vector<8x128xf32> -> vector<8x128xf32>
    %c0_42 = arith.constant 0 : index
    %c0_43 = arith.constant 0 : index
    %c0_44 = arith.constant 0 : index
    %138 = vector.load %arg10[%c0_42, %c0_43, %c0_44] : memref<2x1x128xf32, #tpu.memory_space<vmem>>, vector<1x1x128xf32>
    %139 = vector.shape_cast %138 : vector<1x1x128xf32> to vector<1x128xf32>
    %140 = vector.broadcast %139 : vector<1x128xf32> to vector<8x128xf32>
    %141 = arith.addf %137, %140 : vector<8x128xf32>
    %cst_45 = arith.constant 5.000000e-01 : f32
    %142 = vector.broadcast %cst_45 : f32 to vector<8x128xf32>
    %143 = arith.mulf %142, %141 : vector<8x128xf32>
    %cst_46 = arith.constant 1.41421354 : f32
    %144 = vector.broadcast %cst_46 : f32 to vector<8x128xf32>
    %145 = arith.divf %141, %144 : vector<8x128xf32>
    %146 = math.erf %145 : vector<8x128xf32>
    %cst_47 = arith.constant 1.000000e+00 : f32
    %147 = vector.broadcast %cst_47 : f32 to vector<8x128xf32>
    %148 = arith.addf %147, %146 : vector<8x128xf32>
    %149 = arith.mulf %143, %148 : vector<8x128xf32>
    %c0_48 = arith.constant 0 : index
    %c0_49 = arith.constant 0 : index
    %c0_50 = arith.constant 0 : index
    %150 = vector.load %arg11[%c0_48, %c0_49, %c0_50] : memref<2x128x32xf32, #tpu.memory_space<vmem>>, vector<1x128x32xf32>
    %151 = vector.shape_cast %150 : vector<1x128x32xf32> to vector<128x32xf32>
    %cst_51 = arith.constant dense<0.000000e+00> : vector<8x32xf32>
    %152 = tpu.matmul %149, %151, %cst_51 {dimension_numbers = #tpu.dot_dimension_numbers<[1], [0], [0], [1], [0, 0, 1, 1], [], []>} : vector<8x128xf32>, vector<128x32xf32>, vector<8x32xf32> -> vector<8x32xf32>
    %c0_52 = arith.constant 0 : index
    %c0_53 = arith.constant 0 : index
    %c0_54 = arith.constant 0 : index
    %153 = vector.load %arg12[%c0_52, %c0_53, %c0_54] : memref<2x1x32xf32, #tpu.memory_space<vmem>>, vector<1x1x32xf32>
    %154 = vector.shape_cast %153 : vector<1x1x32xf32> to vector<1x32xf32>
    %155 = vector.broadcast %154 : vector<1x32xf32> to vector<8x32xf32>
    %156 = arith.addf %152, %155 : vector<8x32xf32>
    %157 = arith.addf %110, %156 : vector<8x32xf32>
    %c1 = arith.constant 1 : index
    %c0_55 = arith.constant 0 : index
    %c0_56 = arith.constant 0 : index
    %158 = vector.load %arg4[%c1, %c0_55, %c0_56] : memref<2x4x32xf32, #tpu.memory_space<vmem>>, vector<1x4x32xf32>
    %159 = vector.shape_cast %158 : vector<1x4x32xf32> to vector<4x32xf32>
    %160 = vector.extract_strided_slice %159 {offsets = [0, 0], sizes = [1, 32], strides = [1, 1]} : vector<4x32xf32> to vector<1x32xf32>
    %161 = vector.extract_strided_slice %159 {offsets = [1, 0], sizes = [1, 32], strides = [1, 1]} : vector<4x32xf32> to vector<1x32xf32>
    %cst_57 = arith.constant dense<0.000000e+00> : vector<8xf32>
    %162 = vector.multi_reduction <add>, %157, %cst_57 [1] : vector<8x32xf32> to vector<8xf32>
    %163 = vector.shape_cast %162 : vector<8xf32> to vector<8x1xf32>
    %cst_58 = arith.constant 3.200000e+01 : f32
    %164 = vector.broadcast %cst_58 : f32 to vector<8x1xf32>
    %165 = arith.divf %163, %164 : vector<8x1xf32>
    %166 = vector.broadcast %165 : vector<8x1xf32> to vector<8x32xf32>
    %167 = arith.subf %157, %166 : vector<8x32xf32>
    %168 = arith.mulf %167, %167 : vector<8x32xf32>
    %cst_59 = arith.constant dense<0.000000e+00> : vector<8xf32>
    %169 = vector.multi_reduction <add>, %168, %cst_59 [1] : vector<8x32xf32> to vector<8xf32>
    %170 = vector.shape_cast %169 : vector<8xf32> to vector<8x1xf32>
    %cst_60 = arith.constant 3.200000e+01 : f32
    %171 = vector.broadcast %cst_60 : f32 to vector<8x1xf32>
    %172 = arith.divf %170, %171 : vector<8x1xf32>
    %173 = vector.broadcast %165 : vector<8x1xf32> to vector<8x32xf32>
    %174 = arith.subf %157, %173 : vector<8x32xf32>
    %cst_61 = arith.constant 9.99999974E-6 : f32
    %175 = vector.broadcast %cst_61 : f32 to vector<8x1xf32>
    %176 = arith.addf %172, %175 : vector<8x1xf32>
    %177 = math.rsqrt %176 : vector<8x1xf32>
    %178 = vector.broadcast %177 : vector<8x1xf32> to vector<8x32xf32>
    %179 = arith.mulf %174, %178 : vector<8x32xf32>
    %180 = vector.broadcast %160 : vector<1x32xf32> to vector<8x32xf32>
    %181 = arith.mulf %179, %180 : vector<8x32xf32>
    %182 = vector.broadcast %161 : vector<1x32xf32> to vector<8x32xf32>
    %183 = arith.addf %181, %182 : vector<8x32xf32>
    %c1_62 = arith.constant 1 : index
    %c0_63 = arith.constant 0 : index
    %c0_64 = arith.constant 0 : index
    %184 = vector.load %arg5[%c1_62, %c0_63, %c0_64] : memref<2x32x96xf32, #tpu.memory_space<vmem>>, vector<1x32x96xf32>
    %185 = vector.shape_cast %184 : vector<1x32x96xf32> to vector<32x96xf32>
    %cst_65 = arith.constant dense<0.000000e+00> : vector<8x96xf32>
    %186 = tpu.matmul %183, %185, %cst_65 {dimension_numbers = #tpu.dot_dimension_numbers<[1], [0], [0], [1], [0, 0, 1, 1], [], []>} : vector<8x32xf32>, vector<32x96xf32>, vector<8x96xf32> -> vector<8x96xf32>
    %c1_66 = arith.constant 1 : index
    %c0_67 = arith.constant 0 : index
    %c0_68 = arith.constant 0 : index
    %187 = vector.load %arg6[%c1_66, %c0_67, %c0_68] : memref<2x1x96xf32, #tpu.memory_space<vmem>>, vector<1x1x96xf32>
    %188 = vector.shape_cast %187 : vector<1x1x96xf32> to vector<1x96xf32>
    %189 = vector.broadcast %188 : vector<1x96xf32> to vector<8x96xf32>
    %190 = arith.addf %186, %189 : vector<8x96xf32>
    %191 = vector.extract_strided_slice %190 {offsets = [0, 0], sizes = [8, 32], strides = [1, 1]} : vector<8x96xf32> to vector<8x32xf32>
    %192 = vector.extract_strided_slice %190 {offsets = [0, 32], sizes = [8, 32], strides = [1, 1]} : vector<8x96xf32> to vector<8x32xf32>
    %193 = vector.extract_strided_slice %190 {offsets = [0, 64], sizes = [8, 32], strides = [1, 1]} : vector<8x96xf32> to vector<8x32xf32>
    %194 = vector.extract_strided_slice %191 {offsets = [0, 0], sizes = [8, 8], strides = [1, 1]} : vector<8x32xf32> to vector<8x8xf32>
    %195 = vector.extract_strided_slice %191 {offsets = [0, 8], sizes = [8, 8], strides = [1, 1]} : vector<8x32xf32> to vector<8x8xf32>
    %196 = vector.extract_strided_slice %191 {offsets = [0, 16], sizes = [8, 8], strides = [1, 1]} : vector<8x32xf32> to vector<8x8xf32>
    %197 = vector.extract_strided_slice %191 {offsets = [0, 24], sizes = [8, 8], strides = [1, 1]} : vector<8x32xf32> to vector<8x8xf32>
    %198 = vector.shape_cast %194 : vector<8x8xf32> to vector<1x8x8xf32>
    %199 = vector.shape_cast %195 : vector<8x8xf32> to vector<1x8x8xf32>
    %200 = vector.shape_cast %196 : vector<8x8xf32> to vector<1x8x8xf32>
    %201 = vector.shape_cast %197 : vector<8x8xf32> to vector<1x8x8xf32>
    %202 = tpu.concatenate %198, %199, %200, %201 in 0 : vector<1x8x8xf32>, vector<1x8x8xf32>, vector<1x8x8xf32>, vector<1x8x8xf32> -> vector<4x8x8xf32>
    %203 = vector.extract_strided_slice %192 {offsets = [0, 0], sizes = [8, 8], strides = [1, 1]} : vector<8x32xf32> to vector<8x8xf32>
    %204 = vector.extract_strided_slice %192 {offsets = [0, 8], sizes = [8, 8], strides = [1, 1]} : vector<8x32xf32> to vector<8x8xf32>
    %205 = vector.extract_strided_slice %192 {offsets = [0, 16], sizes = [8, 8], strides = [1, 1]} : vector<8x32xf32> to vector<8x8xf32>
    %206 = vector.extract_strided_slice %192 {offsets = [0, 24], sizes = [8, 8], strides = [1, 1]} : vector<8x32xf32> to vector<8x8xf32>
    %207 = vector.shape_cast %203 : vector<8x8xf32> to vector<1x8x8xf32>
    %208 = vector.shape_cast %204 : vector<8x8xf32> to vector<1x8x8xf32>
    %209 = vector.shape_cast %205 : vector<8x8xf32> to vector<1x8x8xf32>
    %210 = vector.shape_cast %206 : vector<8x8xf32> to vector<1x8x8xf32>
    %211 = tpu.concatenate %207, %208, %209, %210 in 0 : vector<1x8x8xf32>, vector<1x8x8xf32>, vector<1x8x8xf32>, vector<1x8x8xf32> -> vector<4x8x8xf32>
    %212 = vector.extract_strided_slice %193 {offsets = [0, 0], sizes = [8, 8], strides = [1, 1]} : vector<8x32xf32> to vector<8x8xf32>
    %213 = vector.extract_strided_slice %193 {offsets = [0, 8], sizes = [8, 8], strides = [1, 1]} : vector<8x32xf32> to vector<8x8xf32>
    %214 = vector.extract_strided_slice %193 {offsets = [0, 16], sizes = [8, 8], strides = [1, 1]} : vector<8x32xf32> to vector<8x8xf32>
    %215 = vector.extract_strided_slice %193 {offsets = [0, 24], sizes = [8, 8], strides = [1, 1]} : vector<8x32xf32> to vector<8x8xf32>
    %216 = vector.shape_cast %212 : vector<8x8xf32> to vector<1x8x8xf32>
    %217 = vector.shape_cast %213 : vector<8x8xf32> to vector<1x8x8xf32>
    %218 = vector.shape_cast %214 : vector<8x8xf32> to vector<1x8x8xf32>
    %219 = vector.shape_cast %215 : vector<8x8xf32> to vector<1x8x8xf32>
    %220 = tpu.concatenate %216, %217, %218, %219 in 0 : vector<1x8x8xf32>, vector<1x8x8xf32>, vector<1x8x8xf32>, vector<1x8x8xf32> -> vector<4x8x8xf32>
    "tpu.trace_start"() <{level = 10 : i32, message = "hqd,hkd->hqk"}> : () -> ()
    %cst_69 = arith.constant dense<0.000000e+00> : vector<4x8x8xf32>
    %221 = tpu.matmul %202, %211, %cst_69 {dimension_numbers = #tpu.dot_dimension_numbers<[2], [2], [1], [1], [0, 0, 0, 1, 1, 1], [0], [0]>} : vector<4x8x8xf32>, vector<4x8x8xf32>, vector<4x8x8xf32> -> vector<4x8x8xf32>
    "tpu.trace_stop"() : () -> ()
    %222 = vector.shape_cast %13 : vector<8x8xi1> to vector<1x8x8xi1>
    %cst_70 = arith.constant -1.000000e+30 : f32
    %223 = vector.shape_cast %222 : vector<1x8x8xi1> to vector<1x8x8xi1>
    %224 = vector.broadcast %223 : vector<1x8x8xi1> to vector<4x8x8xi1>
    %225 = vector.broadcast %cst_70 : f32 to vector<4x8x8xf32>
    %226 = arith.select %224, %221, %225 : vector<4x8x8xi1>, vector<4x8x8xf32>
    %cst_71 = arith.constant dense<0xFF800000> : vector<4x8xf32>
    %227 = vector.multi_reduction <maximumf>, %226, %cst_71 [2] : vector<4x8x8xf32> to vector<4x8xf32>
    %228 = vector.shape_cast %227 : vector<4x8xf32> to vector<4x8x1xf32>
    %229 = vector.broadcast %228 : vector<4x8x1xf32> to vector<4x8x8xf32>
    %230 = arith.subf %226, %229 : vector<4x8x8xf32>
    %231 = math.exp %230 : vector<4x8x8xf32>
    %cst_72 = arith.constant dense<0.000000e+00> : vector<4x8xf32>
    %232 = vector.multi_reduction <add>, %231, %cst_72 [2] : vector<4x8x8xf32> to vector<4x8xf32>
    %233 = vector.shape_cast %232 : vector<4x8xf32> to vector<4x8x1xf32>
    %234 = tpu.reciprocal %233 {approx = true} : vector<4x8x1xf32> -> vector<4x8x1xf32>
    %235 = vector.broadcast %234 : vector<4x8x1xf32> to vector<4x8x8xf32>
    %236 = arith.mulf %231, %235 : vector<4x8x8xf32>
    "tpu.trace_start"() <{level = 10 : i32, message = "hqk,hkd->hqd"}> : () -> ()
    %cst_73 = arith.constant dense<0.000000e+00> : vector<4x8x8xf32>
    %237 = tpu.matmul %236, %220, %cst_73 {dimension_numbers = #tpu.dot_dimension_numbers<[2], [1], [1], [2], [0, 0, 0, 1, 1, 2], [0], [0]>} : vector<4x8x8xf32>, vector<4x8x8xf32>, vector<4x8x8xf32> -> vector<4x8x8xf32>
    "tpu.trace_stop"() : () -> ()
    %238 = vector.extract_strided_slice %237 {offsets = [0, 0, 0], sizes = [1, 8, 8], strides = [1, 1, 1]} : vector<4x8x8xf32> to vector<1x8x8xf32>
    %239 = vector.shape_cast %238 : vector<1x8x8xf32> to vector<8x8xf32>
    %240 = vector.extract_strided_slice %237 {offsets = [1, 0, 0], sizes = [1, 8, 8], strides = [1, 1, 1]} : vector<4x8x8xf32> to vector<1x8x8xf32>
    %241 = vector.shape_cast %240 : vector<1x8x8xf32> to vector<8x8xf32>
    %242 = vector.extract_strided_slice %237 {offsets = [2, 0, 0], sizes = [1, 8, 8], strides = [1, 1, 1]} : vector<4x8x8xf32> to vector<1x8x8xf32>
    %243 = vector.shape_cast %242 : vector<1x8x8xf32> to vector<8x8xf32>
    %244 = vector.extract_strided_slice %237 {offsets = [3, 0, 0], sizes = [1, 8, 8], strides = [1, 1, 1]} : vector<4x8x8xf32> to vector<1x8x8xf32>
    %245 = vector.shape_cast %244 : vector<1x8x8xf32> to vector<8x8xf32>
    %246 = tpu.concatenate %239, %241, %243, %245 in 1 : vector<8x8xf32>, vector<8x8xf32>, vector<8x8xf32>, vector<8x8xf32> -> vector<8x32xf32>
    %c1_74 = arith.constant 1 : index
    %c0_75 = arith.constant 0 : index
    %c0_76 = arith.constant 0 : index
    %247 = vector.load %arg7[%c1_74, %c0_75, %c0_76] : memref<2x32x32xf32, #tpu.memory_space<vmem>>, vector<1x32x32xf32>
    %248 = vector.shape_cast %247 : vector<1x32x32xf32> to vector<32x32xf32>
    %cst_77 = arith.constant dense<0.000000e+00> : vector<8x32xf32>
    %249 = tpu.matmul %246, %248, %cst_77 {dimension_numbers = #tpu.dot_dimension_numbers<[1], [0], [0], [1], [0, 0, 1, 1], [], []>} : vector<8x32xf32>, vector<32x32xf32>, vector<8x32xf32> -> vector<8x32xf32>
    %c1_78 = arith.constant 1 : index
    %c0_79 = arith.constant 0 : index
    %c0_80 = arith.constant 0 : index
    %250 = vector.load %arg8[%c1_78, %c0_79, %c0_80] : memref<2x1x32xf32, #tpu.memory_space<vmem>>, vector<1x1x32xf32>
    %251 = vector.shape_cast %250 : vector<1x1x32xf32> to vector<1x32xf32>
    %252 = vector.broadcast %251 : vector<1x32xf32> to vector<8x32xf32>
    %253 = arith.addf %249, %252 : vector<8x32xf32>
    %254 = arith.addf %157, %253 : vector<8x32xf32>
    %255 = vector.extract_strided_slice %159 {offsets = [2, 0], sizes = [1, 32], strides = [1, 1]} : vector<4x32xf32> to vector<1x32xf32>
    %256 = vector.extract_strided_slice %159 {offsets = [3, 0], sizes = [1, 32], strides = [1, 1]} : vector<4x32xf32> to vector<1x32xf32>
    %cst_81 = arith.constant dense<0.000000e+00> : vector<8xf32>
    %257 = vector.multi_reduction <add>, %254, %cst_81 [1] : vector<8x32xf32> to vector<8xf32>
    %258 = vector.shape_cast %257 : vector<8xf32> to vector<8x1xf32>
    %cst_82 = arith.constant 3.200000e+01 : f32
    %259 = vector.broadcast %cst_82 : f32 to vector<8x1xf32>
    %260 = arith.divf %258, %259 : vector<8x1xf32>
    %261 = vector.broadcast %260 : vector<8x1xf32> to vector<8x32xf32>
    %262 = arith.subf %254, %261 : vector<8x32xf32>
    %263 = arith.mulf %262, %262 : vector<8x32xf32>
    %cst_83 = arith.constant dense<0.000000e+00> : vector<8xf32>
    %264 = vector.multi_reduction <add>, %263, %cst_83 [1] : vector<8x32xf32> to vector<8xf32>
    %265 = vector.shape_cast %264 : vector<8xf32> to vector<8x1xf32>
    %cst_84 = arith.constant 3.200000e+01 : f32
    %266 = vector.broadcast %cst_84 : f32 to vector<8x1xf32>
    %267 = arith.divf %265, %266 : vector<8x1xf32>
    %268 = vector.broadcast %260 : vector<8x1xf32> to vector<8x32xf32>
    %269 = arith.subf %254, %268 : vector<8x32xf32>
    %cst_85 = arith.constant 9.99999974E-6 : f32
    %270 = vector.broadcast %cst_85 : f32 to vector<8x1xf32>
    %271 = arith.addf %267, %270 : vector<8x1xf32>
    %272 = math.rsqrt %271 : vector<8x1xf32>
    %273 = vector.broadcast %272 : vector<8x1xf32> to vector<8x32xf32>
    %274 = arith.mulf %269, %273 : vector<8x32xf32>
    %275 = vector.broadcast %255 : vector<1x32xf32> to vector<8x32xf32>
    %276 = arith.mulf %274, %275 : vector<8x32xf32>
    %277 = vector.broadcast %256 : vector<1x32xf32> to vector<8x32xf32>
    %278 = arith.addf %276, %277 : vector<8x32xf32>
    %c1_86 = arith.constant 1 : index
    %c0_87 = arith.constant 0 : index
    %c0_88 = arith.constant 0 : index
    %279 = vector.load %arg9[%c1_86, %c0_87, %c0_88] : memref<2x32x128xf32, #tpu.memory_space<vmem>>, vector<1x32x128xf32>
    %280 = vector.shape_cast %279 : vector<1x32x128xf32> to vector<32x128xf32>
    %cst_89 = arith.constant dense<0.000000e+00> : vector<8x128xf32>
    %281 = tpu.matmul %278, %280, %cst_89 {dimension_numbers = #tpu.dot_dimension_numbers<[1], [0], [0], [1], [0, 0, 1, 1], [], []>} : vector<8x32xf32>, vector<32x128xf32>, vector<8x128xf32> -> vector<8x128xf32>
    %c1_90 = arith.constant 1 : index
    %c0_91 = arith.constant 0 : index
    %c0_92 = arith.constant 0 : index
    %282 = vector.load %arg10[%c1_90, %c0_91, %c0_92] : memref<2x1x128xf32, #tpu.memory_space<vmem>>, vector<1x1x128xf32>
    %283 = vector.shape_cast %282 : vector<1x1x128xf32> to vector<1x128xf32>
    %284 = vector.broadcast %283 : vector<1x128xf32> to vector<8x128xf32>
    %285 = arith.addf %281, %284 : vector<8x128xf32>
    %cst_93 = arith.constant 5.000000e-01 : f32
    %286 = vector.broadcast %cst_93 : f32 to vector<8x128xf32>
    %287 = arith.mulf %286, %285 : vector<8x128xf32>
    %cst_94 = arith.constant 1.41421354 : f32
    %288 = vector.broadcast %cst_94 : f32 to vector<8x128xf32>
    %289 = arith.divf %285, %288 : vector<8x128xf32>
    %290 = math.erf %289 : vector<8x128xf32>
    %cst_95 = arith.constant 1.000000e+00 : f32
    %291 = vector.broadcast %cst_95 : f32 to vector<8x128xf32>
    %292 = arith.addf %291, %290 : vector<8x128xf32>
    %293 = arith.mulf %287, %292 : vector<8x128xf32>
    %c1_96 = arith.constant 1 : index
    %c0_97 = arith.constant 0 : index
    %c0_98 = arith.constant 0 : index
    %294 = vector.load %arg11[%c1_96, %c0_97, %c0_98] : memref<2x128x32xf32, #tpu.memory_space<vmem>>, vector<1x128x32xf32>
    %295 = vector.shape_cast %294 : vector<1x128x32xf32> to vector<128x32xf32>
    %cst_99 = arith.constant dense<0.000000e+00> : vector<8x32xf32>
    %296 = tpu.matmul %293, %295, %cst_99 {dimension_numbers = #tpu.dot_dimension_numbers<[1], [0], [0], [1], [0, 0, 1, 1], [], []>} : vector<8x128xf32>, vector<128x32xf32>, vector<8x32xf32> -> vector<8x32xf32>
    %c1_100 = arith.constant 1 : index
    %c0_101 = arith.constant 0 : index
    %c0_102 = arith.constant 0 : index
    %297 = vector.load %arg12[%c1_100, %c0_101, %c0_102] : memref<2x1x32xf32, #tpu.memory_space<vmem>>, vector<1x1x32xf32>
    %298 = vector.shape_cast %297 : vector<1x1x32xf32> to vector<1x32xf32>
    %299 = vector.broadcast %298 : vector<1x32xf32> to vector<8x32xf32>
    %300 = arith.addf %296, %299 : vector<8x32xf32>
    %301 = arith.addf %254, %300 : vector<8x32xf32>
    %c0_103 = arith.constant 0 : index
    %c0_104 = arith.constant 0 : index
    %302 = vector.load %arg13[%c0_103, %c0_104] : memref<2x32xf32, #tpu.memory_space<vmem>>, vector<1x32xf32>
    %c1_105 = arith.constant 1 : index
    %c0_106 = arith.constant 0 : index
    %303 = vector.load %arg13[%c1_105, %c0_106] : memref<2x32xf32, #tpu.memory_space<vmem>>, vector<1x32xf32>
    %cst_107 = arith.constant dense<0.000000e+00> : vector<8xf32>
    %304 = vector.multi_reduction <add>, %301, %cst_107 [1] : vector<8x32xf32> to vector<8xf32>
    %305 = vector.shape_cast %304 : vector<8xf32> to vector<8x1xf32>
    %cst_108 = arith.constant 3.200000e+01 : f32
    %306 = vector.broadcast %cst_108 : f32 to vector<8x1xf32>
    %307 = arith.divf %305, %306 : vector<8x1xf32>
    %308 = vector.broadcast %307 : vector<8x1xf32> to vector<8x32xf32>
    %309 = arith.subf %301, %308 : vector<8x32xf32>
    %310 = arith.mulf %309, %309 : vector<8x32xf32>
    %cst_109 = arith.constant dense<0.000000e+00> : vector<8xf32>
    %311 = vector.multi_reduction <add>, %310, %cst_109 [1] : vector<8x32xf32> to vector<8xf32>
    %312 = vector.shape_cast %311 : vector<8xf32> to vector<8x1xf32>
    %cst_110 = arith.constant 3.200000e+01 : f32
    %313 = vector.broadcast %cst_110 : f32 to vector<8x1xf32>
    %314 = arith.divf %312, %313 : vector<8x1xf32>
    %315 = vector.broadcast %307 : vector<8x1xf32> to vector<8x32xf32>
    %316 = arith.subf %301, %315 : vector<8x32xf32>
    %cst_111 = arith.constant 9.99999974E-6 : f32
    %317 = vector.broadcast %cst_111 : f32 to vector<8x1xf32>
    %318 = arith.addf %314, %317 : vector<8x1xf32>
    %319 = math.rsqrt %318 : vector<8x1xf32>
    %320 = vector.broadcast %319 : vector<8x1xf32> to vector<8x32xf32>
    %321 = arith.mulf %316, %320 : vector<8x32xf32>
    %322 = vector.broadcast %302 : vector<1x32xf32> to vector<8x32xf32>
    %323 = arith.mulf %321, %322 : vector<8x32xf32>
    %324 = vector.broadcast %303 : vector<1x32xf32> to vector<8x32xf32>
    %325 = arith.addf %323, %324 : vector<8x32xf32>
    %c0_112 = arith.constant 0 : index
    %c0_113 = arith.constant 0 : index
    %326 = vector.load %arg14[%c0_112, %c0_113] : memref<32x128xf32, #tpu.memory_space<vmem>>, vector<32x128xf32>
    %cst_114 = arith.constant dense<0.000000e+00> : vector<8x128xf32>
    %327 = tpu.matmul %325, %326, %cst_114 {dimension_numbers = #tpu.dot_dimension_numbers<[1], [0], [0], [1], [0, 0, 1, 1], [], []>} : vector<8x32xf32>, vector<32x128xf32>, vector<8x128xf32> -> vector<8x128xf32>
    %c0_115 = arith.constant 0 : index
    %c0_116 = arith.constant 0 : index
    %328 = vector.load %arg15[%c0_115, %c0_116] : memref<1x128xf32, #tpu.memory_space<vmem>>, vector<1x128xf32>
    %329 = vector.broadcast %328 : vector<1x128xf32> to vector<8x128xf32>
    %330 = arith.addf %327, %329 : vector<8x128xf32>
    %c0_117 = arith.constant 0 : index
    %c0_118 = arith.constant 0 : index
    %c0_119 = arith.constant 0 : index
    %331 = vector.load %arg16[%c0_117, %c0_118, %c0_119] : memref<1x8x128xf32, #tpu.memory_space<vmem>>, vector<1x8x128xf32>
    %332 = vector.shape_cast %331 : vector<1x8x128xf32> to vector<8x128xf32>
    %333 = vector.shape_cast %330 : vector<8x128xf32> to vector<1x8x128xf32>
    tpu.vector_store %arg16[%c0_117, %c0_118, %c0_119], %333 {strides = array<i32>} : memref<1x8x128xf32, #tpu.memory_space<vmem>>, vector<1x8x128xf32>,
    return
  }
  func.func @transform_0(%arg0: i32) -> (i32, i32, i32) {
    %c0_i32 = arith.constant 0 : i32
    %c0_i32_0 = arith.constant 0 : i32
    %c0_i32_1 = arith.constant 0 : i32
    return %arg0, %c0_i32, %c0_i32_0 : i32, i32, i32
  }
  func.func @transform_1(%arg0: i32) -> (i32, i32) {
    %c0_i32 = arith.constant 0 : i32
    %c0_i32_0 = arith.constant 0 : i32
    %c0_i32_1 = arith.constant 0 : i32
    return %c0_i32, %c0_i32_0 : i32, i32
  }
  func.func @transform_2(%arg0: i32) -> (i32, i32) {
    %c0_i32 = arith.constant 0 : i32
    %c0_i32_0 = arith.constant 0 : i32
    %c0_i32_1 = arith.constant 0 : i32
    return %c0_i32, %c0_i32_0 : i32, i32
  }
  func.func @transform_3(%arg0: i32) -> (i32, i32, i32) {
    %c0_i32 = arith.constant 0 : i32
    %c0_i32_0 = arith.constant 0 : i32
    %c0_i32_1 = arith.constant 0 : i32
    %c0_i32_2 = arith.constant 0 : i32
    return %c0_i32, %c0_i32_0, %c0_i32_1 : i32, i32, i32
  }
  func.func @transform_4(%arg0: i32) -> (i32, i32, i32) {
    %c0_i32 = arith.constant 0 : i32
    %c0_i32_0 = arith.constant 0 : i32
    %c0_i32_1 = arith.constant 0 : i32
    %c0_i32_2 = arith.constant 0 : i32
    return %c0_i32, %c0_i32_0, %c0_i32_1 : i32, i32, i32
  }
  func.func @transform_5(%arg0: i32) -> (i32, i32, i32) {
    %c0_i32 = arith.constant 0 : i32
    %c0_i32_0 = arith.constant 0 : i32
    %c0_i32_1 = arith.constant 0 : i32
    %c0_i32_2 = arith.constant 0 : i32
    return %c0_i32, %c0_i32_0, %c0_i32_1 : i32, i32, i32
  }
  func.func @transform_6(%arg0: i32) -> (i32, i32, i32) {
    %c0_i32 = arith.constant 0 : i32
    %c0_i32_0 = arith.constant 0 : i32
    %c0_i32_1 = arith.constant 0 : i32
    %c0_i32_2 = arith.constant 0 : i32
    return %c0_i32, %c0_i32_0, %c0_i32_1 : i32, i32, i32
  }
  func.func @transform_7(%arg0: i32) -> (i32, i32, i32) {
    %c0_i32 = arith.constant 0 : i32
    %c0_i32_0 = arith.constant 0 : i32
    %c0_i32_1 = arith.constant 0 : i32
    %c0_i32_2 = arith.constant 0 : i32
    return %c0_i32, %c0_i32_0, %c0_i32_1 : i32, i32, i32
  }
  func.func @transform_8(%arg0: i32) -> (i32, i32, i32) {
    %c0_i32 = arith.constant 0 : i32
    %c0_i32_0 = arith.constant 0 : i32
    %c0_i32_1 = arith.constant 0 : i32
    %c0_i32_2 = arith.constant 0 : i32
    return %c0_i32, %c0_i32_0, %c0_i32_1 : i32, i32, i32
  }
  func.func @transform_9(%arg0: i32) -> (i32, i32, i32) {
    %c0_i32 = arith.constant 0 : i32
    %c0_i32_0 = arith.constant 0 : i32
    %c0_i32_1 = arith.constant 0 : i32
    %c0_i32_2 = arith.constant 0 : i32
    return %c0_i32, %c0_i32_0, %c0_i32_1 : i32, i32, i32
  }
  func.func @transform_10(%arg0: i32) -> (i32, i32, i32) {
    %c0_i32 = arith.constant 0 : i32
    %c0_i32_0 = arith.constant 0 : i32
    %c0_i32_1 = arith.constant 0 : i32
    %c0_i32_2 = arith.constant 0 : i32
    return %c0_i32, %c0_i32_0, %c0_i32_1 : i32, i32, i32
  }
  func.func @transform_11(%arg0: i32) -> (i32, i32, i32) {
    %c0_i32 = arith.constant 0 : i32
    %c0_i32_0 = arith.constant 0 : i32
    %c0_i32_1 = arith.constant 0 : i32
    %c0_i32_2 = arith.constant 0 : i32
    return %c0_i32, %c0_i32_0, %c0_i32_1 : i32, i32, i32
  }
  func.func @transform_12(%arg0: i32) -> (i32, i32) {
    %c0_i32 = arith.constant 0 : i32
    %c0_i32_0 = arith.constant 0 : i32
    %c0_i32_1 = arith.constant 0 : i32
    return %c0_i32, %c0_i32_0 : i32, i32
  }
  func.func @transform_13(%arg0: i32) -> (i32, i32) {
    %c0_i32 = arith.constant 0 : i32
    %c0_i32_0 = arith.constant 0 : i32
    %c0_i32_1 = arith.constant 0 : i32
    return %c0_i32, %c0_i32_0 : i32, i32
  }
  func.func @transform_14(%arg0: i32) -> (i32, i32) {
    %c0_i32 = arith.constant 0 : i32
    %c0_i32_0 = arith.constant 0 : i32
    %c0_i32_1 = arith.constant 0 : i32
    return %c0_i32, %c0_i32_0 : i32, i32
  }
  func.func @transform_15(%arg0: i32) -> (i32, i32, i32) {
    %c0_i32 = arith.constant 0 : i32
    %c0_i32_0 = arith.constant 0 : i32
    %c0_i32_1 = arith.constant 0 : i32
    return %arg0, %c0_i32, %c0_i32_0 : i32, i32, i32
  }
}

</mosaic_0001>

<llo_original>
// kernel: minigpt_forward.1
$region0: #{minigpt_forward.1}
  #allocation0 [shape = 'u32[]', space=smem, size = 0x4, offset = 0x4, fixed_abs, tag = 'smem constant byte address 0x4 - core index']
  #allocation1 [shape = 'u32[144,128]{1,0:T(1,128)}', space=vmem, size = 0x12000, scoped, tag = 'internal scratch']
  %s0 = inlined_call_operand.vmem [shape: s32[2,8,1], index: 0, kind: input, shape index: {}]
  %s1 = inlined_call_operand.vmem [shape: f32[64,32], index: 1, kind: input, shape index: {}]
  %s2 = inlined_call_operand.vmem [shape: f32[8,32], index: 2, kind: input, shape index: {}]
  %s3 = inlined_call_operand.vmem [shape: f32[2,4,32], index: 3, kind: input, shape index: {}]
  %s4 = inlined_call_operand.vmem [shape: f32[2,32,96], index: 4, kind: input, shape index: {}]
  %s5 = inlined_call_operand.vmem [shape: f32[2,1,96], index: 5, kind: input, shape index: {}]
  %s6 = inlined_call_operand.vmem [shape: f32[2,32,32], index: 6, kind: input, shape index: {}]
  %s7 = inlined_call_operand.vmem [shape: f32[2,1,32], index: 7, kind: input, shape index: {}]
  %s8 = inlined_call_operand.vmem [shape: f32[2,32,128], index: 8, kind: input, shape index: {}]
  %s9 = inlined_call_operand.vmem [shape: f32[2,1,128], index: 9, kind: input, shape index: {}]
  %s10 = inlined_call_operand.vmem [shape: f32[2,128,32], index: 10, kind: input, shape index: {}]
  %s11 = inlined_call_operand.vmem [shape: f32[2,1,32], index: 11, kind: input, shape index: {}]
  %s12 = inlined_call_operand.vmem [shape: f32[2,32], index: 12, kind: input, shape index: {}]
  %s13 = inlined_call_operand.vmem [shape: f32[32,128], index: 13, kind: input, shape index: {}]
  %s14 = inlined_call_operand.vmem [shape: f32[1,128], index: 14, kind: input, shape index: {}]
  %s15 = inlined_call_operand.hbm [shape: f32[2,8,128], index: 15, kind: output, shape index: {}]
  %s16 = sld [smem:[#allocation0]]
  $region93: #{minigpt_forward.1} parent=0
    _
  %s18 = ssub.s32 1, %s16
  %s19 = scalar_select 0, %s18, %s16
  $region1: #{minigpt_forward.1} parent=0
    #allocation2 [shape = 'u8[8192]{0}', space=vmem, size = 0x2000, scoped, tag = 'output window, operand 0']
    #allocation3 [shape = 's32[2]{0}', space=sflag, size = 0x8, scoped, tag = 'scoped memory for minigpt_forward.1']
    %20 = vsyncpa [#allocation3], 0
    %s21 = scalar_lea.sflag [#allocation3], 1
    %22 = vsyncpa %s21, 0
    loop: start=0, step=1, limit=4
    $region2: #{minigpt_forward.1} parent=1 // loop_pre_header
      _
    $region3: #{minigpt_forward.1} parent=1 // loop_header
      %s24 = sphi 0, %s28
      %p25 = scmp.ge.s32.totalorder %s24, 4
      %s34 = sphi 0, %s36
      %s37 = sphi 0, %s34
      %s38 = sphi 0, %s37
      %s54 = sphi 0, %s38
      %s58 = sphi 0, %s58
      %s60 = sphi 0, %s58
      %s61 = sphi 0, %s60
      %s75 = sphi 0, %s61
      %s79 = sphi 0, %s79
      %s81 = sphi 0, %s79
      %s82 = sphi 0, %s81
      %s96 = sphi 0, %s82
      %s100 = sphi 0, %s100
      %s102 = sphi 0, %s100
      %s103 = sphi 0, %s102
      %s117 = sphi 0, %s103
      %s121 = sphi 0, %s121
      %s123 = sphi 0, %s121
      %s124 = sphi 0, %s123
      %s138 = sphi 0, %s124
      %s142 = sphi 0, %s142
      %s144 = sphi 0, %s142
      %s145 = sphi 0, %s144
      %s159 = sphi 0, %s145
      %s163 = sphi 0, %s163
      %s165 = sphi 0, %s163
      %s166 = sphi 0, %s165
      %s180 = sphi 0, %s166
      %s184 = sphi 0, %s184
      %s186 = sphi 0, %s184
      %s187 = sphi 0, %s186
      %s201 = sphi 0, %s187
      %s205 = sphi 0, %s205
      %s207 = sphi 0, %s205
      %s208 = sphi 0, %s207
      %s222 = sphi 0, %s208
      %s226 = sphi 0, %s226
      %s228 = sphi 0, %s226
      %s229 = sphi 0, %s228
      %s243 = sphi 0, %s229
      %s247 = sphi 0, %s247
      %s249 = sphi 0, %s247
      %s250 = sphi 0, %s249
      %s264 = sphi 0, %s250
      %s268 = sphi 0, %s268
      %s270 = sphi 0, %s268
      %s271 = sphi 0, %s270
      %s285 = sphi 0, %s271
      %s289 = sphi 0, %s289
      %s291 = sphi 0, %s289
      %s292 = sphi 0, %s291
      %s306 = sphi 0, %s292
      %s310 = sphi 0, %s310
      %s312 = sphi 0, %s310
      %s313 = sphi 0, %s312
      %s327 = sphi 0, %s313
      %s331 = sphi 0, %s331
      %s333 = sphi 0, %s331
      %s334 = sphi 0, %s333
      %s348 = sphi 0, %s334
      %s354 = sphi 0, %s356
      %s357 = sphi 0, %s354
      %s358 = sphi 0, %s357
      %s374 = sphi 0, %s358
    $region4: #{minigpt_forward.1} parent=1 // loop_header_branch
      %27 = sbr.rel (%p25) target = $region8
    $region5: #{minigpt_forward.1} parent=1 // loop_body
      %s29 = ssub.s32 %s24, 1
      %s30 = ssub.s32 %s24, 2
      %s31 = sadd.s32 %s24, 1
      %s32 = ssub.s32 %s24, %s31
      %p33 = scmp.eq.s32.totalorder %s32, 0
      %s35 = sadd.s32 %s34, 1
      %s36 = scalar_select %p33, %s34, %s35
      %p39 = pneg %p33
      %p40 = scmp.eq.s32.totalorder %s24, 1
      %p41 = por %p39, %p40
      %p42 = scmp.ne.s32.totalorder %s34, %s37
      %p43 = scmp.eq.s32.totalorder %s24, 0
      %p44 = por %p42, %p43
      %p45 = scmp.ne.s32.totalorder %s34, %s37
      %p46 = scmp.eq.s32.totalorder %s29, 1
      %p47 = por %p45, %p46
      %p48 = scmp.ne.s32.totalorder %s37, %s38
      %p49 = scmp.eq.s32.totalorder %s29, 0
      %p50 = por %p48, %p49
      %p51 = scmp.ne.s32.totalorder %s37, %s38
      %p52 = scmp.eq.s32.totalorder %s30, 1
      %p53 = por %p51, %p52
      %p55 = scmp.ne.s32.totalorder %s38, %s54
      %p56 = scmp.eq.s32.totalorder %s30, 0
      %p57 = por %p55, %p56
      %s59 = sadd.s32 %s58, 1
      %p62 = scmp.eq.s32.totalorder %s24, 1
      %p63 = scmp.ne.s32.totalorder %s58, %s60
      %p64 = scmp.eq.s32.totalorder %s24, 0
      %p65 = por %p63, %p64
      %p66 = scmp.ne.s32.totalorder %s58, %s60
      %p67 = scmp.eq.s32.totalorder %s29, 1
      %p68 = por %p66, %p67
      %p69 = scmp.ne.s32.totalorder %s60, %s61
      %p70 = scmp.eq.s32.totalorder %s29, 0
      %p71 = por %p69, %p70
      %p72 = scmp.ne.s32.totalorder %s60, %s61
      %p73 = scmp.eq.s32.totalorder %s30, 1
      %p74 = por %p72, %p73
      %p76 = scmp.ne.s32.totalorder %s61, %s75
      %p77 = scmp.eq.s32.totalorder %s30, 0
      %p78 = por %p76, %p77
      %s80 = sadd.s32 %s79, 1
      %p83 = scmp.eq.s32.totalorder %s24, 1
      %p84 = scmp.ne.s32.totalorder %s79, %s81
      %p85 = scmp.eq.s32.totalorder %s24, 0
      %p86 = por %p84, %p85
      %p87 = scmp.ne.s32.totalorder %s79, %s81
      %p88 = scmp.eq.s32.totalorder %s29, 1
      %p89 = por %p87, %p88
      %p90 = scmp.ne.s32.totalorder %s81, %s82
      %p91 = scmp.eq.s32.totalorder %s29, 0
      %p92 = por %p90, %p91
      %p93 = scmp.ne.s32.totalorder %s81, %s82
      %p94 = scmp.eq.s32.totalorder %s30, 1
      %p95 = por %p93, %p94
      %p97 = scmp.ne.s32.totalorder %s82, %s96
      %p98 = scmp.eq.s32.totalorder %s30, 0
      %p99 = por %p97, %p98
      %s101 = sadd.s32 %s100, 1
      %p104 = scmp.eq.s32.totalorder %s24, 1
      %p105 = scmp.ne.s32.totalorder %s100, %s102
      %p106 = scmp.eq.s32.totalorder %s24, 0
      %p107 = por %p105, %p106
      %p108 = scmp.ne.s32.totalorder %s100, %s102
      %p109 = scmp.eq.s32.totalorder %s29, 1
      %p110 = por %p108, %p109
      %p111 = scmp.ne.s32.totalorder %s102, %s103
      %p112 = scmp.eq.s32.totalorder %s29, 0
      %p113 = por %p111, %p112
      %p114 = scmp.ne.s32.totalorder %s102, %s103
      %p115 = scmp.eq.s32.totalorder %s30, 1
      %p116 = por %p114, %p115
      %p118 = scmp.ne.s32.totalorder %s103, %s117
      %p119 = scmp.eq.s32.totalorder %s30, 0
      %p120 = por %p118, %p119
      %s122 = sadd.s32 %s121, 1
      %p125 = scmp.eq.s32.totalorder %s24, 1
      %p126 = scmp.ne.s32.totalorder %s121, %s123
      %p127 = scmp.eq.s32.totalorder %s24, 0
      %p128 = por %p126, %p127
      %p129 = scmp.ne.s32.totalorder %s121, %s123
      %p130 = scmp.eq.s32.totalorder %s29, 1
      %p131 = por %p129, %p130
      %p132 = scmp.ne.s32.totalorder %s123, %s124
      %p133 = scmp.eq.s32.totalorder %s29, 0
      %p134 = por %p132, %p133
      %p135 = scmp.ne.s32.totalorder %s123, %s124
      %p136 = scmp.eq.s32.totalorder %s30, 1
      %p137 = por %p135, %p136
      %p139 = scmp.ne.s32.totalorder %s124, %s138
      %p140 = scmp.eq.s32.totalorder %s30, 0
      %p141 = por %p139, %p140
      %s143 = sadd.s32 %s142, 1
      %p146 = scmp.eq.s32.totalorder %s24, 1
      %p147 = scmp.ne.s32.totalorder %s142, %s144
      %p148 = scmp.eq.s32.totalorder %s24, 0
      %p149 = por %p147, %p148
      %p150 = scmp.ne.s32.totalorder %s142, %s144
      %p151 = scmp.eq.s32.totalorder %s29, 1
      %p152 = por %p150, %p151
      %p153 = scmp.ne.s32.totalorder %s144, %s145
      %p154 = scmp.eq.s32.totalorder %s29, 0
      %p155 = por %p153, %p154
      %p156 = scmp.ne.s32.totalorder %s144, %s145
      %p157 = scmp.eq.s32.totalorder %s30, 1
      %p158 = por %p156, %p157
      %p160 = scmp.ne.s32.totalorder %s145, %s159
      %p161 = scmp.eq.s32.totalorder %s30, 0
      %p162 = por %p160, %p161
      %s164 = sadd.s32 %s163, 1
      %p167 = scmp.eq.s32.totalorder %s24, 1
      %p168 = scmp.ne.s32.totalorder %s163, %s165
      %p169 = scmp.eq.s32.totalorder %s24, 0
      %p170 = por %p168, %p169
      %p171 = scmp.ne.s32.totalorder %s163, %s165
      %p172 = scmp.eq.s32.totalorder %s29, 1
      %p173 = por %p171, %p172
      %p174 = scmp.ne.s32.totalorder %s165, %s166
      %p175 = scmp.eq.s32.totalorder %s29, 0
      %p176 = por %p174, %p175
      %p177 = scmp.ne.s32.totalorder %s165, %s166
      %p178 = scmp.eq.s32.totalorder %s30, 1
      %p179 = por %p177, %p178
      %p181 = scmp.ne.s32.totalorder %s166, %s180
      %p182 = scmp.eq.s32.totalorder %s30, 0
      %p183 = por %p181, %p182
      %s185 = sadd.s32 %s184, 1
      %p188 = scmp.eq.s32.totalorder %s24, 1
      %p189 = scmp.ne.s32.totalorder %s184, %s186
      %p190 = scmp.eq.s32.totalorder %s24, 0
      %p191 = por %p189, %p190
      %p192 = scmp.ne.s32.totalorder %s184, %s186
      %p193 = scmp.eq.s32.totalorder %s29, 1
      %p194 = por %p192, %p193
      %p195 = scmp.ne.s32.totalorder %s186, %s187
      %p196 = scmp.eq.s32.totalorder %s29, 0
      %p197 = por %p195, %p196
      %p198 = scmp.ne.s32.totalorder %s186, %s187
      %p199 = scmp.eq.s32.totalorder %s30, 1
      %p200 = por %p198, %p199
      %p202 = scmp.ne.s32.totalorder %s187, %s201
      %p203 = scmp.eq.s32.totalorder %s30, 0
      %p204 = por %p202, %p203
      %s206 = sadd.s32 %s205, 1
      %p209 = scmp.eq.s32.totalorder %s24, 1
      %p210 = scmp.ne.s32.totalorder %s205, %s207
      %p211 = scmp.eq.s32.totalorder %s24, 0
      %p212 = por %p210, %p211
      %p213 = scmp.ne.s32.totalorder %s205, %s207
      %p214 = scmp.eq.s32.totalorder %s29, 1
      %p215 = por %p213, %p214
      %p216 = scmp.ne.s32.totalorder %s207, %s208
      %p217 = scmp.eq.s32.totalorder %s29, 0
      %p218 = por %p216, %p217
      %p219 = scmp.ne.s32.totalorder %s207, %s208
      %p220 = scmp.eq.s32.totalorder %s30, 1
      %p221 = por %p219, %p220
      %p223 = scmp.ne.s32.totalorder %s208, %s222
      %p224 = scmp.eq.s32.totalorder %s30, 0
      %p225 = por %p223, %p224
      %s227 = sadd.s32 %s226, 1
      %p230 = scmp.eq.s32.totalorder %s24, 1
      %p231 = scmp.ne.s32.totalorder %s226, %s228
      %p232 = scmp.eq.s32.totalorder %s24, 0
      %p233 = por %p231, %p232
      %p234 = scmp.ne.s32.totalorder %s226, %s228
      %p235 = scmp.eq.s32.totalorder %s29, 1
      %p236 = por %p234, %p235
      %p237 = scmp.ne.s32.totalorder %s228, %s229
      %p238 = scmp.eq.s32.totalorder %s29, 0
      %p239 = por %p237, %p238
      %p240 = scmp.ne.s32.totalorder %s228, %s229
      %p241 = scmp.eq.s32.totalorder %s30, 1
      %p242 = por %p240, %p241
      %p244 = scmp.ne.s32.totalorder %s229, %s243
      %p245 = scmp.eq.s32.totalorder %s30, 0
      %p246 = por %p244, %p245
      %s248 = sadd.s32 %s247, 1
      %p251 = scmp.eq.s32.totalorder %s24, 1
      %p252 = scmp.ne.s32.totalorder %s247, %s249
      %p253 = scmp.eq.s32.totalorder %s24, 0
      %p254 = por %p252, %p253
      %p255 = scmp.ne.s32.totalorder %s247, %s249
      %p256 = scmp.eq.s32.totalorder %s29, 1
      %p257 = por %p255, %p256
      %p258 = scmp.ne.s32.totalorder %s249, %s250
      %p259 = scmp.eq.s32.totalorder %s29, 0
      %p260 = por %p258, %p259
      %p261 = scmp.ne.s32.totalorder %s249, %s250
      %p262 = scmp.eq.s32.totalorder %s30, 1
      %p263 = por %p261, %p262
      %p265 = scmp.ne.s32.totalorder %s250, %s264
      %p266 = scmp.eq.s32.totalorder %s30, 0
      %p267 = por %p265, %p266
      %s269 = sadd.s32 %s268, 1
      %p272 = scmp.eq.s32.totalorder %s24, 1
      %p273 = scmp.ne.s32.totalorder %s268, %s270
      %p274 = scmp.eq.s32.totalorder %s24, 0
      %p275 = por %p273, %p274
      %p276 = scmp.ne.s32.totalorder %s268, %s270
      %p277 = scmp.eq.s32.totalorder %s29, 1
      %p278 = por %p276, %p277
      %p279 = scmp.ne.s32.totalorder %s270, %s271
      %p280 = scmp.eq.s32.totalorder %s29, 0
      %p281 = por %p279, %p280
      %p282 = scmp.ne.s32.totalorder %s270, %s271
      %p283 = scmp.eq.s32.totalorder %s30, 1
      %p284 = por %p282, %p283
      %p286 = scmp.ne.s32.totalorder %s271, %s285
      %p287 = scmp.eq.s32.totalorder %s30, 0
      %p288 = por %p286, %p287
      %s290 = sadd.s32 %s289, 1
      %p293 = scmp.eq.s32.totalorder %s24, 1
      %p294 = scmp.ne.s32.totalorder %s289, %s291
      %p295 = scmp.eq.s32.totalorder %s24, 0
      %p296 = por %p294, %p295
      %p297 = scmp.ne.s32.totalorder %s289, %s291
      %p298 = scmp.eq.s32.totalorder %s29, 1
      %p299 = por %p297, %p298
      %p300 = scmp.ne.s32.totalorder %s291, %s292
      %p301 = scmp.eq.s32.totalorder %s29, 0
      %p302 = por %p300, %p301
      %p303 = scmp.ne.s32.totalorder %s291, %s292
      %p304 = scmp.eq.s32.totalorder %s30, 1
      %p305 = por %p303, %p304
      %p307 = scmp.ne.s32.totalorder %s292, %s306
      %p308 = scmp.eq.s32.totalorder %s30, 0
      %p309 = por %p307, %p308
      %s311 = sadd.s32 %s310, 1
      %p314 = scmp.eq.s32.totalorder %s24, 1
      %p315 = scmp.ne.s32.totalorder %s310, %s312
      %p316 = scmp.eq.s32.totalorder %s24, 0
      %p317 = por %p315, %p316
      %p318 = scmp.ne.s32.totalorder %s310, %s312
      %p319 = scmp.eq.s32.totalorder %s29, 1
      %p320 = por %p318, %p319
      %p321 = scmp.ne.s32.totalorder %s312, %s313
      %p322 = scmp.eq.s32.totalorder %s29, 0
      %p323 = por %p321, %p322
      %p324 = scmp.ne.s32.totalorder %s312, %s313
      %p325 = scmp.eq.s32.totalorder %s30, 1
      %p326 = por %p324, %p325
      %p328 = scmp.ne.s32.totalorder %s313, %s327
      %p329 = scmp.eq.s32.totalorder %s30, 0
      %p330 = por %p328, %p329
      %s332 = sadd.s32 %s331, 1
      %p335 = scmp.eq.s32.totalorder %s24, 1
      %p336 = scmp.ne.s32.totalorder %s331, %s333
      %p337 = scmp.eq.s32.totalorder %s24, 0
      %p338 = por %p336, %p337
      %p339 = scmp.ne.s32.totalorder %s331, %s333
      %p340 = scmp.eq.s32.totalorder %s29, 1
      %p341 = por %p339, %p340
      %p342 = scmp.ne.s32.totalorder %s333, %s334
      %p343 = scmp.eq.s32.totalorder %s29, 0
      %p344 = por %p342, %p343
      %p345 = scmp.ne.s32.totalorder %s333, %s334
      %p346 = scmp.eq.s32.totalorder %s30, 1
      %p347 = por %p345, %p346
      %p349 = scmp.ne.s32.totalorder %s334, %s348
      %p350 = scmp.eq.s32.totalorder %s30, 0
      %p351 = por %p349, %p350
      %s352 = ssub.s32 %s24, %s31
      %p353 = scmp.eq.s32.totalorder %s352, 0
      %s355 = sadd.s32 %s354, 1
      %s356 = scalar_select %p353, %s354, %s355
      %p359 = pneg %p353
      %p360 = scmp.eq.s32.totalorder %s24, 1
      %p361 = por %p359, %p360
      %p362 = scmp.ne.s32.totalorder %s354, %s357
      %p363 = scmp.eq.s32.totalorder %s24, 0
      %p364 = por %p362, %p363
      %p365 = scmp.ne.s32.totalorder %s354, %s357
      %p366 = scmp.eq.s32.totalorder %s29, 1
      %p367 = por %p365, %p366
      %p368 = scmp.ne.s32.totalorder %s357, %s358
      %p369 = scmp.eq.s32.totalorder %s29, 0
      %p370 = por %p368, %p369
      %p371 = scmp.ne.s32.totalorder %s357, %s358
      %p372 = scmp.eq.s32.totalorder %s30, 1
      %p373 = por %p371, %p372
      %p375 = scmp.ne.s32.totalorder %s358, %s374
      %p376 = scmp.eq.s32.totalorder %s30, 0
      %p377 = por %p375, %p376
      %p378 = scmp.le.s32.totalorder 1, %s24
      %p379 = scmp.lt.s32.totalorder %s24, 3
      %p380 = pnand %p378, %p379
      %p381 = pneg %p380
      // Predicated region
      $region9: #{minigpt_forward.1} parent=5 // pred_check
        _
      $region10: #{minigpt_forward.1} parent=5 // pred_check_branch
        %383 = sbr.rel (%p380) target = $region12
      $region11: #{minigpt_forward.1} parent=5 // pred_region
        %s384 = ssub.s32 %s24, 1
        // Predicated region
        $region13: #{minigpt_forward.1} parent=11 // pred_check
          %p385 = pneg %p71
        $region14: #{minigpt_forward.1} parent=11 // pred_check_branch
          %387 = sbr.rel (%p385) target = $region16
        $region15: #{minigpt_forward.1} parent=11 // pred_region
          _
        $region16: #{minigpt_forward.1} parent=11 // pred_fallthru
          _
        // Predicated region
        $region17: #{minigpt_forward.1} parent=11 // pred_check
          %p388 = pneg %p92
        $region18: #{minigpt_forward.1} parent=11 // pred_check_branch
          %390 = sbr.rel (%p388) target = $region20
        $region19: #{minigpt_forward.1} parent=11 // pred_region
          _
        $region20: #{minigpt_forward.1} parent=11 // pred_fallthru
          _
        // Predicated region
        $region21: #{minigpt_forward.1} parent=11 // pred_check
          %p391 = pneg %p113
        $region22: #{minigpt_forward.1} parent=11 // pred_check_branch
          %393 = sbr.rel (%p391) target = $region24
        $region23: #{minigpt_forward.1} parent=11 // pred_region
          _
        $region24: #{minigpt_forward.1} parent=11 // pred_fallthru
          _
        // Predicated region
        $region25: #{minigpt_forward.1} parent=11 // pred_check
          %p394 = pneg %p134
        $region26: #{minigpt_forward.1} parent=11 // pred_check_branch
          %396 = sbr.rel (%p394) target = $region28
        $region27: #{minigpt_forward.1} parent=11 // pred_region
          _
        $region28: #{minigpt_forward.1} parent=11 // pred_fallthru
          _
        // Predicated region
        $region29: #{minigpt_forward.1} parent=11 // pred_check
          %p397 = pneg %p155
        $region30: #{minigpt_forward.1} parent=11 // pred_check_branch
          %399 = sbr.rel (%p397) target = $region32
        $region31: #{minigpt_forward.1} parent=11 // pred_region
          _
        $region32: #{minigpt_forward.1} parent=11 // pred_fallthru
          _
        // Predicated region
        $region33: #{minigpt_forward.1} parent=11 // pred_check
          %p400 = pneg %p176
        $region34: #{minigpt_forward.1} parent=11 // pred_check_branch
          %402 = sbr.rel (%p400) target = $region36
        $region35: #{minigpt_forward.1} parent=11 // pred_region
          _
        $region36: #{minigpt_forward.1} parent=11 // pred_fallthru
          _
        // Predicated region
        $region37: #{minigpt_forward.1} parent=11 // pred_check
          %p403 = pneg %p197
        $region38: #{minigpt_forward.1} parent=11 // pred_check_branch
          %405 = sbr.rel (%p403) target = $region40
        $region39: #{minigpt_forward.1} parent=11 // pred_region
          _
        $region40: #{minigpt_forward.1} parent=11 // pred_fallthru
          _
        // Predicated region
        $region41: #{minigpt_forward.1} parent=11 // pred_check
          %p406 = pneg %p218
        $region42: #{minigpt_forward.1} parent=11 // pred_check_branch
          %408 = sbr.rel (%p406) target = $region44
        $region43: #{minigpt_forward.1} parent=11 // pred_region
          _
        $region44: #{minigpt_forward.1} parent=11 // pred_fallthru
          _
        // Predicated region
        $region45: #{minigpt_forward.1} parent=11 // pred_check
          %p409 = pneg %p239
        $region46: #{minigpt_forward.1} parent=11 // pred_check_branch
          %411 = sbr.rel (%p409) target = $region48
        $region47: #{minigpt_forward.1} parent=11 // pred_region
          _
        $region48: #{minigpt_forward.1} parent=11 // pred_fallthru
          _
        // Predicated region
        $region49: #{minigpt_forward.1} parent=11 // pred_check
          %p412 = pneg %p260
        $region50: #{minigpt_forward.1} parent=11 // pred_check_branch
          %414 = sbr.rel (%p412) target = $region52
        $region51: #{minigpt_forward.1} parent=11 // pred_region
          _
        $region52: #{minigpt_forward.1} parent=11 // pred_fallthru
          _
        // Predicated region
        $region53: #{minigpt_forward.1} parent=11 // pred_check
          %p415 = pneg %p281
        $region54: #{minigpt_forward.1} parent=11 // pred_check_branch
          %417 = sbr.rel (%p415) target = $region56
        $region55: #{minigpt_forward.1} parent=11 // pred_region
          _
        $region56: #{minigpt_forward.1} parent=11 // pred_fallthru
          _
        // Predicated region
        $region57: #{minigpt_forward.1} parent=11 // pred_check
          %p418 = pneg %p302
        $region58: #{minigpt_forward.1} parent=11 // pred_check_branch
          %420 = sbr.rel (%p418) target = $region60
        $region59: #{minigpt_forward.1} parent=11 // pred_region
          _
        $region60: #{minigpt_forward.1} parent=11 // pred_fallthru
          _
        // Predicated region
        $region61: #{minigpt_forward.1} parent=11 // pred_check
          %p421 = pneg %p323
        $region62: #{minigpt_forward.1} parent=11 // pred_check_branch
          %423 = sbr.rel (%p421) target = $region64
        $region63: #{minigpt_forward.1} parent=11 // pred_region
          _
        $region64: #{minigpt_forward.1} parent=11 // pred_fallthru
          _
        // Predicated region
        $region65: #{minigpt_forward.1} parent=11 // pred_check
          %p424 = pneg %p344
        $region66: #{minigpt_forward.1} parent=11 // pred_check_branch
          %426 = sbr.rel (%p424) target = $region68
        $region67: #{minigpt_forward.1} parent=11 // pred_region
          _
        $region68: #{minigpt_forward.1} parent=11 // pred_fallthru
          _
      $region12: #{minigpt_forward.1} parent=5 // pred_fallthru
        _
      %p427 = scmp.lt.s32.totalorder %s24, 2
      // Predicated region
      $region69: #{minigpt_forward.1} parent=5 // pred_check
        %p428 = pneg %p427
      $region70: #{minigpt_forward.1} parent=5 // pred_check_branch
        %430 = sbr.rel (%p428) target = $region72
      $region71: #{minigpt_forward.1} parent=5 // pred_region
        // Predicated region
        $region73: #{minigpt_forward.1} parent=71 // pred_check
          %p431 = pneg %p44
        $region74: #{minigpt_forward.1} parent=71 // pred_check_branch
          %433 = sbr.rel (%p431) target = $region76
        $region75: #{minigpt_forward.1} parent=71 // pred_region
          %p434 = scmp.lt.s32.totalorder %s24, 1
          %s435 = scalar_select %p434, %s24, 1
          %s436 = smul.addr %s435, 8
          %s437 = scalar_lea.vmem %s0, %s436
        $region76: #{minigpt_forward.1} parent=71 // pred_fallthru
          _
      $region72: #{minigpt_forward.1} parent=5 // pred_fallthru
        _
      %p438 = scmp.le.s32.totalorder 1, %s24
      %p439 = scmp.lt.s32.totalorder %s24, 3
      %p440 = pnand %p438, %p439
      %p441 = pneg %p440
      // Predicated region
      $region77: #{minigpt_forward.1} parent=5 // pred_check
        _
      $region78: #{minigpt_forward.1} parent=5 // pred_check_branch
        %443 = sbr.rel (%p440) target = $region80
      $region79: #{minigpt_forward.1} parent=5 // pred_region
        %s444 = ssub.s32 %s24, 1
        %p445 = scmp.lt.s32.totalorder %s29, 1
        %s446 = scalar_select %p445, %s29, 1
        %s447 = smul.addr %s446, 8
        %s448 = scalar_lea.vmem %s0, %s447
        %p449 = pneg %p50
        %p450 = pneg %p47
        %p451 = pneg %p71
        %p452 = pneg %p68
        %p453 = pneg %p92
        %p454 = pneg %p89
        %p455 = pneg %p113
        %p456 = pneg %p110
        %p457 = pneg %p134
        %p458 = pneg %p131
        %p459 = pneg %p155
        %p460 = pneg %p152
        %p461 = pneg %p176
        %p462 = pneg %p173
        %p463 = pneg %p197
        %p464 = pneg %p194
        %p465 = pneg %p218
        %p466 = pneg %p215
        %p467 = pneg %p239
        %p468 = pneg %p236
        %p469 = pneg %p260
        %p470 = pneg %p257
        %p471 = pneg %p281
        %p472 = pneg %p278
        %p473 = pneg %p302
        %p474 = pneg %p299
        %p475 = pneg %p323
        %p476 = pneg %p320
        %p477 = pneg %p344
        %p478 = pneg %p341
        %p479 = pneg %p370
        %p480 = pneg %p367
        %s481 = sand.u32 %s357, 1
        %s482 = scalar_lea.sflag [#allocation3], %s481
        %s483 = sand.u32 %s357, 1
        %s484 = smul.addr %s483, 8
        %s485 = scalar_lea.vmem [#allocation2], %s484
        %p486 = scmp.lt.s32.totalorder %s29, 1
        %s487 = scalar_select %p486, %s29, 1
        %s488 = smul.addr %s487, 8
        %s489 = scalar_lea.vmem %s0, %s488
        %v490 = vld [vmem:[%s489] sm:$0xff]
        %v491 = vlaneseq
        %v492 = vand.u32 %v491, 127
        %493 = vset.pattern.permute.xlu0 0
        %494 = vperm.xlu0 %493, %v490
        %v495 = vpop.permute.xlu0 %494
        %vm496 = vcmp.eq.s32.totalorder %v495, %v492
        %v497 = vsel %vm496, 1, 0
        %v498 = vcvt.s32.f32 %v497
        %v499 = vld [vmem:[%s1] sm:$0xff]
        %v500 = vld [vmem:[%s1 + $0x8] sm:$0xff]
        %v501 = vld [vmem:[%s1 + $0x10] sm:$0xff]
        %v502 = vld [vmem:[%s1 + $0x18] sm:$0xff]
        %v503 = vld [vmem:[%s1 + $0x20] sm:$0xff]
        %v504 = vld [vmem:[%s1 + $0x28] sm:$0xff]
        %v505 = vld [vmem:[%s1 + $0x30] sm:$0xff]
        %v506 = vld [vmem:[%s1 + $0x38] sm:$0xff]
        %v507 = vld [vmem:[%s2] sm:$0xff]
        %vm508 = vcmask 523264
        %v510 = vsel %vm508, %v498, 0
        %512 = vmatprep.subr.mxu0 0.0
        %513 = vmatpush1.msra.mxu0 %v499
        %514 = vmatprep.subr.mxu0 0.0
        %515 = vmatpush1.msra.mxu0 %v500
        %516 = vmatprep.subr.mxu0 0.0
        %517 = vmatpush1.msra.mxu0 %v501
        %518 = vmatprep.subr.mxu0 0.0
        %519 = vmatpush1.msra.mxu0 %v502
        %520 = vmatprep.subr.mxu0 0.0
        %521 = vmatpush1.msra.mxu0 %v503
        %522 = vmatprep.subr.mxu0 0.0
        %523 = vmatpush1.msra.mxu0 %v504
        %524 = vmatprep.subr.mxu0 0.0
        %525 = vmatpush1.msra.mxu0 %v505
        %526 = vmatprep.subr.mxu0 0.0
        %527 = vmatpush1.msra.mxu0 %v506
        %528 = vmatprep.subr.mxu0 0.0
        %529 = vmatpush1.msra.mxu0 0.0
        %530 = vmatprep.subr.mxu0 0.0
        %531 = vmatpush1.msra.mxu0 0.0
        %532 = vmatprep.subr.mxu0 0.0
        %533 = vmatpush1.msra.mxu0 0.0
        %534 = vmatprep.subr.mxu0 0.0
        %535 = vmatpush1.msra.mxu0 0.0
        %536 = vmatprep.subr.mxu0 0.0
        %537 = vmatpush1.msra.mxu0 0.0
        %538 = vmatprep.subr.mxu0 0.0
        %539 = vmatpush1.msra.mxu0 0.0
        %540 = vmatprep.subr.mxu0 0.0
        %541 = vmatpush1.msra.mxu0 0.0
        %542 = vmatprep.subr.mxu0 0.0
        %543 = vmatpush1.msra.mxu0 0.0
        %544 = vmatprep.subr.mxu0 0.0
        %545 = vmatpush1.msra.mxu0 0.0
        %546 = vmatprep.subr.mxu0 0.0
        %547 = vmatpush1.msra.mxu0 0.0
        %548 = vmatprep.subr.mxu0 0.0
        %549 = vmatpush1.msra.mxu0 0.0
        %550 = vmatprep.subr.mxu0 0.0
        %551 = vmatpush1.msra.mxu0 0.0
        %552 = vmatprep.subr.mxu0 0.0
        %553 = vmatpush1.msra.mxu0 0.0
        %554 = vmatprep.subr.mxu0 0.0
        %555 = vmatpush1.msra.mxu0 0.0
        %556 = vmatprep.subr.mxu0 0.0
        %557 = vmatpush1.msra.mxu0 0.0
        %558 = vmatprep.subr.mxu0 0.0
        %559 = vmatpush1.msra.mxu0 0.0
        %560 = vmatprep.subr.mxu0 0.0
        %561 = vmatpush1.msra.mxu0 0.0
        %562 = vmatprep.subr.mxu0 0.0
        %563 = vmatpush1.msra.mxu0 0.0
        %564 = vmatprep.subr.mxu0 0.0
        %565 = vmatpush1.msra.mxu0 0.0
        %566 = vmatprep.subr.mxu0 0.0
        %567 = vmatpush1.msra.mxu0 0.0
        %568 = vmatprep.subr.mxu0 0.0
        %569 = vmatpush1.msra.mxu0 0.0
        %570 = vmatprep.subr.mxu0 0.0
        %571 = vmatpush1.msra.mxu0 0.0
        %572 = vmatprep.subr.mxu0 0.0
        %573 = vmatpush1.msra.mxu0 0.0
        %574 = vmatprep.subr.mxu0 0.0
        %575 = vmatpush1.msra.mxu0 0.0
        %576 = vmatprep.mubr.f32.mxu0 0.0
        %577 = vmatmul.mubr.f32.gmra.mrb[0].mxu0 %v510
        %v578 = vpop.f32.mrb[0].mxu0
        %v579 = vadd.f32 %v507, %v578
        %v580 = vpop.f32.mrb[0].mxu0
        %581 = vdwg.mxu0
        %v582 = vlaneseq
        %v583 = vshrl.u32 %v582, 7
        %vm584 = vcmp.ge.s32.totalorder %v583, %v492
        %v585 = vld [vmem:[%s3] sm:$0xf]
        %vm586 = vcmask 261120
        %v587 = vsel %vm586, %v579, 0.0
        %588 = vadd.xlane.f32.xlu0 %v587
        %v589 = vpop.xlane.xlu0 %588
        %v590 = vrcp.pop 32.0
        %v591 = vmul.f32 %v589, %v590
        %v592 = vsub.f32 %v579, %v591
        %v593 = vmul.f32 %v592, %v592
        %v594 = vsel %vm586, %v593, 0.0
        %595 = vadd.xlane.f32.xlu0 %v594
        %v596 = vpop.xlane.xlu0 %595
        %v597 = vmul.f32 %v596, %v590
        %v598 = vadd.f32 %v597, 1e-05
        %v599 = vrsqrt.pop %v598
        %v600 = vmul.f32 %v592, %v599
        %v601 = vlaneseq
        %v602 = vshrl.u32 %v601, 7
        %v603 = vsub.s32 0, %v602
        %v604 = vrot.slane %v585, %v603
        %v605 = vmul.f32 %v600, %v604
        %v606 = vlaneseq
        %v607 = vshrl.u32 %v606, 7
        %v608 = vsub.s32 1, %v607
        %v609 = vrot.slane %v585, %v608
        %v610 = vadd.f32 %v605, %v609
        %v611 = vld [vmem:[%s4] sm:$0xff]
        %v612 = vld [vmem:[%s4 + $0x8] sm:$0xff]
        %v613 = vld [vmem:[%s4 + $0x10] sm:$0xff]
        %v614 = vld [vmem:[%s4 + $0x18] sm:$0xff]
        %v615 = vld [vmem:[%s5] sm:$0x1]
        %v617 = vlaneseq
        %v618 = vshrl.u32 %v617, 7
        %v619 = vsub.s32 0, %v618
        %v620 = vrot.slane %v615, %v619
        %v623 = vsel %vm586, %v610, 0
        %625 = vmatprep.subr.mxu0 0.0
        %626 = vmatpush1.msra.mxu0 %v611
        %627 = vmatprep.subr.mxu0 0.0
        %628 = vmatpush1.msra.mxu0 %v612
        %629 = vmatprep.subr.mxu0 0.0
        %630 = vmatpush1.msra.mxu0 %v613
        %631 = vmatprep.subr.mxu0 0.0
        %632 = vmatpush1.msra.mxu0 %v614
        %633 = vmatprep.subr.mxu0 0.0
        %634 = vmatpush1.msra.mxu0 0.0
        %635 = vmatprep.subr.mxu0 0.0
        %636 = vmatpush1.msra.mxu0 0.0
        %637 = vmatprep.subr.mxu0 0.0
        %638 = vmatpush1.msra.mxu0 0.0
        %639 = vmatprep.subr.mxu0 0.0
        %640 = vmatpush1.msra.mxu0 0.0
        %641 = vmatprep.subr.mxu0 0.0
        %642 = vmatpush1.msra.mxu0 0.0
        %643 = vmatprep.subr.mxu0 0.0
        %644 = vmatpush1.msra.mxu0 0.0
        %645 = vmatprep.subr.mxu0 0.0
        %646 = vmatpush1.msra.mxu0 0.0
        %647 = vmatprep.subr.mxu0 0.0
        %648 = vmatpush1.msra.mxu0 0.0
        %649 = vmatprep.subr.mxu0 0.0
        %650 = vmatpush1.msra.mxu0 0.0
        %651 = vmatprep.subr.mxu0 0.0
        %652 = vmatpush1.msra.mxu0 0.0
        %653 = vmatprep.subr.mxu0 0.0
        %654 = vmatpush1.msra.mxu0 0.0
        %655 = vmatprep.subr.mxu0 0.0
        %656 = vmatpush1.msra.mxu0 0.0
        %657 = vmatprep.subr.mxu0 0.0
        %658 = vmatpush1.msra.mxu0 0.0
        %659 = vmatprep.subr.mxu0 0.0
        %660 = vmatpush1.msra.mxu0 0.0
        %661 = vmatprep.subr.mxu0 0.0
        %662 = vmatpush1.msra.mxu0 0.0
        %663 = vmatprep.subr.mxu0 0.0
        %664 = vmatpush1.msra.mxu0 0.0
        %665 = vmatprep.subr.mxu0 0.0
        %666 = vmatpush1.msra.mxu0 0.0
        %667 = vmatprep.subr.mxu0 0.0
        %668 = vmatpush1.msra.mxu0 0.0
        %669 = vmatprep.subr.mxu0 0.0
        %670 = vmatpush1.msra.mxu0 0.0
        %671 = vmatprep.subr.mxu0 0.0
        %672 = vmatpush1.msra.mxu0 0.0
        %673 = vmatprep.subr.mxu0 0.0
        %674 = vmatpush1.msra.mxu0 0.0
        %675 = vmatprep.subr.mxu0 0.0
        %676 = vmatpush1.msra.mxu0 0.0
        %677 = vmatprep.subr.mxu0 0.0
        %678 = vmatpush1.msra.mxu0 0.0
        %679 = vmatprep.subr.mxu0 0.0
        %680 = vmatpush1.msra.mxu0 0.0
        %681 = vmatprep.subr.mxu0 0.0
        %682 = vmatpush1.msra.mxu0 0.0
        %683 = vmatprep.subr.mxu0 0.0
        %684 = vmatpush1.msra.mxu0 0.0
        %685 = vmatprep.subr.mxu0 0.0
        %686 = vmatpush1.msra.mxu0 0.0
        %687 = vmatprep.subr.mxu0 0.0
        %688 = vmatpush1.msra.mxu0 0.0
        %689 = vmatprep.mubr.f32.mxu0 0.0
        %690 = vmatmul.mubr.f32.gmra.mrb[0].mxu0 %v623
        %v691 = vpop.f32.mrb[0].mxu0
        %v692 = vadd.f32 %v620, %v691
        %v693 = vpop.f32.mrb[0].mxu0
        %694 = vdwg.mxu0
        %696 = vrot.lane.b32.xlu0 %v692, 120
        %v697 = vpop.permute.xlu0 %696
        %698 = vrot.lane.b32.xlu0 %v692, 112
        %v699 = vpop.permute.xlu0 %698
        %700 = vrot.lane.b32.xlu0 %v692, 104
        %v701 = vpop.permute.xlu0 %700
        %702 = vrot.lane.b32.xlu0 %v692, 96
        %v703 = vpop.permute.xlu0 %702
        %vm704 = vcmask 64512
        %v705 = vsel %vm704, %v692, 0
        %v707 = vsel %vm704, %v703, 0
        %709 = vmatprep.subr.mxu0 0.0
        %710 = vmatpush1.xpose.msra.mxu0 %v707
        %711 = vmatprep.subr.mxu0 0.0
        %712 = vmatpush1.xpose.msra.mxu0 0.0
        %713 = vmatprep.subr.mxu0 0.0
        %714 = vmatpush1.xpose.msra.mxu0 0.0
        %715 = vmatprep.subr.mxu0 0.0
        %716 = vmatpush1.xpose.msra.mxu0 0.0
        %717 = vmatprep.subr.mxu0 0.0
        %718 = vmatpush1.xpose.msra.mxu0 0.0
        %719 = vmatprep.subr.mxu0 0.0
        %720 = vmatpush1.xpose.msra.mxu0 0.0
        %721 = vmatprep.subr.mxu0 0.0
        %722 = vmatpush1.xpose.msra.mxu0 0.0
        %723 = vmatprep.subr.mxu0 0.0
        %724 = vmatpush1.xpose.msra.mxu0 0.0
        %725 = vmatprep.subr.mxu0 0.0
        %726 = vmatpush1.xpose.msra.mxu0 0.0
        %727 = vmatprep.subr.mxu0 0.0
        %728 = vmatpush1.xpose.msra.mxu0 0.0
        %729 = vmatprep.subr.mxu0 0.0
        %730 = vmatpush1.xpose.msra.mxu0 0.0
        %731 = vmatprep.subr.mxu0 0.0
        %732 = vmatpush1.xpose.msra.mxu0 0.0
        %733 = vmatprep.subr.mxu0 0.0
        %734 = vmatpush1.xpose.msra.mxu0 0.0
        %735 = vmatprep.subr.mxu0 0.0
        %736 = vmatpush1.xpose.msra.mxu0 0.0
        %737 = vmatprep.subr.mxu0 0.0
        %738 = vmatpush1.xpose.msra.mxu0 0.0
        %739 = vmatprep.subr.mxu0 0.0
        %740 = vmatpush1.xpose.msra.mxu0 0.0
        %741 = vmatprep.subr.mxu0 0.0
        %742 = vmatpush1.xpose.msra.mxu0 0.0
        %743 = vmatprep.subr.mxu0 0.0
        %744 = vmatpush1.xpose.msra.mxu0 0.0
        %745 = vmatprep.subr.mxu0 0.0
        %746 = vmatpush1.xpose.msra.mxu0 0.0
        %747 = vmatprep.subr.mxu0 0.0
        %748 = vmatpush1.xpose.msra.mxu0 0.0
        %749 = vmatprep.subr.mxu0 0.0
        %750 = vmatpush1.xpose.msra.mxu0 0.0
        %751 = vmatprep.subr.mxu0 0.0
        %752 = vmatpush1.xpose.msra.mxu0 0.0
        %753 = vmatprep.subr.mxu0 0.0
        %754 = vmatpush1.xpose.msra.mxu0 0.0
        %755 = vmatprep.subr.mxu0 0.0
        %756 = vmatpush1.xpose.msra.mxu0 0.0
        %757 = vmatprep.subr.mxu0 0.0
        %758 = vmatpush1.xpose.msra.mxu0 0.0
        %759 = vmatprep.subr.mxu0 0.0
        %760 = vmatpush1.xpose.msra.mxu0 0.0
        %761 = vmatprep.subr.mxu0 0.0
        %762 = vmatpush1.xpose.msra.mxu0 0.0
        %763 = vmatprep.subr.mxu0 0.0
        %764 = vmatpush1.xpose.msra.mxu0 0.0
        %765 = vmatprep.subr.mxu0 0.0
        %766 = vmatpush1.xpose.msra.mxu0 0.0
        %767 = vmatprep.subr.mxu0 0.0
        %768 = vmatpush1.xpose.msra.mxu0 0.0
        %769 = vmatprep.subr.mxu0 0.0
        %770 = vmatpush1.xpose.msra.mxu0 0.0
        %771 = vmatprep.subr.mxu0 0.0
        %772 = vmatpush1.xpose.msra.mxu0 0.0
        %773 = vmatprep.mubr.f32.mxu0 0.0
        %774 = vmatmul.mubr.f32.gmra.mrb[0].mxu0 %v705
        %v775 = vpop.f32.mrb[0].mxu0
        %v776 = vadd.f32 0.0, %v775
        %v777 = vpop.f32.mrb[0].mxu0
        %778 = vdwg.mxu0
        %779 = vrot.lane.b32.xlu0 %v697, 96
        %v780 = vpop.permute.xlu0 %779
        %v781 = vsel %vm704, %v697, 0
        %v783 = vsel %vm704, %v780, 0
        %785 = vmatprep.subr.mxu0 0.0
        %786 = vmatpush1.xpose.msra.mxu0 %v783
        %787 = vmatprep.subr.mxu0 0.0
        %788 = vmatpush1.xpose.msra.mxu0 0.0
        %789 = vmatprep.subr.mxu0 0.0
        %790 = vmatpush1.xpose.msra.mxu0 0.0
        %791 = vmatprep.subr.mxu0 0.0
        %792 = vmatpush1.xpose.msra.mxu0 0.0
        %793 = vmatprep.subr.mxu0 0.0
        %794 = vmatpush1.xpose.msra.mxu0 0.0
        %795 = vmatprep.subr.mxu0 0.0
        %796 = vmatpush1.xpose.msra.mxu0 0.0
        %797 = vmatprep.subr.mxu0 0.0
        %798 = vmatpush1.xpose.msra.mxu0 0.0
        %799 = vmatprep.subr.mxu0 0.0
        %800 = vmatpush1.xpose.msra.mxu0 0.0
        %801 = vmatprep.subr.mxu0 0.0
        %802 = vmatpush1.xpose.msra.mxu0 0.0
        %803 = vmatprep.subr.mxu0 0.0
        %804 = vmatpush1.xpose.msra.mxu0 0.0
        %805 = vmatprep.subr.mxu0 0.0
        %806 = vmatpush1.xpose.msra.mxu0 0.0
        %807 = vmatprep.subr.mxu0 0.0
        %808 = vmatpush1.xpose.msra.mxu0 0.0
        %809 = vmatprep.subr.mxu0 0.0
        %810 = vmatpush1.xpose.msra.mxu0 0.0
        %811 = vmatprep.subr.mxu0 0.0
        %812 = vmatpush1.xpose.msra.mxu0 0.0
        %813 = vmatprep.subr.mxu0 0.0
        %814 = vmatpush1.xpose.msra.mxu0 0.0
        %815 = vmatprep.subr.mxu0 0.0
        %816 = vmatpush1.xpose.msra.mxu0 0.0
        %817 = vmatprep.subr.mxu0 0.0
        %818 = vmatpush1.xpose.msra.mxu0 0.0
        %819 = vmatprep.subr.mxu0 0.0
        %820 = vmatpush1.xpose.msra.mxu0 0.0
        %821 = vmatprep.subr.mxu0 0.0
        %822 = vmatpush1.xpose.msra.mxu0 0.0
        %823 = vmatprep.subr.mxu0 0.0
        %824 = vmatpush1.xpose.msra.mxu0 0.0
        %825 = vmatprep.subr.mxu0 0.0
        %826 = vmatpush1.xpose.msra.mxu0 0.0
        %827 = vmatprep.subr.mxu0 0.0
        %828 = vmatpush1.xpose.msra.mxu0 0.0
        %829 = vmatprep.subr.mxu0 0.0
        %830 = vmatpush1.xpose.msra.mxu0 0.0
        %831 = vmatprep.subr.mxu0 0.0
        %832 = vmatpush1.xpose.msra.mxu0 0.0
        %833 = vmatprep.subr.mxu0 0.0
        %834 = vmatpush1.xpose.msra.mxu0 0.0
        %835 = vmatprep.subr.mxu0 0.0
        %836 = vmatpush1.xpose.msra.mxu0 0.0
        %837 = vmatprep.subr.mxu0 0.0
        %838 = vmatpush1.xpose.msra.mxu0 0.0
        %839 = vmatprep.subr.mxu0 0.0
        %840 = vmatpush1.xpose.msra.mxu0 0.0
        %841 = vmatprep.subr.mxu0 0.0
        %842 = vmatpush1.xpose.msra.mxu0 0.0
        %843 = vmatprep.subr.mxu0 0.0
        %844 = vmatpush1.xpose.msra.mxu0 0.0
        %845 = vmatprep.subr.mxu0 0.0
        %846 = vmatpush1.xpose.msra.mxu0 0.0
        %847 = vmatprep.subr.mxu0 0.0
        %848 = vmatpush1.xpose.msra.mxu0 0.0
        %849 = vmatprep.mubr.f32.mxu0 0.0
        %850 = vmatmul.mubr.f32.gmra.mrb[0].mxu0 %v781
        %v851 = vpop.f32.mrb[0].mxu0
        %v852 = vadd.f32 0.0, %v851
        %v853 = vpop.f32.mrb[0].mxu0
        %854 = vdwg.mxu0
        %855 = vrot.lane.b32.xlu0 %v699, 96
        %v856 = vpop.permute.xlu0 %855
        %v857 = vsel %vm704, %v699, 0
        %v859 = vsel %vm704, %v856, 0
        %861 = vmatprep.subr.mxu0 0.0
        %862 = vmatpush1.xpose.msra.mxu0 %v859
        %863 = vmatprep.subr.mxu0 0.0
        %864 = vmatpush1.xpose.msra.mxu0 0.0
        %865 = vmatprep.subr.mxu0 0.0
        %866 = vmatpush1.xpose.msra.mxu0 0.0
        %867 = vmatprep.subr.mxu0 0.0
        %868 = vmatpush1.xpose.msra.mxu0 0.0
        %869 = vmatprep.subr.mxu0 0.0
        %870 = vmatpush1.xpose.msra.mxu0 0.0
        %871 = vmatprep.subr.mxu0 0.0
        %872 = vmatpush1.xpose.msra.mxu0 0.0
        %873 = vmatprep.subr.mxu0 0.0
        %874 = vmatpush1.xpose.msra.mxu0 0.0
        %875 = vmatprep.subr.mxu0 0.0
        %876 = vmatpush1.xpose.msra.mxu0 0.0
        %877 = vmatprep.subr.mxu0 0.0
        %878 = vmatpush1.xpose.msra.mxu0 0.0
        %879 = vmatprep.subr.mxu0 0.0
        %880 = vmatpush1.xpose.msra.mxu0 0.0
        %881 = vmatprep.subr.mxu0 0.0
        %882 = vmatpush1.xpose.msra.mxu0 0.0
        %883 = vmatprep.subr.mxu0 0.0
        %884 = vmatpush1.xpose.msra.mxu0 0.0
        %885 = vmatprep.subr.mxu0 0.0
        %886 = vmatpush1.xpose.msra.mxu0 0.0
        %887 = vmatprep.subr.mxu0 0.0
        %888 = vmatpush1.xpose.msra.mxu0 0.0
        %889 = vmatprep.subr.mxu0 0.0
        %890 = vmatpush1.xpose.msra.mxu0 0.0
        %891 = vmatprep.subr.mxu0 0.0
        %892 = vmatpush1.xpose.msra.mxu0 0.0
        %893 = vmatprep.subr.mxu0 0.0
        %894 = vmatpush1.xpose.msra.mxu0 0.0
        %895 = vmatprep.subr.mxu0 0.0
        %896 = vmatpush1.xpose.msra.mxu0 0.0
        %897 = vmatprep.subr.mxu0 0.0
        %898 = vmatpush1.xpose.msra.mxu0 0.0
        %899 = vmatprep.subr.mxu0 0.0
        %900 = vmatpush1.xpose.msra.mxu0 0.0
        %901 = vmatprep.subr.mxu0 0.0
        %902 = vmatpush1.xpose.msra.mxu0 0.0
        %903 = vmatprep.subr.mxu0 0.0
        %904 = vmatpush1.xpose.msra.mxu0 0.0
        %905 = vmatprep.subr.mxu0 0.0
        %906 = vmatpush1.xpose.msra.mxu0 0.0
        %907 = vmatprep.subr.mxu0 0.0
        %908 = vmatpush1.xpose.msra.mxu0 0.0
        %909 = vmatprep.subr.mxu0 0.0
        %910 = vmatpush1.xpose.msra.mxu0 0.0
        %911 = vmatprep.subr.mxu0 0.0
        %912 = vmatpush1.xpose.msra.mxu0 0.0
        %913 = vmatprep.subr.mxu0 0.0
        %914 = vmatpush1.xpose.msra.mxu0 0.0
        %915 = vmatprep.subr.mxu0 0.0
        %916 = vmatpush1.xpose.msra.mxu0 0.0
        %917 = vmatprep.subr.mxu0 0.0
        %918 = vmatpush1.xpose.msra.mxu0 0.0
        %919 = vmatprep.subr.mxu0 0.0
        %920 = vmatpush1.xpose.msra.mxu0 0.0
        %921 = vmatprep.subr.mxu0 0.0
        %922 = vmatpush1.xpose.msra.mxu0 0.0
        %923 = vmatprep.subr.mxu0 0.0
        %924 = vmatpush1.xpose.msra.mxu0 0.0
        %925 = vmatprep.mubr.f32.mxu0 0.0
        %926 = vmatmul.mubr.f32.gmra.mrb[0].mxu0 %v857
        %v927 = vpop.f32.mrb[0].mxu0
        %v928 = vadd.f32 0.0, %v927
        %v929 = vpop.f32.mrb[0].mxu0
        %930 = vdwg.mxu0
        %931 = vrot.lane.b32.xlu0 %v701, 96
        %v932 = vpop.permute.xlu0 %931
        %v933 = vsel %vm704, %v701, 0
        %v935 = vsel %vm704, %v932, 0
        %937 = vmatprep.subr.mxu0 0.0
        %938 = vmatpush1.xpose.msra.mxu0 %v935
        %939 = vmatprep.subr.mxu0 0.0
        %940 = vmatpush1.xpose.msra.mxu0 0.0
        %941 = vmatprep.subr.mxu0 0.0
        %942 = vmatpush1.xpose.msra.mxu0 0.0
        %943 = vmatprep.subr.mxu0 0.0
        %944 = vmatpush1.xpose.msra.mxu0 0.0
        %945 = vmatprep.subr.mxu0 0.0
        %946 = vmatpush1.xpose.msra.mxu0 0.0
        %947 = vmatprep.subr.mxu0 0.0
        %948 = vmatpush1.xpose.msra.mxu0 0.0
        %949 = vmatprep.subr.mxu0 0.0
        %950 = vmatpush1.xpose.msra.mxu0 0.0
        %951 = vmatprep.subr.mxu0 0.0
        %952 = vmatpush1.xpose.msra.mxu0 0.0
        %953 = vmatprep.subr.mxu0 0.0
        %954 = vmatpush1.xpose.msra.mxu0 0.0
        %955 = vmatprep.subr.mxu0 0.0
        %956 = vmatpush1.xpose.msra.mxu0 0.0
        %957 = vmatprep.subr.mxu0 0.0
        %958 = vmatpush1.xpose.msra.mxu0 0.0
        %959 = vmatprep.subr.mxu0 0.0
        %960 = vmatpush1.xpose.msra.mxu0 0.0
        %961 = vmatprep.subr.mxu0 0.0
        %962 = vmatpush1.xpose.msra.mxu0 0.0
        %963 = vmatprep.subr.mxu0 0.0
        %964 = vmatpush1.xpose.msra.mxu0 0.0
        %965 = vmatprep.subr.mxu0 0.0
        %966 = vmatpush1.xpose.msra.mxu0 0.0
        %967 = vmatprep.subr.mxu0 0.0
        %968 = vmatpush1.xpose.msra.mxu0 0.0
        %969 = vmatprep.subr.mxu0 0.0
        %970 = vmatpush1.xpose.msra.mxu0 0.0
        %971 = vmatprep.subr.mxu0 0.0
        %972 = vmatpush1.xpose.msra.mxu0 0.0
        %973 = vmatprep.subr.mxu0 0.0
        %974 = vmatpush1.xpose.msra.mxu0 0.0
        %975 = vmatprep.subr.mxu0 0.0
        %976 = vmatpush1.xpose.msra.mxu0 0.0
        %977 = vmatprep.subr.mxu0 0.0
        %978 = vmatpush1.xpose.msra.mxu0 0.0
        %979 = vmatprep.subr.mxu0 0.0
        %980 = vmatpush1.xpose.msra.mxu0 0.0
        %981 = vmatprep.subr.mxu0 0.0
        %982 = vmatpush1.xpose.msra.mxu0 0.0
        %983 = vmatprep.subr.mxu0 0.0
        %984 = vmatpush1.xpose.msra.mxu0 0.0
        %985 = vmatprep.subr.mxu0 0.0
        %986 = vmatpush1.xpose.msra.mxu0 0.0
        %987 = vmatprep.subr.mxu0 0.0
        %988 = vmatpush1.xpose.msra.mxu0 0.0
        %989 = vmatprep.subr.mxu0 0.0
        %990 = vmatpush1.xpose.msra.mxu0 0.0
        %991 = vmatprep.subr.mxu0 0.0
        %992 = vmatpush1.xpose.msra.mxu0 0.0
        %993 = vmatprep.subr.mxu0 0.0
        %994 = vmatpush1.xpose.msra.mxu0 0.0
        %995 = vmatprep.subr.mxu0 0.0
        %996 = vmatpush1.xpose.msra.mxu0 0.0
        %997 = vmatprep.subr.mxu0 0.0
        %998 = vmatpush1.xpose.msra.mxu0 0.0
        %999 = vmatprep.subr.mxu0 0.0
        %1000 = vmatpush1.xpose.msra.mxu0 0.0
        %1001 = vmatprep.mubr.f32.mxu0 0.0
        %1002 = vmatmul.mubr.f32.gmra.mrb[0].mxu0 %v933
        %v1003 = vpop.f32.mrb[0].mxu0
        %v1004 = vadd.f32 0.0, %v1003
        %v1005 = vpop.f32.mrb[0].mxu0
        %1006 = vdwg.mxu0
        %v1007 = vsel %vm584, 1, 0
        %vm1008 = vcmp.eq.s32.totalorder %v1007, 1
        %v1009 = vsel %vm1008, %v776, -1e+30
        %v1010 = vsel %vm1008, %v852, -1e+30
        %v1011 = vsel %vm1008, %v928, -1e+30
        %v1012 = vsel %vm1008, %v1004, -1e+30
        %v1013 = vsel %vm704, %v1009, -inf
        %1014 = vmax.xlane.f32.xlu0 %v1013
        %v1015 = vpop.xlane.xlu0 %1014
        %v1016 = vsel %vm704, %v1010, -inf
        %1017 = vmax.xlane.f32.xlu0 %v1016
        %v1018 = vpop.xlane.xlu0 %1017
        %v1019 = vsel %vm704, %v1011, -inf
        %1020 = vmax.xlane.f32.xlu0 %v1019
        %v1021 = vpop.xlane.xlu0 %1020
        %v1022 = vsel %vm704, %v1012, -inf
        %1023 = vmax.xlane.f32.xlu0 %v1022
        %v1024 = vpop.xlane.xlu0 %1023
        %v1025 = vsub.f32 %v1009, %v1015
        %v1026 = vsub.f32 %v1010, %v1018
        %v1027 = vsub.f32 %v1011, %v1021
        %v1028 = vsub.f32 %v1012, %v1024
        %v1029 = vmul.f32 %v1025, 1.442695
        %v1030 = vpow.pop %v1029
        %v1031 = vmul.f32 %v1026, 1.442695
        %v1032 = vpow.pop %v1031
        %v1033 = vmul.f32 %v1027, 1.442695
        %v1034 = vpow.pop %v1033
        %v1035 = vmul.f32 %v1028, 1.442695
        %v1036 = vpow.pop %v1035
        %v1037 = vsel %vm704, %v1030, 0.0
        %1038 = vadd.xlane.f32.xlu0 %v1037
        %v1039 = vpop.xlane.xlu0 %1038
        %v1040 = vsel %vm704, %v1032, 0.0
        %1041 = vadd.xlane.f32.xlu0 %v1040
        %v1042 = vpop.xlane.xlu0 %1041
        %v1043 = vsel %vm704, %v1034, 0.0
        %1044 = vadd.xlane.f32.xlu0 %v1043
        %v1045 = vpop.xlane.xlu0 %1044
        %v1046 = vsel %vm704, %v1036, 0.0
        %1047 = vadd.xlane.f32.xlu0 %v1046
        %v1048 = vpop.xlane.xlu0 %1047
        %v1049 = vrcp.pop %v1039
        %v1050 = vrcp.pop %v1042
        %v1051 = vrcp.pop %v1045
        %v1052 = vrcp.pop %v1048
        %v1053 = vmul.f32 %v1030, %v1049
        %v1054 = vmul.f32 %v1032, %v1050
        %v1055 = vmul.f32 %v1034, %v1051
        %v1056 = vmul.f32 %v1036, %v1052
        %1057 = vrot.lane.b32.xlu0 %v692, 64
        %v1058 = vpop.permute.xlu0 %1057
        %v1061 = vsel %vm704, %v1053, 0
        %1063 = vmatprep.subr.mxu0 0.0
        %1064 = vmatpush1.msra.mxu0 %v1058
        %1065 = vmatprep.subr.mxu0 0.0
        %1066 = vmatpush1.msra.mxu0 0.0
        %1067 = vmatprep.subr.mxu0 0.0
        %1068 = vmatpush1.msra.mxu0 0.0
        %1069 = vmatprep.subr.mxu0 0.0
        %1070 = vmatpush1.msra.mxu0 0.0
        %1071 = vmatprep.subr.mxu0 0.0
        %1072 = vmatpush1.msra.mxu0 0.0
        %1073 = vmatprep.subr.mxu0 0.0
        %1074 = vmatpush1.msra.mxu0 0.0
        %1075 = vmatprep.subr.mxu0 0.0
        %1076 = vmatpush1.msra.mxu0 0.0
        %1077 = vmatprep.subr.mxu0 0.0
        %1078 = vmatpush1.msra.mxu0 0.0
        %1079 = vmatprep.subr.mxu0 0.0
        %1080 = vmatpush1.msra.mxu0 0.0
        %1081 = vmatprep.subr.mxu0 0.0
        %1082 = vmatpush1.msra.mxu0 0.0
        %1083 = vmatprep.subr.mxu0 0.0
        %1084 = vmatpush1.msra.mxu0 0.0
        %1085 = vmatprep.subr.mxu0 0.0
        %1086 = vmatpush1.msra.mxu0 0.0
        %1087 = vmatprep.subr.mxu0 0.0
        %1088 = vmatpush1.msra.mxu0 0.0
        %1089 = vmatprep.subr.mxu0 0.0
        %1090 = vmatpush1.msra.mxu0 0.0
        %1091 = vmatprep.subr.mxu0 0.0
        %1092 = vmatpush1.msra.mxu0 0.0
        %1093 = vmatprep.subr.mxu0 0.0
        %1094 = vmatpush1.msra.mxu0 0.0
        %1095 = vmatprep.subr.mxu0 0.0
        %1096 = vmatpush1.msra.mxu0 0.0
        %1097 = vmatprep.subr.mxu0 0.0
        %1098 = vmatpush1.msra.mxu0 0.0
        %1099 = vmatprep.subr.mxu0 0.0
        %1100 = vmatpush1.msra.mxu0 0.0
        %1101 = vmatprep.subr.mxu0 0.0
        %1102 = vmatpush1.msra.mxu0 0.0
        %1103 = vmatprep.subr.mxu0 0.0
        %1104 = vmatpush1.msra.mxu0 0.0
        %1105 = vmatprep.subr.mxu0 0.0
        %1106 = vmatpush1.msra.mxu0 0.0
        %1107 = vmatprep.subr.mxu0 0.0
        %1108 = vmatpush1.msra.mxu0 0.0
        %1109 = vmatprep.subr.mxu0 0.0
        %1110 = vmatpush1.msra.mxu0 0.0
        %1111 = vmatprep.subr.mxu0 0.0
        %1112 = vmatpush1.msra.mxu0 0.0
        %1113 = vmatprep.subr.mxu0 0.0
        %1114 = vmatpush1.msra.mxu0 0.0
        %1115 = vmatprep.subr.mxu0 0.0
        %1116 = vmatpush1.msra.mxu0 0.0
        %1117 = vmatprep.subr.mxu0 0.0
        %1118 = vmatpush1.msra.mxu0 0.0
        %1119 = vmatprep.subr.mxu0 0.0
        %1120 = vmatpush1.msra.mxu0 0.0
        %1121 = vmatprep.subr.mxu0 0.0
        %1122 = vmatpush1.msra.mxu0 0.0
        %1123 = vmatprep.subr.mxu0 0.0
        %1124 = vmatpush1.msra.mxu0 0.0
        %1125 = vmatprep.subr.mxu0 0.0
        %1126 = vmatpush1.msra.mxu0 0.0
        %1127 = vmatprep.mubr.f32.mxu0 0.0
        %1128 = vmatmul.mubr.f32.gmra.mrb[0].mxu0 %v1061
        %v1129 = vpop.f32.mrb[0].mxu0
        %v1130 = vadd.f32 0.0, %v1129
        %v1131 = vpop.f32.mrb[0].mxu0
        %1132 = vdwg.mxu0
        %1133 = vrot.lane.b32.xlu0 %v697, 64
        %v1134 = vpop.permute.xlu0 %1133
        %v1137 = vsel %vm704, %v1054, 0
        %1139 = vmatprep.subr.mxu0 0.0
        %1140 = vmatpush1.msra.mxu0 %v1134
        %1141 = vmatprep.subr.mxu0 0.0
        %1142 = vmatpush1.msra.mxu0 0.0
        %1143 = vmatprep.subr.mxu0 0.0
        %1144 = vmatpush1.msra.mxu0 0.0
        %1145 = vmatprep.subr.mxu0 0.0
        %1146 = vmatpush1.msra.mxu0 0.0
        %1147 = vmatprep.subr.mxu0 0.0
        %1148 = vmatpush1.msra.mxu0 0.0
        %1149 = vmatprep.subr.mxu0 0.0
        %1150 = vmatpush1.msra.mxu0 0.0
        %1151 = vmatprep.subr.mxu0 0.0
        %1152 = vmatpush1.msra.mxu0 0.0
        %1153 = vmatprep.subr.mxu0 0.0
        %1154 = vmatpush1.msra.mxu0 0.0
        %1155 = vmatprep.subr.mxu0 0.0
        %1156 = vmatpush1.msra.mxu0 0.0
        %1157 = vmatprep.subr.mxu0 0.0
        %1158 = vmatpush1.msra.mxu0 0.0
        %1159 = vmatprep.subr.mxu0 0.0
        %1160 = vmatpush1.msra.mxu0 0.0
        %1161 = vmatprep.subr.mxu0 0.0
        %1162 = vmatpush1.msra.mxu0 0.0
        %1163 = vmatprep.subr.mxu0 0.0
        %1164 = vmatpush1.msra.mxu0 0.0
        %1165 = vmatprep.subr.mxu0 0.0
        %1166 = vmatpush1.msra.mxu0 0.0
        %1167 = vmatprep.subr.mxu0 0.0
        %1168 = vmatpush1.msra.mxu0 0.0
        %1169 = vmatprep.subr.mxu0 0.0
        %1170 = vmatpush1.msra.mxu0 0.0
        %1171 = vmatprep.subr.mxu0 0.0
        %1172 = vmatpush1.msra.mxu0 0.0
        %1173 = vmatprep.subr.mxu0 0.0
        %1174 = vmatpush1.msra.mxu0 0.0
        %1175 = vmatprep.subr.mxu0 0.0
        %1176 = vmatpush1.msra.mxu0 0.0
        %1177 = vmatprep.subr.mxu0 0.0
        %1178 = vmatpush1.msra.mxu0 0.0
        %1179 = vmatprep.subr.mxu0 0.0
        %1180 = vmatpush1.msra.mxu0 0.0
        %1181 = vmatprep.subr.mxu0 0.0
        %1182 = vmatpush1.msra.mxu0 0.0
        %1183 = vmatprep.subr.mxu0 0.0
        %1184 = vmatpush1.msra.mxu0 0.0
        %1185 = vmatprep.subr.mxu0 0.0
        %1186 = vmatpush1.msra.mxu0 0.0
        %1187 = vmatprep.subr.mxu0 0.0
        %1188 = vmatpush1.msra.mxu0 0.0
        %1189 = vmatprep.subr.mxu0 0.0
        %1190 = vmatpush1.msra.mxu0 0.0
        %1191 = vmatprep.subr.mxu0 0.0
        %1192 = vmatpush1.msra.mxu0 0.0
        %1193 = vmatprep.subr.mxu0 0.0
        %1194 = vmatpush1.msra.mxu0 0.0
        %1195 = vmatprep.subr.mxu0 0.0
        %1196 = vmatpush1.msra.mxu0 0.0
        %1197 = vmatprep.subr.mxu0 0.0
        %1198 = vmatpush1.msra.mxu0 0.0
        %1199 = vmatprep.subr.mxu0 0.0
        %1200 = vmatpush1.msra.mxu0 0.0
        %1201 = vmatprep.subr.mxu0 0.0
        %1202 = vmatpush1.msra.mxu0 0.0
        %1203 = vmatprep.mubr.f32.mxu0 0.0
        %1204 = vmatmul.mubr.f32.gmra.mrb[0].mxu0 %v1137
        %v1205 = vpop.f32.mrb[0].mxu0
        %v1206 = vadd.f32 0.0, %v1205
        %v1207 = vpop.f32.mrb[0].mxu0
        %1208 = vdwg.mxu0
        %1209 = vrot.lane.b32.xlu0 %v699, 64
        %v1210 = vpop.permute.xlu0 %1209
        %v1213 = vsel %vm704, %v1055, 0
        %1215 = vmatprep.subr.mxu0 0.0
        %1216 = vmatpush1.msra.mxu0 %v1210
        %1217 = vmatprep.subr.mxu0 0.0
        %1218 = vmatpush1.msra.mxu0 0.0
        %1219 = vmatprep.subr.mxu0 0.0
        %1220 = vmatpush1.msra.mxu0 0.0
        %1221 = vmatprep.subr.mxu0 0.0
        %1222 = vmatpush1.msra.mxu0 0.0
        %1223 = vmatprep.subr.mxu0 0.0
        %1224 = vmatpush1.msra.mxu0 0.0
        %1225 = vmatprep.subr.mxu0 0.0
        %1226 = vmatpush1.msra.mxu0 0.0
        %1227 = vmatprep.subr.mxu0 0.0
        %1228 = vmatpush1.msra.mxu0 0.0
        %1229 = vmatprep.subr.mxu0 0.0
        %1230 = vmatpush1.msra.mxu0 0.0
        %1231 = vmatprep.subr.mxu0 0.0
        %1232 = vmatpush1.msra.mxu0 0.0
        %1233 = vmatprep.subr.mxu0 0.0
        %1234 = vmatpush1.msra.mxu0 0.0
        %1235 = vmatprep.subr.mxu0 0.0
        %1236 = vmatpush1.msra.mxu0 0.0
        %1237 = vmatprep.subr.mxu0 0.0
        %1238 = vmatpush1.msra.mxu0 0.0
        %1239 = vmatprep.subr.mxu0 0.0
        %1240 = vmatpush1.msra.mxu0 0.0
        %1241 = vmatprep.subr.mxu0 0.0
        %1242 = vmatpush1.msra.mxu0 0.0
        %1243 = vmatprep.subr.mxu0 0.0
        %1244 = vmatpush1.msra.mxu0 0.0
        %1245 = vmatprep.subr.mxu0 0.0
        %1246 = vmatpush1.msra.mxu0 0.0
        %1247 = vmatprep.subr.mxu0 0.0
        %1248 = vmatpush1.msra.mxu0 0.0
        %1249 = vmatprep.subr.mxu0 0.0
        %1250 = vmatpush1.msra.mxu0 0.0
        %1251 = vmatprep.subr.mxu0 0.0
        %1252 = vmatpush1.msra.mxu0 0.0
        %1253 = vmatprep.subr.mxu0 0.0
        %1254 = vmatpush1.msra.mxu0 0.0
        %1255 = vmatprep.subr.mxu0 0.0
        %1256 = vmatpush1.msra.mxu0 0.0
        %1257 = vmatprep.subr.mxu0 0.0
        %1258 = vmatpush1.msra.mxu0 0.0
        %1259 = vmatprep.subr.mxu0 0.0
        %1260 = vmatpush1.msra.mxu0 0.0
        %1261 = vmatprep.subr.mxu0 0.0
        %1262 = vmatpush1.msra.mxu0 0.0
        %1263 = vmatprep.subr.mxu0 0.0
        %1264 = vmatpush1.msra.mxu0 0.0
        %1265 = vmatprep.subr.mxu0 0.0
        %1266 = vmatpush1.msra.mxu0 0.0
        %1267 = vmatprep.subr.mxu0 0.0
        %1268 = vmatpush1.msra.mxu0 0.0
        %1269 = vmatprep.subr.mxu0 0.0
        %1270 = vmatpush1.msra.mxu0 0.0
        %1271 = vmatprep.subr.mxu0 0.0
        %1272 = vmatpush1.msra.mxu0 0.0
        %1273 = vmatprep.subr.mxu0 0.0
        %1274 = vmatpush1.msra.mxu0 0.0
        %1275 = vmatprep.subr.mxu0 0.0
        %1276 = vmatpush1.msra.mxu0 0.0
        %1277 = vmatprep.subr.mxu0 0.0
        %1278 = vmatpush1.msra.mxu0 0.0
        %1279 = vmatprep.mubr.f32.mxu0 0.0
        %1280 = vmatmul.mubr.f32.gmra.mrb[0].mxu0 %v1213
        %v1281 = vpop.f32.mrb[0].mxu0
        %v1282 = vadd.f32 0.0, %v1281
        %v1283 = vpop.f32.mrb[0].mxu0
        %1284 = vdwg.mxu0
        %1285 = vrot.lane.b32.xlu0 %v701, 64
        %v1286 = vpop.permute.xlu0 %1285
        %v1289 = vsel %vm704, %v1056, 0
        %1291 = vmatprep.subr.mxu0 0.0
        %1292 = vmatpush1.msra.mxu0 %v1286
        %1293 = vmatprep.subr.mxu0 0.0
        %1294 = vmatpush1.msra.mxu0 0.0
        %1295 = vmatprep.subr.mxu0 0.0
        %1296 = vmatpush1.msra.mxu0 0.0
        %1297 = vmatprep.subr.mxu0 0.0
        %1298 = vmatpush1.msra.mxu0 0.0
        %1299 = vmatprep.subr.mxu0 0.0
        %1300 = vmatpush1.msra.mxu0 0.0
        %1301 = vmatprep.subr.mxu0 0.0
        %1302 = vmatpush1.msra.mxu0 0.0
        %1303 = vmatprep.subr.mxu0 0.0
        %1304 = vmatpush1.msra.mxu0 0.0
        %1305 = vmatprep.subr.mxu0 0.0
        %1306 = vmatpush1.msra.mxu0 0.0
        %1307 = vmatprep.subr.mxu0 0.0
        %1308 = vmatpush1.msra.mxu0 0.0
        %1309 = vmatprep.subr.mxu0 0.0
        %1310 = vmatpush1.msra.mxu0 0.0
        %1311 = vmatprep.subr.mxu0 0.0
        %1312 = vmatpush1.msra.mxu0 0.0
        %1313 = vmatprep.subr.mxu0 0.0
        %1314 = vmatpush1.msra.mxu0 0.0
        %1315 = vmatprep.subr.mxu0 0.0
        %1316 = vmatpush1.msra.mxu0 0.0
        %1317 = vmatprep.subr.mxu0 0.0
        %1318 = vmatpush1.msra.mxu0 0.0
        %1319 = vmatprep.subr.mxu0 0.0
        %1320 = vmatpush1.msra.mxu0 0.0
        %1321 = vmatprep.subr.mxu0 0.0
        %1322 = vmatpush1.msra.mxu0 0.0
        %1323 = vmatprep.subr.mxu0 0.0
        %1324 = vmatpush1.msra.mxu0 0.0
        %1325 = vmatprep.subr.mxu0 0.0
        %1326 = vmatpush1.msra.mxu0 0.0
        %1327 = vmatprep.subr.mxu0 0.0
        %1328 = vmatpush1.msra.mxu0 0.0
        %1329 = vmatprep.subr.mxu0 0.0
        %1330 = vmatpush1.msra.mxu0 0.0
        %1331 = vmatprep.subr.mxu0 0.0
        %1332 = vmatpush1.msra.mxu0 0.0
        %1333 = vmatprep.subr.mxu0 0.0
        %1334 = vmatpush1.msra.mxu0 0.0
        %1335 = vmatprep.subr.mxu0 0.0
        %1336 = vmatpush1.msra.mxu0 0.0
        %1337 = vmatprep.subr.mxu0 0.0
        %1338 = vmatpush1.msra.mxu0 0.0
        %1339 = vmatprep.subr.mxu0 0.0
        %1340 = vmatpush1.msra.mxu0 0.0
        %1341 = vmatprep.subr.mxu0 0.0
        %1342 = vmatpush1.msra.mxu0 0.0
        %1343 = vmatprep.subr.mxu0 0.0
        %1344 = vmatpush1.msra.mxu0 0.0
        %1345 = vmatprep.subr.mxu0 0.0
        %1346 = vmatpush1.msra.mxu0 0.0
        %1347 = vmatprep.subr.mxu0 0.0
        %1348 = vmatpush1.msra.mxu0 0.0
        %1349 = vmatprep.subr.mxu0 0.0
        %1350 = vmatpush1.msra.mxu0 0.0
        %1351 = vmatprep.subr.mxu0 0.0
        %1352 = vmatpush1.msra.mxu0 0.0
        %1353 = vmatprep.subr.mxu0 0.0
        %1354 = vmatpush1.msra.mxu0 0.0
        %1355 = vmatprep.mubr.f32.mxu0 0.0
        %1356 = vmatmul.mubr.f32.gmra.mrb[0].mxu0 %v1289
        %v1357 = vpop.f32.mrb[0].mxu0
        %v1358 = vadd.f32 0.0, %v1357
        %v1359 = vpop.f32.mrb[0].mxu0
        %1360 = vdwg.mxu0
        %1362 = vrot.lane.b32.xlu0 %v1206, 8
        %v1363 = vpop.permute.xlu0 %1362
        %1366 = vrot.lane.b32.xlu0 %v1282, 16
        %v1367 = vpop.permute.xlu0 %1366
        %1370 = vrot.lane.b32.xlu0 %v1358, 24
        %v1371 = vpop.permute.xlu0 %1370
        %v1373 = vsel %vm704, %v1130, %v1363
        %vm1374 = vcmask 130048
        %v1375 = vsel %vm1374, %v1373, %v1367
        %vm1376 = vcmask 195584
        %v1377 = vsel %vm1376, %v1375, %v1371
        %v1378 = vld [vmem:[%s6] sm:$0xff]
        %v1379 = vld [vmem:[%s6 + $0x8] sm:$0xff]
        %v1380 = vld [vmem:[%s6 + $0x10] sm:$0xff]
        %v1381 = vld [vmem:[%s6 + $0x18] sm:$0xff]
        %v1382 = vld [vmem:[%s7] sm:$0x1]
        %v1384 = vlaneseq
        %v1385 = vshrl.u32 %v1384, 7
        %v1386 = vsub.s32 0, %v1385
        %v1387 = vrot.slane %v1382, %v1386
        %v1390 = vsel %vm586, %v1377, 0
        %1392 = vmatprep.subr.mxu0 0.0
        %1393 = vmatpush1.msra.mxu0 %v1378
        %1394 = vmatprep.subr.mxu0 0.0
        %1395 = vmatpush1.msra.mxu0 %v1379
        %1396 = vmatprep.subr.mxu0 0.0
        %1397 = vmatpush1.msra.mxu0 %v1380
        %1398 = vmatprep.subr.mxu0 0.0
        %1399 = vmatpush1.msra.mxu0 %v1381
        %1400 = vmatprep.subr.mxu0 0.0
        %1401 = vmatpush1.msra.mxu0 0.0
        %1402 = vmatprep.subr.mxu0 0.0
        %1403 = vmatpush1.msra.mxu0 0.0
        %1404 = vmatprep.subr.mxu0 0.0
        %1405 = vmatpush1.msra.mxu0 0.0
        %1406 = vmatprep.subr.mxu0 0.0
        %1407 = vmatpush1.msra.mxu0 0.0
        %1408 = vmatprep.subr.mxu0 0.0
        %1409 = vmatpush1.msra.mxu0 0.0
        %1410 = vmatprep.subr.mxu0 0.0
        %1411 = vmatpush1.msra.mxu0 0.0
        %1412 = vmatprep.subr.mxu0 0.0
        %1413 = vmatpush1.msra.mxu0 0.0
        %1414 = vmatprep.subr.mxu0 0.0
        %1415 = vmatpush1.msra.mxu0 0.0
        %1416 = vmatprep.subr.mxu0 0.0
        %1417 = vmatpush1.msra.mxu0 0.0
        %1418 = vmatprep.subr.mxu0 0.0
        %1419 = vmatpush1.msra.mxu0 0.0
        %1420 = vmatprep.subr.mxu0 0.0
        %1421 = vmatpush1.msra.mxu0 0.0
        %1422 = vmatprep.subr.mxu0 0.0
        %1423 = vmatpush1.msra.mxu0 0.0
        %1424 = vmatprep.subr.mxu0 0.0
        %1425 = vmatpush1.msra.mxu0 0.0
        %1426 = vmatprep.subr.mxu0 0.0
        %1427 = vmatpush1.msra.mxu0 0.0
        %1428 = vmatprep.subr.mxu0 0.0
        %1429 = vmatpush1.msra.mxu0 0.0
        %1430 = vmatprep.subr.mxu0 0.0
        %1431 = vmatpush1.msra.mxu0 0.0
        %1432 = vmatprep.subr.mxu0 0.0
        %1433 = vmatpush1.msra.mxu0 0.0
        %1434 = vmatprep.subr.mxu0 0.0
        %1435 = vmatpush1.msra.mxu0 0.0
        %1436 = vmatprep.subr.mxu0 0.0
        %1437 = vmatpush1.msra.mxu0 0.0
        %1438 = vmatprep.subr.mxu0 0.0
        %1439 = vmatpush1.msra.mxu0 0.0
        %1440 = vmatprep.subr.mxu0 0.0
        %1441 = vmatpush1.msra.mxu0 0.0
        %1442 = vmatprep.subr.mxu0 0.0
        %1443 = vmatpush1.msra.mxu0 0.0
        %1444 = vmatprep.subr.mxu0 0.0
        %1445 = vmatpush1.msra.mxu0 0.0
        %1446 = vmatprep.subr.mxu0 0.0
        %1447 = vmatpush1.msra.mxu0 0.0
        %1448 = vmatprep.subr.mxu0 0.0
        %1449 = vmatpush1.msra.mxu0 0.0
        %1450 = vmatprep.subr.mxu0 0.0
        %1451 = vmatpush1.msra.mxu0 0.0
        %1452 = vmatprep.subr.mxu0 0.0
        %1453 = vmatpush1.msra.mxu0 0.0
        %1454 = vmatprep.subr.mxu0 0.0
        %1455 = vmatpush1.msra.mxu0 0.0
        %1456 = vmatprep.mubr.f32.mxu0 0.0
        %1457 = vmatmul.mubr.f32.gmra.mrb[0].mxu0 %v1390
        %v1458 = vpop.f32.mrb[0].mxu0
        %v1459 = vadd.f32 %v1387, %v1458
        %v1460 = vpop.f32.mrb[0].mxu0
        %1461 = vdwg.mxu0
        %v1462 = vadd.f32 %v579, %v1459
        %v1463 = vsel %vm586, %v1462, 0.0
        %1464 = vadd.xlane.f32.xlu0 %v1463
        %v1465 = vpop.xlane.xlu0 %1464
        %v1466 = vmul.f32 %v1465, %v590
        %v1467 = vsub.f32 %v1462, %v1466
        %v1468 = vmul.f32 %v1467, %v1467
        %v1469 = vsel %vm586, %v1468, 0.0
        %1470 = vadd.xlane.f32.xlu0 %v1469
        %v1471 = vpop.xlane.xlu0 %1470
        %v1472 = vmul.f32 %v1471, %v590
        %v1473 = vadd.f32 %v1472, 1e-05
        %v1474 = vrsqrt.pop %v1473
        %v1475 = vmul.f32 %v1467, %v1474
        %v1476 = vlaneseq
        %v1477 = vshrl.u32 %v1476, 7
        %v1478 = vsub.s32 2, %v1477
        %v1479 = vrot.slane %v585, %v1478
        %v1480 = vmul.f32 %v1475, %v1479
        %v1481 = vlaneseq
        %v1482 = vshrl.u32 %v1481, 7
        %v1483 = vsub.s32 3, %v1482
        %v1484 = vrot.slane %v585, %v1483
        %v1485 = vadd.f32 %v1480, %v1484
        %v1486 = vld [vmem:[%s8] sm:$0xff]
        %v1487 = vld [vmem:[%s8 + $0x8] sm:$0xff]
        %v1488 = vld [vmem:[%s8 + $0x10] sm:$0xff]
        %v1489 = vld [vmem:[%s8 + $0x18] sm:$0xff]
        %v1490 = vld [vmem:[%s9] sm:$0x1]
        %v1492 = vlaneseq
        %v1493 = vshrl.u32 %v1492, 7
        %v1494 = vsub.s32 0, %v1493
        %v1495 = vrot.slane %v1490, %v1494
        %v1498 = vsel %vm586, %v1485, 0
        %1500 = vmatprep.subr.mxu0 0.0
        %1501 = vmatpush1.msra.mxu0 %v1486
        %1502 = vmatprep.subr.mxu0 0.0
        %1503 = vmatpush1.msra.mxu0 %v1487
        %1504 = vmatprep.subr.mxu0 0.0
        %1505 = vmatpush1.msra.mxu0 %v1488
        %1506 = vmatprep.subr.mxu0 0.0
        %1507 = vmatpush1.msra.mxu0 %v1489
        %1508 = vmatprep.subr.mxu0 0.0
        %1509 = vmatpush1.msra.mxu0 0.0
        %1510 = vmatprep.subr.mxu0 0.0
        %1511 = vmatpush1.msra.mxu0 0.0
        %1512 = vmatprep.subr.mxu0 0.0
        %1513 = vmatpush1.msra.mxu0 0.0
        %1514 = vmatprep.subr.mxu0 0.0
        %1515 = vmatpush1.msra.mxu0 0.0
        %1516 = vmatprep.subr.mxu0 0.0
        %1517 = vmatpush1.msra.mxu0 0.0
        %1518 = vmatprep.subr.mxu0 0.0
        %1519 = vmatpush1.msra.mxu0 0.0
        %1520 = vmatprep.subr.mxu0 0.0
        %1521 = vmatpush1.msra.mxu0 0.0
        %1522 = vmatprep.subr.mxu0 0.0
        %1523 = vmatpush1.msra.mxu0 0.0
        %1524 = vmatprep.subr.mxu0 0.0
        %1525 = vmatpush1.msra.mxu0 0.0
        %1526 = vmatprep.subr.mxu0 0.0
        %1527 = vmatpush1.msra.mxu0 0.0
        %1528 = vmatprep.subr.mxu0 0.0
        %1529 = vmatpush1.msra.mxu0 0.0
        %1530 = vmatprep.subr.mxu0 0.0
        %1531 = vmatpush1.msra.mxu0 0.0
        %1532 = vmatprep.subr.mxu0 0.0
        %1533 = vmatpush1.msra.mxu0 0.0
        %1534 = vmatprep.subr.mxu0 0.0
        %1535 = vmatpush1.msra.mxu0 0.0
        %1536 = vmatprep.subr.mxu0 0.0
        %1537 = vmatpush1.msra.mxu0 0.0
        %1538 = vmatprep.subr.mxu0 0.0
        %1539 = vmatpush1.msra.mxu0 0.0
        %1540 = vmatprep.subr.mxu0 0.0
        %1541 = vmatpush1.msra.mxu0 0.0
        %1542 = vmatprep.subr.mxu0 0.0
        %1543 = vmatpush1.msra.mxu0 0.0
        %1544 = vmatprep.subr.mxu0 0.0
        %1545 = vmatpush1.msra.mxu0 0.0
        %1546 = vmatprep.subr.mxu0 0.0
        %1547 = vmatpush1.msra.mxu0 0.0
        %1548 = vmatprep.subr.mxu0 0.0
        %1549 = vmatpush1.msra.mxu0 0.0
        %1550 = vmatprep.subr.mxu0 0.0
        %1551 = vmatpush1.msra.mxu0 0.0
        %1552 = vmatprep.subr.mxu0 0.0
        %1553 = vmatpush1.msra.mxu0 0.0
        %1554 = vmatprep.subr.mxu0 0.0
        %1555 = vmatpush1.msra.mxu0 0.0
        %1556 = vmatprep.subr.mxu0 0.0
        %1557 = vmatpush1.msra.mxu0 0.0
        %1558 = vmatprep.subr.mxu0 0.0
        %1559 = vmatpush1.msra.mxu0 0.0
        %1560 = vmatprep.subr.mxu0 0.0
        %1561 = vmatpush1.msra.mxu0 0.0
        %1562 = vmatprep.subr.mxu0 0.0
        %1563 = vmatpush1.msra.mxu0 0.0
        %1564 = vmatprep.mubr.f32.mxu0 0.0
        %1565 = vmatmul.mubr.f32.gmra.mrb[0].mxu0 %v1498
        %v1566 = vpop.f32.mrb[0].mxu0
        %v1567 = vadd.f32 %v1495, %v1566
        %v1568 = vpop.f32.mrb[0].mxu0
        %1569 = vdwg.mxu0
        %v1570 = vmul.f32 %v1567, 0.5
        %v1571 = vrcp.pop 1.4142135
        %v1572 = vmul.f32 %v1567, %v1571
        %v1573 = verf.f32.pop %v1572
        %v1574 = vadd.f32 %v1573, 1.0
        %v1575 = vmul.f32 %v1570, %v1574
        %v1576 = vld [vmem:[%s10] sm:$0xff]
        %v1577 = vld [vmem:[%s10 + $0x8] sm:$0xff]
        %v1578 = vld [vmem:[%s10 + $0x10] sm:$0xff]
        %v1579 = vld [vmem:[%s10 + $0x18] sm:$0xff]
        %v1580 = vld [vmem:[%s10 + $0x20] sm:$0xff]
        %v1581 = vld [vmem:[%s10 + $0x28] sm:$0xff]
        %v1582 = vld [vmem:[%s10 + $0x30] sm:$0xff]
        %v1583 = vld [vmem:[%s10 + $0x38] sm:$0xff]
        %v1584 = vld [vmem:[%s10 + $0x40] sm:$0xff]
        %v1585 = vld [vmem:[%s10 + $0x48] sm:$0xff]
        %v1586 = vld [vmem:[%s10 + $0x50] sm:$0xff]
        %v1587 = vld [vmem:[%s10 + $0x58] sm:$0xff]
        %v1588 = vld [vmem:[%s10 + $0x60] sm:$0xff]
        %v1589 = vld [vmem:[%s10 + $0x68] sm:$0xff]
        %v1590 = vld [vmem:[%s10 + $0x70] sm:$0xff]
        %v1591 = vld [vmem:[%s10 + $0x78] sm:$0xff]
        %v1592 = vld [vmem:[%s11] sm:$0x1]
        %v1594 = vlaneseq
        %v1595 = vshrl.u32 %v1594, 7
        %v1596 = vsub.s32 0, %v1595
        %v1597 = vrot.slane %v1592, %v1596
        %1599 = vmatprep.subr.mxu0 0.0
        %1600 = vmatpush1.msra.mxu0 %v1576
        %1601 = vmatprep.subr.mxu0 0.0
        %1602 = vmatpush1.msra.mxu0 %v1577
        %1603 = vmatprep.subr.mxu0 0.0
        %1604 = vmatpush1.msra.mxu0 %v1578
        %1605 = vmatprep.subr.mxu0 0.0
        %1606 = vmatpush1.msra.mxu0 %v1579
        %1607 = vmatprep.subr.mxu0 0.0
        %1608 = vmatpush1.msra.mxu0 %v1580
        %1609 = vmatprep.subr.mxu0 0.0
        %1610 = vmatpush1.msra.mxu0 %v1581
        %1611 = vmatprep.subr.mxu0 0.0
        %1612 = vmatpush1.msra.mxu0 %v1582
        %1613 = vmatprep.subr.mxu0 0.0
        %1614 = vmatpush1.msra.mxu0 %v1583
        %1615 = vmatprep.subr.mxu0 0.0
        %1616 = vmatpush1.msra.mxu0 %v1584
        %1617 = vmatprep.subr.mxu0 0.0
        %1618 = vmatpush1.msra.mxu0 %v1585
        %1619 = vmatprep.subr.mxu0 0.0
        %1620 = vmatpush1.msra.mxu0 %v1586
        %1621 = vmatprep.subr.mxu0 0.0
        %1622 = vmatpush1.msra.mxu0 %v1587
        %1623 = vmatprep.subr.mxu0 0.0
        %1624 = vmatpush1.msra.mxu0 %v1588
        %1625 = vmatprep.subr.mxu0 0.0
        %1626 = vmatpush1.msra.mxu0 %v1589
        %1627 = vmatprep.subr.mxu0 0.0
        %1628 = vmatpush1.msra.mxu0 %v1590
        %1629 = vmatprep.subr.mxu0 0.0
        %1630 = vmatpush1.msra.mxu0 %v1591
        %1631 = vmatprep.subr.mxu0 0.0
        %1632 = vmatpush1.msra.mxu0 0.0
        %1633 = vmatprep.subr.mxu0 0.0
        %1634 = vmatpush1.msra.mxu0 0.0
        %1635 = vmatprep.subr.mxu0 0.0
        %1636 = vmatpush1.msra.mxu0 0.0
        %1637 = vmatprep.subr.mxu0 0.0
        %1638 = vmatpush1.msra.mxu0 0.0
        %1639 = vmatprep.subr.mxu0 0.0
        %1640 = vmatpush1.msra.mxu0 0.0
        %1641 = vmatprep.subr.mxu0 0.0
        %1642 = vmatpush1.msra.mxu0 0.0
        %1643 = vmatprep.subr.mxu0 0.0
        %1644 = vmatpush1.msra.mxu0 0.0
        %1645 = vmatprep.subr.mxu0 0.0
        %1646 = vmatpush1.msra.mxu0 0.0
        %1647 = vmatprep.subr.mxu0 0.0
        %1648 = vmatpush1.msra.mxu0 0.0
        %1649 = vmatprep.subr.mxu0 0.0
        %1650 = vmatpush1.msra.mxu0 0.0
        %1651 = vmatprep.subr.mxu0 0.0
        %1652 = vmatpush1.msra.mxu0 0.0
        %1653 = vmatprep.subr.mxu0 0.0
        %1654 = vmatpush1.msra.mxu0 0.0
        %1655 = vmatprep.subr.mxu0 0.0
        %1656 = vmatpush1.msra.mxu0 0.0
        %1657 = vmatprep.subr.mxu0 0.0
        %1658 = vmatpush1.msra.mxu0 0.0
        %1659 = vmatprep.subr.mxu0 0.0
        %1660 = vmatpush1.msra.mxu0 0.0
        %1661 = vmatprep.subr.mxu0 0.0
        %1662 = vmatpush1.msra.mxu0 0.0
        %1663 = vmatprep.mubr.f32.mxu0 0.0
        %1664 = vmatmul.mubr.f32.gmra.mrb[0].mxu0 %v1575
        %v1665 = vpop.f32.mrb[0].mxu0
        %v1666 = vadd.f32 %v1597, %v1665
        %v1667 = vpop.f32.mrb[0].mxu0
        %1668 = vdwg.mxu0
        %v1669 = vadd.f32 %v1462, %v1666
        %s1670 = scalar_lea.vmem %s3, 4
        %v1671 = vld [vmem:[%s1670] sm:$0xf]
        %v1672 = vsel %vm586, %v1669, 0.0
        %1673 = vadd.xlane.f32.xlu0 %v1672
        %v1674 = vpop.xlane.xlu0 %1673
        %v1675 = vmul.f32 %v1674, %v590
        %v1676 = vsub.f32 %v1669, %v1675
        %v1677 = vmul.f32 %v1676, %v1676
        %v1678 = vsel %vm586, %v1677, 0.0
        %1679 = vadd.xlane.f32.xlu0 %v1678
        %v1680 = vpop.xlane.xlu0 %1679
        %v1681 = vmul.f32 %v1680, %v590
        %v1682 = vadd.f32 %v1681, 1e-05
        %v1683 = vrsqrt.pop %v1682
        %v1684 = vmul.f32 %v1676, %v1683
        %v1685 = vlaneseq
        %v1686 = vshrl.u32 %v1685, 7
        %v1687 = vsub.s32 0, %v1686
        %v1688 = vrot.slane %v1671, %v1687
        %v1689 = vmul.f32 %v1684, %v1688
        %v1690 = vlaneseq
        %v1691 = vshrl.u32 %v1690, 7
        %v1692 = vsub.s32 1, %v1691
        %v1693 = vrot.slane %v1671, %v1692
        %v1694 = vadd.f32 %v1689, %v1693
        %s1695 = scalar_lea.vmem %s4, 32
        %v1696 = vld [vmem:[%s1695] sm:$0xff]
        %v1697 = vld [vmem:[%s1695 + $0x8] sm:$0xff]
        %v1698 = vld [vmem:[%s1695 + $0x10] sm:$0xff]
        %v1699 = vld [vmem:[%s1695 + $0x18] sm:$0xff]
        %s1700 = scalar_lea.vmem %s5, 1
        %v1701 = vld [vmem:[%s1700] sm:$0x1]
        %v1703 = vlaneseq
        %v1704 = vshrl.u32 %v1703, 7
        %v1705 = vsub.s32 0, %v1704
        %v1706 = vrot.slane %v1701, %v1705
        %v1709 = vsel %vm586, %v1694, 0
        %1711 = vmatprep.subr.mxu0 0.0
        %1712 = vmatpush1.msra.mxu0 %v1696
        %1713 = vmatprep.subr.mxu0 0.0
        %1714 = vmatpush1.msra.mxu0 %v1697
        %1715 = vmatprep.subr.mxu0 0.0
        %1716 = vmatpush1.msra.mxu0 %v1698
        %1717 = vmatprep.subr.mxu0 0.0
        %1718 = vmatpush1.msra.mxu0 %v1699
        %1719 = vmatprep.subr.mxu0 0.0
        %1720 = vmatpush1.msra.mxu0 0.0
        %1721 = vmatprep.subr.mxu0 0.0
        %1722 = vmatpush1.msra.mxu0 0.0
        %1723 = vmatprep.subr.mxu0 0.0
        %1724 = vmatpush1.msra.mxu0 0.0
        %1725 = vmatprep.subr.mxu0 0.0
        %1726 = vmatpush1.msra.mxu0 0.0
        %1727 = vmatprep.subr.mxu0 0.0
        %1728 = vmatpush1.msra.mxu0 0.0
        %1729 = vmatprep.subr.mxu0 0.0
        %1730 = vmatpush1.msra.mxu0 0.0
        %1731 = vmatprep.subr.mxu0 0.0
        %1732 = vmatpush1.msra.mxu0 0.0
        %1733 = vmatprep.subr.mxu0 0.0
        %1734 = vmatpush1.msra.mxu0 0.0
        %1735 = vmatprep.subr.mxu0 0.0
        %1736 = vmatpush1.msra.mxu0 0.0
        %1737 = vmatprep.subr.mxu0 0.0
        %1738 = vmatpush1.msra.mxu0 0.0
        %1739 = vmatprep.subr.mxu0 0.0
        %1740 = vmatpush1.msra.mxu0 0.0
        %1741 = vmatprep.subr.mxu0 0.0
        %1742 = vmatpush1.msra.mxu0 0.0
        %1743 = vmatprep.subr.mxu0 0.0
        %1744 = vmatpush1.msra.mxu0 0.0
        %1745 = vmatprep.subr.mxu0 0.0
        %1746 = vmatpush1.msra.mxu0 0.0
        %1747 = vmatprep.subr.mxu0 0.0
        %1748 = vmatpush1.msra.mxu0 0.0
        %1749 = vmatprep.subr.mxu0 0.0
        %1750 = vmatpush1.msra.mxu0 0.0
        %1751 = vmatprep.subr.mxu0 0.0
        %1752 = vmatpush1.msra.mxu0 0.0
        %1753 = vmatprep.subr.mxu0 0.0
        %1754 = vmatpush1.msra.mxu0 0.0
        %1755 = vmatprep.subr.mxu0 0.0
        %1756 = vmatpush1.msra.mxu0 0.0
        %1757 = vmatprep.subr.mxu0 0.0
        %1758 = vmatpush1.msra.mxu0 0.0
        %1759 = vmatprep.subr.mxu0 0.0
        %1760 = vmatpush1.msra.mxu0 0.0
        %1761 = vmatprep.subr.mxu0 0.0
        %1762 = vmatpush1.msra.mxu0 0.0
        %1763 = vmatprep.subr.mxu0 0.0
        %1764 = vmatpush1.msra.mxu0 0.0
        %1765 = vmatprep.subr.mxu0 0.0
        %1766 = vmatpush1.msra.mxu0 0.0
        %1767 = vmatprep.subr.mxu0 0.0
        %1768 = vmatpush1.msra.mxu0 0.0
        %1769 = vmatprep.subr.mxu0 0.0
        %1770 = vmatpush1.msra.mxu0 0.0
        %1771 = vmatprep.subr.mxu0 0.0
        %1772 = vmatpush1.msra.mxu0 0.0
        %1773 = vmatprep.subr.mxu0 0.0
        %1774 = vmatpush1.msra.mxu0 0.0
        %1775 = vmatprep.mubr.f32.mxu0 0.0
        %1776 = vmatmul.mubr.f32.gmra.mrb[0].mxu0 %v1709
        %v1777 = vpop.f32.mrb[0].mxu0
        %v1778 = vadd.f32 %v1706, %v1777
        %v1779 = vpop.f32.mrb[0].mxu0
        %1780 = vdwg.mxu0
        %1782 = vrot.lane.b32.xlu0 %v1778, 120
        %v1783 = vpop.permute.xlu0 %1782
        %1784 = vrot.lane.b32.xlu0 %v1778, 112
        %v1785 = vpop.permute.xlu0 %1784
        %1786 = vrot.lane.b32.xlu0 %v1778, 104
        %v1787 = vpop.permute.xlu0 %1786
        %1788 = vrot.lane.b32.xlu0 %v1778, 96
        %v1789 = vpop.permute.xlu0 %1788
        %v1790 = vsel %vm704, %v1778, 0
        %v1792 = vsel %vm704, %v1789, 0
        %1794 = vmatprep.subr.mxu0 0.0
        %1795 = vmatpush1.xpose.msra.mxu0 %v1792
        %1796 = vmatprep.subr.mxu0 0.0
        %1797 = vmatpush1.xpose.msra.mxu0 0.0
        %1798 = vmatprep.subr.mxu0 0.0
        %1799 = vmatpush1.xpose.msra.mxu0 0.0
        %1800 = vmatprep.subr.mxu0 0.0
        %1801 = vmatpush1.xpose.msra.mxu0 0.0
        %1802 = vmatprep.subr.mxu0 0.0
        %1803 = vmatpush1.xpose.msra.mxu0 0.0
        %1804 = vmatprep.subr.mxu0 0.0
        %1805 = vmatpush1.xpose.msra.mxu0 0.0
        %1806 = vmatprep.subr.mxu0 0.0
        %1807 = vmatpush1.xpose.msra.mxu0 0.0
        %1808 = vmatprep.subr.mxu0 0.0
        %1809 = vmatpush1.xpose.msra.mxu0 0.0
        %1810 = vmatprep.subr.mxu0 0.0
        %1811 = vmatpush1.xpose.msra.mxu0 0.0
        %1812 = vmatprep.subr.mxu0 0.0
        %1813 = vmatpush1.xpose.msra.mxu0 0.0
        %1814 = vmatprep.subr.mxu0 0.0
        %1815 = vmatpush1.xpose.msra.mxu0 0.0
        %1816 = vmatprep.subr.mxu0 0.0
        %1817 = vmatpush1.xpose.msra.mxu0 0.0
        %1818 = vmatprep.subr.mxu0 0.0
        %1819 = vmatpush1.xpose.msra.mxu0 0.0
        %1820 = vmatprep.subr.mxu0 0.0
        %1821 = vmatpush1.xpose.msra.mxu0 0.0
        %1822 = vmatprep.subr.mxu0 0.0
        %1823 = vmatpush1.xpose.msra.mxu0 0.0
        %1824 = vmatprep.subr.mxu0 0.0
        %1825 = vmatpush1.xpose.msra.mxu0 0.0
        %1826 = vmatprep.subr.mxu0 0.0
        %1827 = vmatpush1.xpose.msra.mxu0 0.0
        %1828 = vmatprep.subr.mxu0 0.0
        %1829 = vmatpush1.xpose.msra.mxu0 0.0
        %1830 = vmatprep.subr.mxu0 0.0
        %1831 = vmatpush1.xpose.msra.mxu0 0.0
        %1832 = vmatprep.subr.mxu0 0.0
        %1833 = vmatpush1.xpose.msra.mxu0 0.0
        %1834 = vmatprep.subr.mxu0 0.0
        %1835 = vmatpush1.xpose.msra.mxu0 0.0
        %1836 = vmatprep.subr.mxu0 0.0
        %1837 = vmatpush1.xpose.msra.mxu0 0.0
        %1838 = vmatprep.subr.mxu0 0.0
        %1839 = vmatpush1.xpose.msra.mxu0 0.0
        %1840 = vmatprep.subr.mxu0 0.0
        %1841 = vmatpush1.xpose.msra.mxu0 0.0
        %1842 = vmatprep.subr.mxu0 0.0
        %1843 = vmatpush1.xpose.msra.mxu0 0.0
        %1844 = vmatprep.subr.mxu0 0.0
        %1845 = vmatpush1.xpose.msra.mxu0 0.0
        %1846 = vmatprep.subr.mxu0 0.0
        %1847 = vmatpush1.xpose.msra.mxu0 0.0
        %1848 = vmatprep.subr.mxu0 0.0
        %1849 = vmatpush1.xpose.msra.mxu0 0.0
        %1850 = vmatprep.subr.mxu0 0.0
        %1851 = vmatpush1.xpose.msra.mxu0 0.0
        %1852 = vmatprep.subr.mxu0 0.0
        %1853 = vmatpush1.xpose.msra.mxu0 0.0
        %1854 = vmatprep.subr.mxu0 0.0
        %1855 = vmatpush1.xpose.msra.mxu0 0.0
        %1856 = vmatprep.subr.mxu0 0.0
        %1857 = vmatpush1.xpose.msra.mxu0 0.0
        %1858 = vmatprep.mubr.f32.mxu0 0.0
        %1859 = vmatmul.mubr.f32.gmra.mrb[0].mxu0 %v1790
        %v1860 = vpop.f32.mrb[0].mxu0
        %v1861 = vadd.f32 0.0, %v1860
        %v1862 = vpop.f32.mrb[0].mxu0
        %1863 = vdwg.mxu0
        %1864 = vrot.lane.b32.xlu0 %v1783, 96
        %v1865 = vpop.permute.xlu0 %1864
        %v1866 = vsel %vm704, %v1783, 0
        %v1868 = vsel %vm704, %v1865, 0
        %1870 = vmatprep.subr.mxu0 0.0
        %1871 = vmatpush1.xpose.msra.mxu0 %v1868
        %1872 = vmatprep.subr.mxu0 0.0
        %1873 = vmatpush1.xpose.msra.mxu0 0.0
        %1874 = vmatprep.subr.mxu0 0.0
        %1875 = vmatpush1.xpose.msra.mxu0 0.0
        %1876 = vmatprep.subr.mxu0 0.0
        %1877 = vmatpush1.xpose.msra.mxu0 0.0
        %1878 = vmatprep.subr.mxu0 0.0
        %1879 = vmatpush1.xpose.msra.mxu0 0.0
        %1880 = vmatprep.subr.mxu0 0.0
        %1881 = vmatpush1.xpose.msra.mxu0 0.0
        %1882 = vmatprep.subr.mxu0 0.0
        %1883 = vmatpush1.xpose.msra.mxu0 0.0
        %1884 = vmatprep.subr.mxu0 0.0
        %1885 = vmatpush1.xpose.msra.mxu0 0.0
        %1886 = vmatprep.subr.mxu0 0.0
        %1887 = vmatpush1.xpose.msra.mxu0 0.0
        %1888 = vmatprep.subr.mxu0 0.0
        %1889 = vmatpush1.xpose.msra.mxu0 0.0
        %1890 = vmatprep.subr.mxu0 0.0
        %1891 = vmatpush1.xpose.msra.mxu0 0.0
        %1892 = vmatprep.subr.mxu0 0.0
        %1893 = vmatpush1.xpose.msra.mxu0 0.0
        %1894 = vmatprep.subr.mxu0 0.0
        %1895 = vmatpush1.xpose.msra.mxu0 0.0
        %1896 = vmatprep.subr.mxu0 0.0
        %1897 = vmatpush1.xpose.msra.mxu0 0.0
        %1898 = vmatprep.subr.mxu0 0.0
        %1899 = vmatpush1.xpose.msra.mxu0 0.0
        %1900 = vmatprep.subr.mxu0 0.0
        %1901 = vmatpush1.xpose.msra.mxu0 0.0
        %1902 = vmatprep.subr.mxu0 0.0
        %1903 = vmatpush1.xpose.msra.mxu0 0.0
        %1904 = vmatprep.subr.mxu0 0.0
        %1905 = vmatpush1.xpose.msra.mxu0 0.0
        %1906 = vmatprep.subr.mxu0 0.0
        %1907 = vmatpush1.xpose.msra.mxu0 0.0
        %1908 = vmatprep.subr.mxu0 0.0
        %1909 = vmatpush1.xpose.msra.mxu0 0.0
        %1910 = vmatprep.subr.mxu0 0.0
        %1911 = vmatpush1.xpose.msra.mxu0 0.0
        %1912 = vmatprep.subr.mxu0 0.0
        %1913 = vmatpush1.xpose.msra.mxu0 0.0
        %1914 = vmatprep.subr.mxu0 0.0
        %1915 = vmatpush1.xpose.msra.mxu0 0.0
        %1916 = vmatprep.subr.mxu0 0.0
        %1917 = vmatpush1.xpose.msra.mxu0 0.0
        %1918 = vmatprep.subr.mxu0 0.0
        %1919 = vmatpush1.xpose.msra.mxu0 0.0
        %1920 = vmatprep.subr.mxu0 0.0
        %1921 = vmatpush1.xpose.msra.mxu0 0.0
        %1922 = vmatprep.subr.mxu0 0.0
        %1923 = vmatpush1.xpose.msra.mxu0 0.0
        %1924 = vmatprep.subr.mxu0 0.0
        %1925 = vmatpush1.xpose.msra.mxu0 0.0
        %1926 = vmatprep.subr.mxu0 0.0
        %1927 = vmatpush1.xpose.msra.mxu0 0.0
        %1928 = vmatprep.subr.mxu0 0.0
        %1929 = vmatpush1.xpose.msra.mxu0 0.0
        %1930 = vmatprep.subr.mxu0 0.0
        %1931 = vmatpush1.xpose.msra.mxu0 0.0
        %1932 = vmatprep.subr.mxu0 0.0
        %1933 = vmatpush1.xpose.msra.mxu0 0.0
        %1934 = vmatprep.mubr.f32.mxu0 0.0
        %1935 = vmatmul.mubr.f32.gmra.mrb[0].mxu0 %v1866
        %v1936 = vpop.f32.mrb[0].mxu0
        %v1937 = vadd.f32 0.0, %v1936
        %v1938 = vpop.f32.mrb[0].mxu0
        %1939 = vdwg.mxu0
        %1940 = vrot.lane.b32.xlu0 %v1785, 96
        %v1941 = vpop.permute.xlu0 %1940
        %v1942 = vsel %vm704, %v1785, 0
        %v1944 = vsel %vm704, %v1941, 0
        %1946 = vmatprep.subr.mxu0 0.0
        %1947 = vmatpush1.xpose.msra.mxu0 %v1944
        %1948 = vmatprep.subr.mxu0 0.0
        %1949 = vmatpush1.xpose.msra.mxu0 0.0
        %1950 = vmatprep.subr.mxu0 0.0
        %1951 = vmatpush1.xpose.msra.mxu0 0.0
        %1952 = vmatprep.subr.mxu0 0.0
        %1953 = vmatpush1.xpose.msra.mxu0 0.0
        %1954 = vmatprep.subr.mxu0 0.0
        %1955 = vmatpush1.xpose.msra.mxu0 0.0
        %1956 = vmatprep.subr.mxu0 0.0
        %1957 = vmatpush1.xpose.msra.mxu0 0.0
        %1958 = vmatprep.subr.mxu0 0.0
        %1959 = vmatpush1.xpose.msra.mxu0 0.0
        %1960 = vmatprep.subr.mxu0 0.0
        %1961 = vmatpush1.xpose.msra.mxu0 0.0
        %1962 = vmatprep.subr.mxu0 0.0
        %1963 = vmatpush1.xpose.msra.mxu0 0.0
        %1964 = vmatprep.subr.mxu0 0.0
        %1965 = vmatpush1.xpose.msra.mxu0 0.0
        %1966 = vmatprep.subr.mxu0 0.0
        %1967 = vmatpush1.xpose.msra.mxu0 0.0
        %1968 = vmatprep.subr.mxu0 0.0
        %1969 = vmatpush1.xpose.msra.mxu0 0.0
        %1970 = vmatprep.subr.mxu0 0.0
        %1971 = vmatpush1.xpose.msra.mxu0 0.0
        %1972 = vmatprep.subr.mxu0 0.0
        %1973 = vmatpush1.xpose.msra.mxu0 0.0
        %1974 = vmatprep.subr.mxu0 0.0
        %1975 = vmatpush1.xpose.msra.mxu0 0.0
        %1976 = vmatprep.subr.mxu0 0.0
        %1977 = vmatpush1.xpose.msra.mxu0 0.0
        %1978 = vmatprep.subr.mxu0 0.0
        %1979 = vmatpush1.xpose.msra.mxu0 0.0
        %1980 = vmatprep.subr.mxu0 0.0
        %1981 = vmatpush1.xpose.msra.mxu0 0.0
        %1982 = vmatprep.subr.mxu0 0.0
        %1983 = vmatpush1.xpose.msra.mxu0 0.0
        %1984 = vmatprep.subr.mxu0 0.0
        %1985 = vmatpush1.xpose.msra.mxu0 0.0
        %1986 = vmatprep.subr.mxu0 0.0
        %1987 = vmatpush1.xpose.msra.mxu0 0.0
        %1988 = vmatprep.subr.mxu0 0.0
        %1989 = vmatpush1.xpose.msra.mxu0 0.0
        %1990 = vmatprep.subr.mxu0 0.0
        %1991 = vmatpush1.xpose.msra.mxu0 0.0
        %1992 = vmatprep.subr.mxu0 0.0
        %1993 = vmatpush1.xpose.msra.mxu0 0.0
        %1994 = vmatprep.subr.mxu0 0.0
        %1995 = vmatpush1.xpose.msra.mxu0 0.0
        %1996 = vmatprep.subr.mxu0 0.0
        %1997 = vmatpush1.xpose.msra.mxu0 0.0
        %1998 = vmatprep.subr.mxu0 0.0
        %1999 = vmatpush1.xpose.msra.mxu0 0.0
        %2000 = vmatprep.subr.mxu0 0.0
        %2001 = vmatpush1.xpose.msra.mxu0 0.0
        %2002 = vmatprep.subr.mxu0 0.0
        %2003 = vmatpush1.xpose.msra.mxu0 0.0
        %2004 = vmatprep.subr.mxu0 0.0
        %2005 = vmatpush1.xpose.msra.mxu0 0.0
        %2006 = vmatprep.subr.mxu0 0.0
        %2007 = vmatpush1.xpose.msra.mxu0 0.0
        %2008 = vmatprep.subr.mxu0 0.0
        %2009 = vmatpush1.xpose.msra.mxu0 0.0
        %2010 = vmatprep.mubr.f32.mxu0 0.0
        %2011 = vmatmul.mubr.f32.gmra.mrb[0].mxu0 %v1942
        %v2012 = vpop.f32.mrb[0].mxu0
        %v2013 = vadd.f32 0.0, %v2012
        %v2014 = vpop.f32.mrb[0].mxu0
        %2015 = vdwg.mxu0
        %2016 = vrot.lane.b32.xlu0 %v1787, 96
        %v2017 = vpop.permute.xlu0 %2016
        %v2018 = vsel %vm704, %v1787, 0
        %v2020 = vsel %vm704, %v2017, 0
        %2022 = vmatprep.subr.mxu0 0.0
        %2023 = vmatpush1.xpose.msra.mxu0 %v2020
        %2024 = vmatprep.subr.mxu0 0.0
        %2025 = vmatpush1.xpose.msra.mxu0 0.0
        %2026 = vmatprep.subr.mxu0 0.0
        %2027 = vmatpush1.xpose.msra.mxu0 0.0
        %2028 = vmatprep.subr.mxu0 0.0
        %2029 = vmatpush1.xpose.msra.mxu0 0.0
        %2030 = vmatprep.subr.mxu0 0.0
        %2031 = vmatpush1.xpose.msra.mxu0 0.0
        %2032 = vmatprep.subr.mxu0 0.0
        %2033 = vmatpush1.xpose.msra.mxu0 0.0
        %2034 = vmatprep.subr.mxu0 0.0
        %2035 = vmatpush1.xpose.msra.mxu0 0.0
        %2036 = vmatprep.subr.mxu0 0.0
        %2037 = vmatpush1.xpose.msra.mxu0 0.0
        %2038 = vmatprep.subr.mxu0 0.0
        %2039 = vmatpush1.xpose.msra.mxu0 0.0
        %2040 = vmatprep.subr.mxu0 0.0
        %2041 = vmatpush1.xpose.msra.mxu0 0.0
        %2042 = vmatprep.subr.mxu0 0.0
        %2043 = vmatpush1.xpose.msra.mxu0 0.0
        %2044 = vmatprep.subr.mxu0 0.0
        %2045 = vmatpush1.xpose.msra.mxu0 0.0
        %2046 = vmatprep.subr.mxu0 0.0
        %2047 = vmatpush1.xpose.msra.mxu0 0.0
        %2048 = vmatprep.subr.mxu0 0.0
        %2049 = vmatpush1.xpose.msra.mxu0 0.0
        %2050 = vmatprep.subr.mxu0 0.0
        %2051 = vmatpush1.xpose.msra.mxu0 0.0
        %2052 = vmatprep.subr.mxu0 0.0
        %2053 = vmatpush1.xpose.msra.mxu0 0.0
        %2054 = vmatprep.subr.mxu0 0.0
        %2055 = vmatpush1.xpose.msra.mxu0 0.0
        %2056 = vmatprep.subr.mxu0 0.0
        %2057 = vmatpush1.xpose.msra.mxu0 0.0
        %2058 = vmatprep.subr.mxu0 0.0
        %2059 = vmatpush1.xpose.msra.mxu0 0.0
        %2060 = vmatprep.subr.mxu0 0.0
        %2061 = vmatpush1.xpose.msra.mxu0 0.0
        %2062 = vmatprep.subr.mxu0 0.0
        %2063 = vmatpush1.xpose.msra.mxu0 0.0
        %2064 = vmatprep.subr.mxu0 0.0
        %2065 = vmatpush1.xpose.msra.mxu0 0.0
        %2066 = vmatprep.subr.mxu0 0.0
        %2067 = vmatpush1.xpose.msra.mxu0 0.0
        %2068 = vmatprep.subr.mxu0 0.0
        %2069 = vmatpush1.xpose.msra.mxu0 0.0
        %2070 = vmatprep.subr.mxu0 0.0
        %2071 = vmatpush1.xpose.msra.mxu0 0.0
        %2072 = vmatprep.subr.mxu0 0.0
        %2073 = vmatpush1.xpose.msra.mxu0 0.0
        %2074 = vmatprep.subr.mxu0 0.0
        %2075 = vmatpush1.xpose.msra.mxu0 0.0
        %2076 = vmatprep.subr.mxu0 0.0
        %2077 = vmatpush1.xpose.msra.mxu0 0.0
        %2078 = vmatprep.subr.mxu0 0.0
        %2079 = vmatpush1.xpose.msra.mxu0 0.0
        %2080 = vmatprep.subr.mxu0 0.0
        %2081 = vmatpush1.xpose.msra.mxu0 0.0
        %2082 = vmatprep.subr.mxu0 0.0
        %2083 = vmatpush1.xpose.msra.mxu0 0.0
        %2084 = vmatprep.subr.mxu0 0.0
        %2085 = vmatpush1.xpose.msra.mxu0 0.0
        %2086 = vmatprep.mubr.f32.mxu0 0.0
        %2087 = vmatmul.mubr.f32.gmra.mrb[0].mxu0 %v2018
        %v2088 = vpop.f32.mrb[0].mxu0
        %v2089 = vadd.f32 0.0, %v2088
        %v2090 = vpop.f32.mrb[0].mxu0
        %2091 = vdwg.mxu0
        %v2092 = vsel %vm1008, %v1861, -1e+30
        %v2093 = vsel %vm1008, %v1937, -1e+30
        %v2094 = vsel %vm1008, %v2013, -1e+30
        %v2095 = vsel %vm1008, %v2089, -1e+30
        %v2096 = vsel %vm704, %v2092, -inf
        %2097 = vmax.xlane.f32.xlu0 %v2096
        %v2098 = vpop.xlane.xlu0 %2097
        %v2099 = vsel %vm704, %v2093, -inf
        %2100 = vmax.xlane.f32.xlu0 %v2099
        %v2101 = vpop.xlane.xlu0 %2100
        %v2102 = vsel %vm704, %v2094, -inf
        %2103 = vmax.xlane.f32.xlu0 %v2102
        %v2104 = vpop.xlane.xlu0 %2103
        %v2105 = vsel %vm704, %v2095, -inf
        %2106 = vmax.xlane.f32.xlu0 %v2105
        %v2107 = vpop.xlane.xlu0 %2106
        %v2108 = vsub.f32 %v2092, %v2098
        %v2109 = vsub.f32 %v2093, %v2101
        %v2110 = vsub.f32 %v2094, %v2104
        %v2111 = vsub.f32 %v2095, %v2107
        %v2112 = vmul.f32 %v2108, 1.442695
        %v2113 = vpow.pop %v2112
        %v2114 = vmul.f32 %v2109, 1.442695
        %v2115 = vpow.pop %v2114
        %v2116 = vmul.f32 %v2110, 1.442695
        %v2117 = vpow.pop %v2116
        %v2118 = vmul.f32 %v2111, 1.442695
        %v2119 = vpow.pop %v2118
        %v2120 = vsel %vm704, %v2113, 0.0
        %2121 = vadd.xlane.f32.xlu0 %v2120
        %v2122 = vpop.xlane.xlu0 %2121
        %v2123 = vsel %vm704, %v2115, 0.0
        %2124 = vadd.xlane.f32.xlu0 %v2123
        %v2125 = vpop.xlane.xlu0 %2124
        %v2126 = vsel %vm704, %v2117, 0.0
        %2127 = vadd.xlane.f32.xlu0 %v2126
        %v2128 = vpop.xlane.xlu0 %2127
        %v2129 = vsel %vm704, %v2119, 0.0
        %2130 = vadd.xlane.f32.xlu0 %v2129
        %v2131 = vpop.xlane.xlu0 %2130
        %v2132 = vrcp.pop %v2122
        %v2133 = vrcp.pop %v2125
        %v2134 = vrcp.pop %v2128
        %v2135 = vrcp.pop %v2131
        %v2136 = vmul.f32 %v2113, %v2132
        %v2137 = vmul.f32 %v2115, %v2133
        %v2138 = vmul.f32 %v2117, %v2134
        %v2139 = vmul.f32 %v2119, %v2135
        %2140 = vrot.lane.b32.xlu0 %v1778, 64
        %v2141 = vpop.permute.xlu0 %2140
        %v2144 = vsel %vm704, %v2136, 0
        %2146 = vmatprep.subr.mxu0 0.0
        %2147 = vmatpush1.msra.mxu0 %v2141
        %2148 = vmatprep.subr.mxu0 0.0
        %2149 = vmatpush1.msra.mxu0 0.0
        %2150 = vmatprep.subr.mxu0 0.0
        %2151 = vmatpush1.msra.mxu0 0.0
        %2152 = vmatprep.subr.mxu0 0.0
        %2153 = vmatpush1.msra.mxu0 0.0
        %2154 = vmatprep.subr.mxu0 0.0
        %2155 = vmatpush1.msra.mxu0 0.0
        %2156 = vmatprep.subr.mxu0 0.0
        %2157 = vmatpush1.msra.mxu0 0.0
        %2158 = vmatprep.subr.mxu0 0.0
        %2159 = vmatpush1.msra.mxu0 0.0
        %2160 = vmatprep.subr.mxu0 0.0
        %2161 = vmatpush1.msra.mxu0 0.0
        %2162 = vmatprep.subr.mxu0 0.0
        %2163 = vmatpush1.msra.mxu0 0.0
        %2164 = vmatprep.subr.mxu0 0.0
        %2165 = vmatpush1.msra.mxu0 0.0
        %2166 = vmatprep.subr.mxu0 0.0
        %2167 = vmatpush1.msra.mxu0 0.0
        %2168 = vmatprep.subr.mxu0 0.0
        %2169 = vmatpush1.msra.mxu0 0.0
        %2170 = vmatprep.subr.mxu0 0.0
        %2171 = vmatpush1.msra.mxu0 0.0
        %2172 = vmatprep.subr.mxu0 0.0
        %2173 = vmatpush1.msra.mxu0 0.0
        %2174 = vmatprep.subr.mxu0 0.0
        %2175 = vmatpush1.msra.mxu0 0.0
        %2176 = vmatprep.subr.mxu0 0.0
        %2177 = vmatpush1.msra.mxu0 0.0
        %2178 = vmatprep.subr.mxu0 0.0
        %2179 = vmatpush1.msra.mxu0 0.0
        %2180 = vmatprep.subr.mxu0 0.0
        %2181 = vmatpush1.msra.mxu0 0.0
        %2182 = vmatprep.subr.mxu0 0.0
        %2183 = vmatpush1.msra.mxu0 0.0
        %2184 = vmatprep.subr.mxu0 0.0
        %2185 = vmatpush1.msra.mxu0 0.0
        %2186 = vmatprep.subr.mxu0 0.0
        %2187 = vmatpush1.msra.mxu0 0.0
        %2188 = vmatprep.subr.mxu0 0.0
        %2189 = vmatpush1.msra.mxu0 0.0
        %2190 = vmatprep.subr.mxu0 0.0
        %2191 = vmatpush1.msra.mxu0 0.0
        %2192 = vmatprep.subr.mxu0 0.0
        %2193 = vmatpush1.msra.mxu0 0.0
        %2194 = vmatprep.subr.mxu0 0.0
        %2195 = vmatpush1.msra.mxu0 0.0
        %2196 = vmatprep.subr.mxu0 0.0
        %2197 = vmatpush1.msra.mxu0 0.0
        %2198 = vmatprep.subr.mxu0 0.0
        %2199 = vmatpush1.msra.mxu0 0.0
        %2200 = vmatprep.subr.mxu0 0.0
        %2201 = vmatpush1.msra.mxu0 0.0
        %2202 = vmatprep.subr.mxu0 0.0
        %2203 = vmatpush1.msra.mxu0 0.0
        %2204 = vmatprep.subr.mxu0 0.0
        %2205 = vmatpush1.msra.mxu0 0.0
        %2206 = vmatprep.subr.mxu0 0.0
        %2207 = vmatpush1.msra.mxu0 0.0
        %2208 = vmatprep.subr.mxu0 0.0
        %2209 = vmatpush1.msra.mxu0 0.0
        %2210 = vmatprep.mubr.f32.mxu0 0.0
        %2211 = vmatmul.mubr.f32.gmra.mrb[0].mxu0 %v2144
        %v2212 = vpop.f32.mrb[0].mxu0
        %v2213 = vadd.f32 0.0, %v2212
        %v2214 = vpop.f32.mrb[0].mxu0
        %2215 = vdwg.mxu0
        %2216 = vrot.lane.b32.xlu0 %v1783, 64
        %v2217 = vpop.permute.xlu0 %2216
        %v2220 = vsel %vm704, %v2137, 0
        %2222 = vmatprep.subr.mxu0 0.0
        %2223 = vmatpush1.msra.mxu0 %v2217
        %2224 = vmatprep.subr.mxu0 0.0
        %2225 = vmatpush1.msra.mxu0 0.0
        %2226 = vmatprep.subr.mxu0 0.0
        %2227 = vmatpush1.msra.mxu0 0.0
        %2228 = vmatprep.subr.mxu0 0.0
        %2229 = vmatpush1.msra.mxu0 0.0
        %2230 = vmatprep.subr.mxu0 0.0
        %2231 = vmatpush1.msra.mxu0 0.0
        %2232 = vmatprep.subr.mxu0 0.0
        %2233 = vmatpush1.msra.mxu0 0.0
        %2234 = vmatprep.subr.mxu0 0.0
        %2235 = vmatpush1.msra.mxu0 0.0
        %2236 = vmatprep.subr.mxu0 0.0
        %2237 = vmatpush1.msra.mxu0 0.0
        %2238 = vmatprep.subr.mxu0 0.0
        %2239 = vmatpush1.msra.mxu0 0.0
        %2240 = vmatprep.subr.mxu0 0.0
        %2241 = vmatpush1.msra.mxu0 0.0
        %2242 = vmatprep.subr.mxu0 0.0
        %2243 = vmatpush1.msra.mxu0 0.0
        %2244 = vmatprep.subr.mxu0 0.0
        %2245 = vmatpush1.msra.mxu0 0.0
        %2246 = vmatprep.subr.mxu0 0.0
        %2247 = vmatpush1.msra.mxu0 0.0
        %2248 = vmatprep.subr.mxu0 0.0
        %2249 = vmatpush1.msra.mxu0 0.0
        %2250 = vmatprep.subr.mxu0 0.0
        %2251 = vmatpush1.msra.mxu0 0.0
        %2252 = vmatprep.subr.mxu0 0.0
        %2253 = vmatpush1.msra.mxu0 0.0
        %2254 = vmatprep.subr.mxu0 0.0
        %2255 = vmatpush1.msra.mxu0 0.0
        %2256 = vmatprep.subr.mxu0 0.0
        %2257 = vmatpush1.msra.mxu0 0.0
        %2258 = vmatprep.subr.mxu0 0.0
        %2259 = vmatpush1.msra.mxu0 0.0
        %2260 = vmatprep.subr.mxu0 0.0
        %2261 = vmatpush1.msra.mxu0 0.0
        %2262 = vmatprep.subr.mxu0 0.0
        %2263 = vmatpush1.msra.mxu0 0.0
        %2264 = vmatprep.subr.mxu0 0.0
        %2265 = vmatpush1.msra.mxu0 0.0
        %2266 = vmatprep.subr.mxu0 0.0
        %2267 = vmatpush1.msra.mxu0 0.0
        %2268 = vmatprep.subr.mxu0 0.0
        %2269 = vmatpush1.msra.mxu0 0.0
        %2270 = vmatprep.subr.mxu0 0.0
        %2271 = vmatpush1.msra.mxu0 0.0
        %2272 = vmatprep.subr.mxu0 0.0
        %2273 = vmatpush1.msra.mxu0 0.0
        %2274 = vmatprep.subr.mxu0 0.0
        %2275 = vmatpush1.msra.mxu0 0.0
        %2276 = vmatprep.subr.mxu0 0.0
        %2277 = vmatpush1.msra.mxu0 0.0
        %2278 = vmatprep.subr.mxu0 0.0
        %2279 = vmatpush1.msra.mxu0 0.0
        %2280 = vmatprep.subr.mxu0 0.0
        %2281 = vmatpush1.msra.mxu0 0.0
        %2282 = vmatprep.subr.mxu0 0.0
        %2283 = vmatpush1.msra.mxu0 0.0
        %2284 = vmatprep.subr.mxu0 0.0
        %2285 = vmatpush1.msra.mxu0 0.0
        %2286 = vmatprep.mubr.f32.mxu0 0.0
        %2287 = vmatmul.mubr.f32.gmra.mrb[0].mxu0 %v2220
        %v2288 = vpop.f32.mrb[0].mxu0
        %v2289 = vadd.f32 0.0, %v2288
        %v2290 = vpop.f32.mrb[0].mxu0
        %2291 = vdwg.mxu0
        %2292 = vrot.lane.b32.xlu0 %v1785, 64
        %v2293 = vpop.permute.xlu0 %2292
        %v2296 = vsel %vm704, %v2138, 0
        %2298 = vmatprep.subr.mxu0 0.0
        %2299 = vmatpush1.msra.mxu0 %v2293
        %2300 = vmatprep.subr.mxu0 0.0
        %2301 = vmatpush1.msra.mxu0 0.0
        %2302 = vmatprep.subr.mxu0 0.0
        %2303 = vmatpush1.msra.mxu0 0.0
        %2304 = vmatprep.subr.mxu0 0.0
        %2305 = vmatpush1.msra.mxu0 0.0
        %2306 = vmatprep.subr.mxu0 0.0
        %2307 = vmatpush1.msra.mxu0 0.0
        %2308 = vmatprep.subr.mxu0 0.0
        %2309 = vmatpush1.msra.mxu0 0.0
        %2310 = vmatprep.subr.mxu0 0.0
        %2311 = vmatpush1.msra.mxu0 0.0
        %2312 = vmatprep.subr.mxu0 0.0
        %2313 = vmatpush1.msra.mxu0 0.0
        %2314 = vmatprep.subr.mxu0 0.0
        %2315 = vmatpush1.msra.mxu0 0.0
        %2316 = vmatprep.subr.mxu0 0.0
        %2317 = vmatpush1.msra.mxu0 0.0
        %2318 = vmatprep.subr.mxu0 0.0
        %2319 = vmatpush1.msra.mxu0 0.0
        %2320 = vmatprep.subr.mxu0 0.0
        %2321 = vmatpush1.msra.mxu0 0.0
        %2322 = vmatprep.subr.mxu0 0.0
        %2323 = vmatpush1.msra.mxu0 0.0
        %2324 = vmatprep.subr.mxu0 0.0
        %2325 = vmatpush1.msra.mxu0 0.0
        %2326 = vmatprep.subr.mxu0 0.0
        %2327 = vmatpush1.msra.mxu0 0.0
        %2328 = vmatprep.subr.mxu0 0.0
        %2329 = vmatpush1.msra.mxu0 0.0
        %2330 = vmatprep.subr.mxu0 0.0
        %2331 = vmatpush1.msra.mxu0 0.0
        %2332 = vmatprep.subr.mxu0 0.0
        %2333 = vmatpush1.msra.mxu0 0.0
        %2334 = vmatprep.subr.mxu0 0.0
        %2335 = vmatpush1.msra.mxu0 0.0
        %2336 = vmatprep.subr.mxu0 0.0
        %2337 = vmatpush1.msra.mxu0 0.0
        %2338 = vmatprep.subr.mxu0 0.0
        %2339 = vmatpush1.msra.mxu0 0.0
        %2340 = vmatprep.subr.mxu0 0.0
        %2341 = vmatpush1.msra.mxu0 0.0
        %2342 = vmatprep.subr.mxu0 0.0
        %2343 = vmatpush1.msra.mxu0 0.0
        %2344 = vmatprep.subr.mxu0 0.0
        %2345 = vmatpush1.msra.mxu0 0.0
        %2346 = vmatprep.subr.mxu0 0.0
        %2347 = vmatpush1.msra.mxu0 0.0
        %2348 = vmatprep.subr.mxu0 0.0
        %2349 = vmatpush1.msra.mxu0 0.0
        %2350 = vmatprep.subr.mxu0 0.0
        %2351 = vmatpush1.msra.mxu0 0.0
        %2352 = vmatprep.subr.mxu0 0.0
        %2353 = vmatpush1.msra.mxu0 0.0
        %2354 = vmatprep.subr.mxu0 0.0
        %2355 = vmatpush1.msra.mxu0 0.0
        %2356 = vmatprep.subr.mxu0 0.0
        %2357 = vmatpush1.msra.mxu0 0.0
        %2358 = vmatprep.subr.mxu0 0.0
        %2359 = vmatpush1.msra.mxu0 0.0
        %2360 = vmatprep.subr.mxu0 0.0
        %2361 = vmatpush1.msra.mxu0 0.0
        %2362 = vmatprep.mubr.f32.mxu0 0.0
        %2363 = vmatmul.mubr.f32.gmra.mrb[0].mxu0 %v2296
        %v2364 = vpop.f32.mrb[0].mxu0
        %v2365 = vadd.f32 0.0, %v2364
        %v2366 = vpop.f32.mrb[0].mxu0
        %2367 = vdwg.mxu0
        %2368 = vrot.lane.b32.xlu0 %v1787, 64
        %v2369 = vpop.permute.xlu0 %2368
        %v2372 = vsel %vm704, %v2139, 0
        %2374 = vmatprep.subr.mxu0 0.0
        %2375 = vmatpush1.msra.mxu0 %v2369
        %2376 = vmatprep.subr.mxu0 0.0
        %2377 = vmatpush1.msra.mxu0 0.0
        %2378 = vmatprep.subr.mxu0 0.0
        %2379 = vmatpush1.msra.mxu0 0.0
        %2380 = vmatprep.subr.mxu0 0.0
        %2381 = vmatpush1.msra.mxu0 0.0
        %2382 = vmatprep.subr.mxu0 0.0
        %2383 = vmatpush1.msra.mxu0 0.0
        %2384 = vmatprep.subr.mxu0 0.0
        %2385 = vmatpush1.msra.mxu0 0.0
        %2386 = vmatprep.subr.mxu0 0.0
        %2387 = vmatpush1.msra.mxu0 0.0
        %2388 = vmatprep.subr.mxu0 0.0
        %2389 = vmatpush1.msra.mxu0 0.0
        %2390 = vmatprep.subr.mxu0 0.0
        %2391 = vmatpush1.msra.mxu0 0.0
        %2392 = vmatprep.subr.mxu0 0.0
        %2393 = vmatpush1.msra.mxu0 0.0
        %2394 = vmatprep.subr.mxu0 0.0
        %2395 = vmatpush1.msra.mxu0 0.0
        %2396 = vmatprep.subr.mxu0 0.0
        %2397 = vmatpush1.msra.mxu0 0.0
        %2398 = vmatprep.subr.mxu0 0.0
        %2399 = vmatpush1.msra.mxu0 0.0
        %2400 = vmatprep.subr.mxu0 0.0
        %2401 = vmatpush1.msra.mxu0 0.0
        %2402 = vmatprep.subr.mxu0 0.0
        %2403 = vmatpush1.msra.mxu0 0.0
        %2404 = vmatprep.subr.mxu0 0.0
        %2405 = vmatpush1.msra.mxu0 0.0
        %2406 = vmatprep.subr.mxu0 0.0
        %2407 = vmatpush1.msra.mxu0 0.0
        %2408 = vmatprep.subr.mxu0 0.0
        %2409 = vmatpush1.msra.mxu0 0.0
        %2410 = vmatprep.subr.mxu0 0.0
        %2411 = vmatpush1.msra.mxu0 0.0
        %2412 = vmatprep.subr.mxu0 0.0
        %2413 = vmatpush1.msra.mxu0 0.0
        %2414 = vmatprep.subr.mxu0 0.0
        %2415 = vmatpush1.msra.mxu0 0.0
        %2416 = vmatprep.subr.mxu0 0.0
        %2417 = vmatpush1.msra.mxu0 0.0
        %2418 = vmatprep.subr.mxu0 0.0
        %2419 = vmatpush1.msra.mxu0 0.0
        %2420 = vmatprep.subr.mxu0 0.0
        %2421 = vmatpush1.msra.mxu0 0.0
        %2422 = vmatprep.subr.mxu0 0.0
        %2423 = vmatpush1.msra.mxu0 0.0
        %2424 = vmatprep.subr.mxu0 0.0
        %2425 = vmatpush1.msra.mxu0 0.0
        %2426 = vmatprep.subr.mxu0 0.0
        %2427 = vmatpush1.msra.mxu0 0.0
        %2428 = vmatprep.subr.mxu0 0.0
        %2429 = vmatpush1.msra.mxu0 0.0
        %2430 = vmatprep.subr.mxu0 0.0
        %2431 = vmatpush1.msra.mxu0 0.0
        %2432 = vmatprep.subr.mxu0 0.0
        %2433 = vmatpush1.msra.mxu0 0.0
        %2434 = vmatprep.subr.mxu0 0.0
        %2435 = vmatpush1.msra.mxu0 0.0
        %2436 = vmatprep.subr.mxu0 0.0
        %2437 = vmatpush1.msra.mxu0 0.0
        %2438 = vmatprep.mubr.f32.mxu0 0.0
        %2439 = vmatmul.mubr.f32.gmra.mrb[0].mxu0 %v2372
        %v2440 = vpop.f32.mrb[0].mxu0
        %v2441 = vadd.f32 0.0, %v2440
        %v2442 = vpop.f32.mrb[0].mxu0
        %2443 = vdwg.mxu0
        %2445 = vrot.lane.b32.xlu0 %v2289, 8
        %v2446 = vpop.permute.xlu0 %2445
        %2449 = vrot.lane.b32.xlu0 %v2365, 16
        %v2450 = vpop.permute.xlu0 %2449
        %2453 = vrot.lane.b32.xlu0 %v2441, 24
        %v2454 = vpop.permute.xlu0 %2453
        %v2456 = vsel %vm704, %v2213, %v2446
        %v2457 = vsel %vm1374, %v2456, %v2450
        %v2458 = vsel %vm1376, %v2457, %v2454
        %s2459 = scalar_lea.vmem %s6, 32
        %v2460 = vld [vmem:[%s2459] sm:$0xff]
        %v2461 = vld [vmem:[%s2459 + $0x8] sm:$0xff]
        %v2462 = vld [vmem:[%s2459 + $0x10] sm:$0xff]
        %v2463 = vld [vmem:[%s2459 + $0x18] sm:$0xff]
        %s2464 = scalar_lea.vmem %s7, 1
        %v2465 = vld [vmem:[%s2464] sm:$0x1]
        %v2467 = vlaneseq
        %v2468 = vshrl.u32 %v2467, 7
        %v2469 = vsub.s32 0, %v2468
        %v2470 = vrot.slane %v2465, %v2469
        %v2473 = vsel %vm586, %v2458, 0
        %2475 = vmatprep.subr.mxu0 0.0
        %2476 = vmatpush1.msra.mxu0 %v2460
        %2477 = vmatprep.subr.mxu0 0.0
        %2478 = vmatpush1.msra.mxu0 %v2461
        %2479 = vmatprep.subr.mxu0 0.0
        %2480 = vmatpush1.msra.mxu0 %v2462
        %2481 = vmatprep.subr.mxu0 0.0
        %2482 = vmatpush1.msra.mxu0 %v2463
        %2483 = vmatprep.subr.mxu0 0.0
        %2484 = vmatpush1.msra.mxu0 0.0
        %2485 = vmatprep.subr.mxu0 0.0
        %2486 = vmatpush1.msra.mxu0 0.0
        %2487 = vmatprep.subr.mxu0 0.0
        %2488 = vmatpush1.msra.mxu0 0.0
        %2489 = vmatprep.subr.mxu0 0.0
        %2490 = vmatpush1.msra.mxu0 0.0
        %2491 = vmatprep.subr.mxu0 0.0
        %2492 = vmatpush1.msra.mxu0 0.0
        %2493 = vmatprep.subr.mxu0 0.0
        %2494 = vmatpush1.msra.mxu0 0.0
        %2495 = vmatprep.subr.mxu0 0.0
        %2496 = vmatpush1.msra.mxu0 0.0
        %2497 = vmatprep.subr.mxu0 0.0
        %2498 = vmatpush1.msra.mxu0 0.0
        %2499 = vmatprep.subr.mxu0 0.0
        %2500 = vmatpush1.msra.mxu0 0.0
        %2501 = vmatprep.subr.mxu0 0.0
        %2502 = vmatpush1.msra.mxu0 0.0
        %2503 = vmatprep.subr.mxu0 0.0
        %2504 = vmatpush1.msra.mxu0 0.0
        %2505 = vmatprep.subr.mxu0 0.0
        %2506 = vmatpush1.msra.mxu0 0.0
        %2507 = vmatprep.subr.mxu0 0.0
        %2508 = vmatpush1.msra.mxu0 0.0
        %2509 = vmatprep.subr.mxu0 0.0
        %2510 = vmatpush1.msra.mxu0 0.0
        %2511 = vmatprep.subr.mxu0 0.0
        %2512 = vmatpush1.msra.mxu0 0.0
        %2513 = vmatprep.subr.mxu0 0.0
        %2514 = vmatpush1.msra.mxu0 0.0
        %2515 = vmatprep.subr.mxu0 0.0
        %2516 = vmatpush1.msra.mxu0 0.0
        %2517 = vmatprep.subr.mxu0 0.0
        %2518 = vmatpush1.msra.mxu0 0.0
        %2519 = vmatprep.subr.mxu0 0.0
        %2520 = vmatpush1.msra.mxu0 0.0
        %2521 = vmatprep.subr.mxu0 0.0
        %2522 = vmatpush1.msra.mxu0 0.0
        %2523 = vmatprep.subr.mxu0 0.0
        %2524 = vmatpush1.msra.mxu0 0.0
        %2525 = vmatprep.subr.mxu0 0.0
        %2526 = vmatpush1.msra.mxu0 0.0
        %2527 = vmatprep.subr.mxu0 0.0
        %2528 = vmatpush1.msra.mxu0 0.0
        %2529 = vmatprep.subr.mxu0 0.0
        %2530 = vmatpush1.msra.mxu0 0.0
        %2531 = vmatprep.subr.mxu0 0.0
        %2532 = vmatpush1.msra.mxu0 0.0
        %2533 = vmatprep.subr.mxu0 0.0
        %2534 = vmatpush1.msra.mxu0 0.0
        %2535 = vmatprep.subr.mxu0 0.0
        %2536 = vmatpush1.msra.mxu0 0.0
        %2537 = vmatprep.subr.mxu0 0.0
        %2538 = vmatpush1.msra.mxu0 0.0
        %2539 = vmatprep.mubr.f32.mxu0 0.0
        %2540 = vmatmul.mubr.f32.gmra.mrb[0].mxu0 %v2473
        %v2541 = vpop.f32.mrb[0].mxu0
        %v2542 = vadd.f32 %v2470, %v2541
        %v2543 = vpop.f32.mrb[0].mxu0
        %2544 = vdwg.mxu0
        %v2545 = vadd.f32 %v1669, %v2542
        %v2546 = vsel %vm586, %v2545, 0.0
        %2547 = vadd.xlane.f32.xlu0 %v2546
        %v2548 = vpop.xlane.xlu0 %2547
        %v2549 = vmul.f32 %v2548, %v590
        %v2550 = vsub.f32 %v2545, %v2549
        %v2551 = vmul.f32 %v2550, %v2550
        %v2552 = vsel %vm586, %v2551, 0.0
        %2553 = vadd.xlane.f32.xlu0 %v2552
        %v2554 = vpop.xlane.xlu0 %2553
        %v2555 = vmul.f32 %v2554, %v590
        %v2556 = vadd.f32 %v2555, 1e-05
        %v2557 = vrsqrt.pop %v2556
        %v2558 = vmul.f32 %v2550, %v2557
        %v2559 = vlaneseq
        %v2560 = vshrl.u32 %v2559, 7
        %v2561 = vsub.s32 2, %v2560
        %v2562 = vrot.slane %v1671, %v2561
        %v2563 = vmul.f32 %v2558, %v2562
        %v2564 = vlaneseq
        %v2565 = vshrl.u32 %v2564, 7
        %v2566 = vsub.s32 3, %v2565
        %v2567 = vrot.slane %v1671, %v2566
        %v2568 = vadd.f32 %v2563, %v2567
        %s2569 = scalar_lea.vmem %s8, 32
        %v2570 = vld [vmem:[%s2569] sm:$0xff]
        %v2571 = vld [vmem:[%s2569 + $0x8] sm:$0xff]
        %v2572 = vld [vmem:[%s2569 + $0x10] sm:$0xff]
        %v2573 = vld [vmem:[%s2569 + $0x18] sm:$0xff]
        %s2574 = scalar_lea.vmem %s9, 1
        %v2575 = vld [vmem:[%s2574] sm:$0x1]
        %v2577 = vlaneseq
        %v2578 = vshrl.u32 %v2577, 7
        %v2579 = vsub.s32 0, %v2578
        %v2580 = vrot.slane %v2575, %v2579
        %v2583 = vsel %vm586, %v2568, 0
        %2585 = vmatprep.subr.mxu0 0.0
        %2586 = vmatpush1.msra.mxu0 %v2570
        %2587 = vmatprep.subr.mxu0 0.0
        %2588 = vmatpush1.msra.mxu0 %v2571
        %2589 = vmatprep.subr.mxu0 0.0
        %2590 = vmatpush1.msra.mxu0 %v2572
        %2591 = vmatprep.subr.mxu0 0.0
        %2592 = vmatpush1.msra.mxu0 %v2573
        %2593 = vmatprep.subr.mxu0 0.0
        %2594 = vmatpush1.msra.mxu0 0.0
        %2595 = vmatprep.subr.mxu0 0.0
        %2596 = vmatpush1.msra.mxu0 0.0
        %2597 = vmatprep.subr.mxu0 0.0
        %2598 = vmatpush1.msra.mxu0 0.0
        %2599 = vmatprep.subr.mxu0 0.0
        %2600 = vmatpush1.msra.mxu0 0.0
        %2601 = vmatprep.subr.mxu0 0.0
        %2602 = vmatpush1.msra.mxu0 0.0
        %2603 = vmatprep.subr.mxu0 0.0
        %2604 = vmatpush1.msra.mxu0 0.0
        %2605 = vmatprep.subr.mxu0 0.0
        %2606 = vmatpush1.msra.mxu0 0.0
        %2607 = vmatprep.subr.mxu0 0.0
        %2608 = vmatpush1.msra.mxu0 0.0
        %2609 = vmatprep.subr.mxu0 0.0
        %2610 = vmatpush1.msra.mxu0 0.0
        %2611 = vmatprep.subr.mxu0 0.0
        %2612 = vmatpush1.msra.mxu0 0.0
        %2613 = vmatprep.subr.mxu0 0.0
        %2614 = vmatpush1.msra.mxu0 0.0
        %2615 = vmatprep.subr.mxu0 0.0
        %2616 = vmatpush1.msra.mxu0 0.0
        %2617 = vmatprep.subr.mxu0 0.0
        %2618 = vmatpush1.msra.mxu0 0.0
        %2619 = vmatprep.subr.mxu0 0.0
        %2620 = vmatpush1.msra.mxu0 0.0
        %2621 = vmatprep.subr.mxu0 0.0
        %2622 = vmatpush1.msra.mxu0 0.0
        %2623 = vmatprep.subr.mxu0 0.0
        %2624 = vmatpush1.msra.mxu0 0.0
        %2625 = vmatprep.subr.mxu0 0.0
        %2626 = vmatpush1.msra.mxu0 0.0
        %2627 = vmatprep.subr.mxu0 0.0
        %2628 = vmatpush1.msra.mxu0 0.0
        %2629 = vmatprep.subr.mxu0 0.0
        %2630 = vmatpush1.msra.mxu0 0.0
        %2631 = vmatprep.subr.mxu0 0.0
        %2632 = vmatpush1.msra.mxu0 0.0
        %2633 = vmatprep.subr.mxu0 0.0
        %2634 = vmatpush1.msra.mxu0 0.0
        %2635 = vmatprep.subr.mxu0 0.0
        %2636 = vmatpush1.msra.mxu0 0.0
        %2637 = vmatprep.subr.mxu0 0.0
        %2638 = vmatpush1.msra.mxu0 0.0
        %2639 = vmatprep.subr.mxu0 0.0
        %2640 = vmatpush1.msra.mxu0 0.0
        %2641 = vmatprep.subr.mxu0 0.0
        %2642 = vmatpush1.msra.mxu0 0.0
        %2643 = vmatprep.subr.mxu0 0.0
        %2644 = vmatpush1.msra.mxu0 0.0
        %2645 = vmatprep.subr.mxu0 0.0
        %2646 = vmatpush1.msra.mxu0 0.0
        %2647 = vmatprep.subr.mxu0 0.0
        %2648 = vmatpush1.msra.mxu0 0.0
        %2649 = vmatprep.mubr.f32.mxu0 0.0
        %2650 = vmatmul.mubr.f32.gmra.mrb[0].mxu0 %v2583
        %v2651 = vpop.f32.mrb[0].mxu0
        %v2652 = vadd.f32 %v2580, %v2651
        %v2653 = vpop.f32.mrb[0].mxu0
        %2654 = vdwg.mxu0
        %v2655 = vmul.f32 %v2652, 0.5
        %v2656 = vmul.f32 %v2652, %v1571
        %v2657 = verf.f32.pop %v2656
        %v2658 = vadd.f32 %v2657, 1.0
        %v2659 = vmul.f32 %v2655, %v2658
        %s2660 = scalar_lea.vmem %s10, 128
        %v2661 = vld [vmem:[%s2660] sm:$0xff]
        %v2662 = vld [vmem:[%s2660 + $0x8] sm:$0xff]
        %v2663 = vld [vmem:[%s2660 + $0x10] sm:$0xff]
        %v2664 = vld [vmem:[%s2660 + $0x18] sm:$0xff]
        %v2665 = vld [vmem:[%s2660 + $0x20] sm:$0xff]
        %v2666 = vld [vmem:[%s2660 + $0x28] sm:$0xff]
        %v2667 = vld [vmem:[%s2660 + $0x30] sm:$0xff]
        %v2668 = vld [vmem:[%s2660 + $0x38] sm:$0xff]
        %v2669 = vld [vmem:[%s2660 + $0x40] sm:$0xff]
        %v2670 = vld [vmem:[%s2660 + $0x48] sm:$0xff]
        %v2671 = vld [vmem:[%s2660 + $0x50] sm:$0xff]
        %v2672 = vld [vmem:[%s2660 + $0x58] sm:$0xff]
        %v2673 = vld [vmem:[%s2660 + $0x60] sm:$0xff]
        %v2674 = vld [vmem:[%s2660 + $0x68] sm:$0xff]
        %v2675 = vld [vmem:[%s2660 + $0x70] sm:$0xff]
        %v2676 = vld [vmem:[%s2660 + $0x78] sm:$0xff]
        %s2677 = scalar_lea.vmem %s11, 1
        %v2678 = vld [vmem:[%s2677] sm:$0x1]
        %v2680 = vlaneseq
        %v2681 = vshrl.u32 %v2680, 7
        %v2682 = vsub.s32 0, %v2681
        %v2683 = vrot.slane %v2678, %v2682
        %2685 = vmatprep.subr.mxu0 0.0
        %2686 = vmatpush1.msra.mxu0 %v2661
        %2687 = vmatprep.subr.mxu0 0.0
        %2688 = vmatpush1.msra.mxu0 %v2662
        %2689 = vmatprep.subr.mxu0 0.0
        %2690 = vmatpush1.msra.mxu0 %v2663
        %2691 = vmatprep.subr.mxu0 0.0
        %2692 = vmatpush1.msra.mxu0 %v2664
        %2693 = vmatprep.subr.mxu0 0.0
        %2694 = vmatpush1.msra.mxu0 %v2665
        %2695 = vmatprep.subr.mxu0 0.0
        %2696 = vmatpush1.msra.mxu0 %v2666
        %2697 = vmatprep.subr.mxu0 0.0
        %2698 = vmatpush1.msra.mxu0 %v2667
        %2699 = vmatprep.subr.mxu0 0.0
        %2700 = vmatpush1.msra.mxu0 %v2668
        %2701 = vmatprep.subr.mxu0 0.0
        %2702 = vmatpush1.msra.mxu0 %v2669
        %2703 = vmatprep.subr.mxu0 0.0
        %2704 = vmatpush1.msra.mxu0 %v2670
        %2705 = vmatprep.subr.mxu0 0.0
        %2706 = vmatpush1.msra.mxu0 %v2671
        %2707 = vmatprep.subr.mxu0 0.0
        %2708 = vmatpush1.msra.mxu0 %v2672
        %2709 = vmatprep.subr.mxu0 0.0
        %2710 = vmatpush1.msra.mxu0 %v2673
        %2711 = vmatprep.subr.mxu0 0.0
        %2712 = vmatpush1.msra.mxu0 %v2674
        %2713 = vmatprep.subr.mxu0 0.0
        %2714 = vmatpush1.msra.mxu0 %v2675
        %2715 = vmatprep.subr.mxu0 0.0
        %2716 = vmatpush1.msra.mxu0 %v2676
        %2717 = vmatprep.subr.mxu0 0.0
        %2718 = vmatpush1.msra.mxu0 0.0
        %2719 = vmatprep.subr.mxu0 0.0
        %2720 = vmatpush1.msra.mxu0 0.0
        %2721 = vmatprep.subr.mxu0 0.0
        %2722 = vmatpush1.msra.mxu0 0.0
        %2723 = vmatprep.subr.mxu0 0.0
        %2724 = vmatpush1.msra.mxu0 0.0
        %2725 = vmatprep.subr.mxu0 0.0
        %2726 = vmatpush1.msra.mxu0 0.0
        %2727 = vmatprep.subr.mxu0 0.0
        %2728 = vmatpush1.msra.mxu0 0.0
        %2729 = vmatprep.subr.mxu0 0.0
        %2730 = vmatpush1.msra.mxu0 0.0
        %2731 = vmatprep.subr.mxu0 0.0
        %2732 = vmatpush1.msra.mxu0 0.0
        %2733 = vmatprep.subr.mxu0 0.0
        %2734 = vmatpush1.msra.mxu0 0.0
        %2735 = vmatprep.subr.mxu0 0.0
        %2736 = vmatpush1.msra.mxu0 0.0
        %2737 = vmatprep.subr.mxu0 0.0
        %2738 = vmatpush1.msra.mxu0 0.0
        %2739 = vmatprep.subr.mxu0 0.0
        %2740 = vmatpush1.msra.mxu0 0.0
        %2741 = vmatprep.subr.mxu0 0.0
        %2742 = vmatpush1.msra.mxu0 0.0
        %2743 = vmatprep.subr.mxu0 0.0
        %2744 = vmatpush1.msra.mxu0 0.0
        %2745 = vmatprep.subr.mxu0 0.0
        %2746 = vmatpush1.msra.mxu0 0.0
        %2747 = vmatprep.subr.mxu0 0.0
        %2748 = vmatpush1.msra.mxu0 0.0
        %2749 = vmatprep.mubr.f32.mxu0 0.0
        %2750 = vmatmul.mubr.f32.gmra.mrb[0].mxu0 %v2659
        %v2751 = vpop.f32.mrb[0].mxu0
        %v2752 = vadd.f32 %v2683, %v2751
        %v2753 = vpop.f32.mrb[0].mxu0
        %2754 = vdwg.mxu0
        %v2755 = vadd.f32 %v2545, %v2752
        %v2756 = vld [vmem:[%s12] sm:$0x1]
        %v2757 = vld [vmem:[%s12 + $0x1] sm:$0x1]
        %v2758 = vsel %vm586, %v2755, 0.0
        %2759 = vadd.xlane.f32.xlu0 %v2758
        %v2760 = vpop.xlane.xlu0 %2759
        %v2761 = vmul.f32 %v2760, %v590
        %v2762 = vsub.f32 %v2755, %v2761
        %v2763 = vmul.f32 %v2762, %v2762
        %v2764 = vsel %vm586, %v2763, 0.0
        %2765 = vadd.xlane.f32.xlu0 %v2764
        %v2766 = vpop.xlane.xlu0 %2765
        %v2767 = vmul.f32 %v2766, %v590
        %v2768 = vadd.f32 %v2767, 1e-05
        %v2769 = vrsqrt.pop %v2768
        %v2770 = vmul.f32 %v2762, %v2769
        %v2771 = vlaneseq
        %v2772 = vshrl.u32 %v2771, 7
        %v2773 = vsub.s32 0, %v2772
        %v2774 = vrot.slane %v2756, %v2773
        %v2775 = vmul.f32 %v2770, %v2774
        %v2776 = vlaneseq
        %v2777 = vshrl.u32 %v2776, 7
        %v2778 = vsub.s32 0, %v2777
        %v2779 = vrot.slane %v2757, %v2778
        %v2780 = vadd.f32 %v2775, %v2779
        %v2781 = vld [vmem:[%s13] sm:$0xff]
        %v2782 = vld [vmem:[%s13 + $0x8] sm:$0xff]
        %v2783 = vld [vmem:[%s13 + $0x10] sm:$0xff]
        %v2784 = vld [vmem:[%s13 + $0x18] sm:$0xff]
        %v2785 = vld [vmem:[%s14] sm:$0x1]
        %v2787 = vlaneseq
        %v2788 = vshrl.u32 %v2787, 7
        %v2789 = vsub.s32 0, %v2788
        %v2790 = vrot.slane %v2785, %v2789
        %v2793 = vsel %vm586, %v2780, 0
        %2795 = vmatprep.subr.mxu0 0.0
        %2796 = vmatpush1.msra.mxu0 %v2781
        %2797 = vmatprep.subr.mxu0 0.0
        %2798 = vmatpush1.msra.mxu0 %v2782
        %2799 = vmatprep.subr.mxu0 0.0
        %2800 = vmatpush1.msra.mxu0 %v2783
        %2801 = vmatprep.subr.mxu0 0.0
        %2802 = vmatpush1.msra.mxu0 %v2784
        %2803 = vmatprep.subr.mxu0 0.0
        %2804 = vmatpush1.msra.mxu0 0.0
        %2805 = vmatprep.subr.mxu0 0.0
        %2806 = vmatpush1.msra.mxu0 0.0
        %2807 = vmatprep.subr.mxu0 0.0
        %2808 = vmatpush1.msra.mxu0 0.0
        %2809 = vmatprep.subr.mxu0 0.0
        %2810 = vmatpush1.msra.mxu0 0.0
        %2811 = vmatprep.subr.mxu0 0.0
        %2812 = vmatpush1.msra.mxu0 0.0
        %2813 = vmatprep.subr.mxu0 0.0
        %2814 = vmatpush1.msra.mxu0 0.0
        %2815 = vmatprep.subr.mxu0 0.0
        %2816 = vmatpush1.msra.mxu0 0.0
        %2817 = vmatprep.subr.mxu0 0.0
        %2818 = vmatpush1.msra.mxu0 0.0
        %2819 = vmatprep.subr.mxu0 0.0
        %2820 = vmatpush1.msra.mxu0 0.0
        %2821 = vmatprep.subr.mxu0 0.0
        %2822 = vmatpush1.msra.mxu0 0.0
        %2823 = vmatprep.subr.mxu0 0.0
        %2824 = vmatpush1.msra.mxu0 0.0
        %2825 = vmatprep.subr.mxu0 0.0
        %2826 = vmatpush1.msra.mxu0 0.0
        %2827 = vmatprep.subr.mxu0 0.0
        %2828 = vmatpush1.msra.mxu0 0.0
        %2829 = vmatprep.subr.mxu0 0.0
        %2830 = vmatpush1.msra.mxu0 0.0
        %2831 = vmatprep.subr.mxu0 0.0
        %2832 = vmatpush1.msra.mxu0 0.0
        %2833 = vmatprep.subr.mxu0 0.0
        %2834 = vmatpush1.msra.mxu0 0.0
        %2835 = vmatprep.subr.mxu0 0.0
        %2836 = vmatpush1.msra.mxu0 0.0
        %2837 = vmatprep.subr.mxu0 0.0
        %2838 = vmatpush1.msra.mxu0 0.0
        %2839 = vmatprep.subr.mxu0 0.0
        %2840 = vmatpush1.msra.mxu0 0.0
        %2841 = vmatprep.subr.mxu0 0.0
        %2842 = vmatpush1.msra.mxu0 0.0
        %2843 = vmatprep.subr.mxu0 0.0
        %2844 = vmatpush1.msra.mxu0 0.0
        %2845 = vmatprep.subr.mxu0 0.0
        %2846 = vmatpush1.msra.mxu0 0.0
        %2847 = vmatprep.subr.mxu0 0.0
        %2848 = vmatpush1.msra.mxu0 0.0
        %2849 = vmatprep.subr.mxu0 0.0
        %2850 = vmatpush1.msra.mxu0 0.0
        %2851 = vmatprep.subr.mxu0 0.0
        %2852 = vmatpush1.msra.mxu0 0.0
        %2853 = vmatprep.subr.mxu0 0.0
        %2854 = vmatpush1.msra.mxu0 0.0
        %2855 = vmatprep.subr.mxu0 0.0
        %2856 = vmatpush1.msra.mxu0 0.0
        %2857 = vmatprep.subr.mxu0 0.0
        %2858 = vmatpush1.msra.mxu0 0.0
        %2859 = vmatprep.mubr.f32.mxu0 0.0
        %2860 = vmatmul.mubr.f32.gmra.mrb[0].mxu0 %v2793
        %v2861 = vpop.f32.mrb[0].mxu0
        %v2862 = vadd.f32 %v2790, %v2861
        %v2863 = vpop.f32.mrb[0].mxu0
        %2864 = vdwg.mxu0
        %2865 = vst [vmem:[%s485] sm:$0xff] %v2862
        %s2866 = sand.u32 %s357, 1
        %s2867 = scalar_lea.sflag [#allocation3], %s2866
        %s2868 = sand.u32 %s357, 1
        %s2869 = smul.addr %s2868, 8
        %s2870 = scalar_lea.vmem [#allocation2], %s2869
        // Predicated region
        $region81: #{minigpt_forward.1} parent=79 // pred_check
          %p2871 = pneg %p367
        $region82: #{minigpt_forward.1} parent=79 // pred_check_branch
          %2873 = sbr.rel (%p2871) target = $region84
        $region83: #{minigpt_forward.1} parent=79 // pred_region
          %s2875 = ssub.s32 128, 128
          %2876 = vsyncadd %s2867, %s2875
          %s2877 = smul.addr %s29, 128
          %s2878 = scalar_lea.hbm %s15, %s2877
          %s2880 = sshll.u32 %s2870, 4
          %s2881 = int_to_ptr.vmem [resolvable:$true] %s2880
          %2883 = dma.vmem_to_hbm [thread:$0]  %s2881, 128, %s2878, %s2867
        $region84: #{minigpt_forward.1} parent=79 // pred_fallthru
          _
      $region80: #{minigpt_forward.1} parent=5 // pred_fallthru
        _
      %p2884 = scmp.le.s32.totalorder 2, %s24
      // Predicated region
      $region85: #{minigpt_forward.1} parent=5 // pred_check
        %p2885 = pneg %p2884
      $region86: #{minigpt_forward.1} parent=5 // pred_check_branch
        %2887 = sbr.rel (%p2885) target = $region88
      $region87: #{minigpt_forward.1} parent=5 // pred_region
        %s2888 = ssub.s32 %s24, 2
        // Predicated region
        $region89: #{minigpt_forward.1} parent=87 // pred_check
          %p2889 = pneg %p373
        $region90: #{minigpt_forward.1} parent=87 // pred_check_branch
          %2891 = sbr.rel (%p2889) target = $region92
        $region91: #{minigpt_forward.1} parent=87 // pred_region
          %s2892 = sand.u32 %s358, 1
          %s2893 = scalar_lea.sflag [#allocation3], %s2892
          %s2894 = sand.u32 %s358, 1
          %s2895 = smul.addr %s2894, 8
          %s2896 = scalar_lea.vmem [#allocation2], %s2895
          %2897 = dma.done %s2893, 128
        $region92: #{minigpt_forward.1} parent=87 // pred_fallthru
          _
      $region88: #{minigpt_forward.1} parent=5 // pred_fallthru
        _
    $region6: #{minigpt_forward.1} parent=1 // loop_footer
      %s28 = sadd.s32 1, %s24
    $region7: #{minigpt_forward.1} parent=1 // loop_footer_branch
      %23 = sbr.rel target = $region3
    $region8: #{minigpt_forward.1} parent=1 // loop_exit
      _
    %2898 = vsyncpa [#allocation3], 1
    %s2899 = scalar_lea.sflag [#allocation3], 1
    %2900 = vsyncpa %s2899, 1

</llo_original>
